<compile_context>
chip_gen: v7x
topology: tpu7x:2x2x1
jax: 0.10.0
libtpu: 0.0.40
codegen_flags: <defaults>
</compile_context>

<pallas_src>
import functools

import jax
import jax.numpy as jnp
from jax.experimental import pallas as pl
from jax.experimental.pallas import tpu as pltpu


def _round_up(x: int, m: int) -> int:
    return (x + m - 1) // m * m


def _choose_block_rows(n: int, c: int, itemsize: int) -> int:
    """Row-tile size: multiple of 128, sized from lane-padded, double-buffered bytes."""
    lane_c = _round_up(c, 128)            # minor dim pads to 128 lanes in VMEM/HBM tiles
    # Double-buffered logits tile + double-buffered (tm,1) label tile (also 128-lane padded).
    per_row = 2 * lane_c * itemsize + 2 * 128 * 4
    budget = 16 * 1024 * 1024             # tile budget; leaves slab + headroom under 32 MiB
    tm = budget // per_row
    tm = max(128, min(tm - tm % 128, 4096))
    return min(tm, _round_up(n, 128))


def _ohem_kernel(x_ref, t_ref, o_ref, ps_ref, *, smooth, n_valid, keep_num):
    i = pl.program_id(0)

    # ---- Stage 1: per-sample label-smoothed cross entropy for this row tile ----
    x = x_ref[...].astype(jnp.float32)           # (TM, C)
    tgt = t_ref[...]                             # (TM, 1) int32
    tm, c = x.shape

    m = jnp.max(x, axis=-1, keepdims=True)                               # (TM, 1)
    lse = jnp.log(jnp.sum(jnp.exp(x - m), axis=-1, keepdims=True)) + m   # (TM, 1)
    col = jax.lax.broadcasted_iota(jnp.int32, (tm, c), 1)
    off = smooth / (c - 1)
    w = jnp.where(col == tgt, 1.0 - smooth, off)                         # rows sum to 1
    per = lse - jnp.sum(w * x, axis=-1, keepdims=True)                   # (TM, 1), >= 0
    per = jnp.maximum(per, 0.0)   # guard fp rounding so float bits stay a monotone key

    # Rows beyond the real batch (ragged last block) get a finite sentinel whose
    # int32 key is negative and therefore never selected.
    row = i * tm + jax.lax.broadcasted_iota(jnp.int32, (tm, 1), 0)
    per = jnp.where(row < n_valid, per, -1.0)
    ps_ref[i] = per.astype(jnp.float32)

    # ---- Stage 2 (epilogue on last tile): exact top-keep_num mean ----
    @pl.when(i == pl.num_programs(0) - 1)
    def _():
        vals = ps_ref[...]                        # (g, TM, 1) f32, every slot written
        keys = pltpu.bitcast(vals, jnp.int32)     # monotone int32 key for vals >= 0
        k = jnp.int32(keep_num)

        def count_ge(thr):
            return jnp.sum((keys >= thr).astype(jnp.int32))

        # Radix-2 MSB-first search for the keep_num-th largest key. Keys are
        # non-negative, so bit 31 is never searched: 15 two-bit rounds + 1 bit.
        u = jnp.int32(0)
        for hi in range(30, 0, -2):
            b = hi - 1
            c1 = u | jnp.int32(1 << b)
            c2 = u | jnp.int32(2 << b)
            c3 = u | jnp.int32(3 << b)
            n1, n2, n3 = count_ge(c1), count_ge(c2), count_ge(c3)  # independent counts
            d = ((n1 >= k).astype(jnp.int32) + (n2 >= k).astype(jnp.int32)
                 + (n3 >= k).astype(jnp.int32))                    # monotone -> digit
            u = u | jnp.left_shift(d, b)
        cand = u | jnp.int32(1)
        kth_key = jnp.where(count_ge(cand) >= k, cand, u)

        gt = keys > kth_key
        cnt_gt = jnp.sum(gt.astype(jnp.int32)).astype(jnp.float32)
        sum_gt = jnp.sum(jnp.where(gt, vals, 0.0))
        kth_val = jnp.max(jnp.where(keys <= kth_key, vals, -jnp.inf))
        # Strictly-greater values plus enough ties at the threshold to reach keep_num.
        total = sum_gt + (jnp.float32(keep_num) - cnt_gt) * kth_val
        o_ref[...] = jnp.broadcast_to(total / keep_num, (1, 1)).astype(jnp.float32)


def ohem_loss(logits, target, *, rate=0.7, smooth=0.1, block_rows=None):
    """OHEM loss with label-smoothed CE. logits: (N, C) float, target: (N,) int."""
    n, c = logits.shape
    # torch divides by zero when int(N*rate) == 0; clamp to 1 instead (documented).
    keep_num = max(1, min(n, int(n * rate)))

    if block_rows is None:
        tm = _choose_block_rows(n, c, logits.dtype.itemsize)
    else:
        tm = max(128, (int(block_rows) // 128) * 128)
    g = pl.cdiv(n, tm)

    t = target.astype(jnp.int32).reshape(n, 1)
    kernel = functools.partial(
        _ohem_kernel, smooth=float(smooth), n_valid=n, keep_num=int(keep_num))

    out = pl.pallas_call(
        kernel,
        out_shape=jax.ShapeDtypeStruct((1, 1), jnp.float32),
        grid=(g,),
        in_specs=[
            pl.BlockSpec((tm, c), lambda i: (i, 0)),
            pl.BlockSpec((tm, 1), lambda i: (i, 0)),
        ],
        out_specs=pl.BlockSpec((1, 1), lambda i: (0, 0)),
        scratch_shapes=[pltpu.VMEM((g, tm, 1), jnp.float32)],
        compiler_params=pltpu.CompilerParams(
            dimension_semantics=("arbitrary",),   # scratch slab carried across steps
            vmem_limit_bytes=32 * 1024 * 1024,
        ),
        cost_estimate=pl.CostEstimate(
            flops=6 * n * c,
            transcendentals=n * c,
            bytes_accessed=n * c * logits.dtype.itemsize + 4 * n + 4,
        ),
    )(logits, t)
    return out[0, 0]


def _ref_ohem_loss(logits, target, rate=0.7, smooth=0.1):
    """Pure-JAX reference (mirrors the PyTorch forward; keep_num clamped to >= 1)."""
    n, c = logits.shape
    lsm = jax.nn.log_softmax(logits.astype(jnp.float32), axis=-1)
    oh = jax.nn.one_hot(target, c, dtype=jnp.float32)
    smooth_t = oh * (1.0 - smooth) + (1.0 - oh) * (smooth / (c - 1))
    per_sample = -(smooth_t * lsm).sum(-1)
    keep_num = max(1, min(n, int(n * rate)))
    srt = jnp.sort(per_sample)[::-1]
    return srt[:keep_num].sum() / keep_num


if __name__ == "__main__":
    key = jax.random.PRNGKey(0)
    k1, k2, k3, k4 = jax.random.split(key, 4)

    # Config 1: small classification batch (single tile, ragged rows 8 < 128).
    n1, c1 = 8, 32
    x1 = jax.random.normal(k1, (n1, c1), dtype=jnp.float32)
    y1 = jax.random.randint(k2, (n1,), 0, c1, dtype=jnp.int32)
    got1 = jax.block_until_ready(ohem_loss(x1, y1, rate=0.7, smooth=0.1))
    ref1 = _ref_ohem_loss(x1, y1, rate=0.7, smooth=0.1)
    assert jnp.allclose(got1, ref1, rtol=1e-5, atol=1e-5), (got1, ref1)

    # Config 2: non-multiple-of-8 batch, exercises the ragged-block sentinel path.
    n2, c2 = 50, 16
    x2 = jax.random.normal(k3, (n2, c2), dtype=jnp.float32)
    y2 = jax.random.randint(k4, (n2,), 0, c2, dtype=jnp.int32)
    got2 = jax.block_until_ready(ohem_loss(x2, y2, rate=0.5, smooth=0.05))
    ref2 = _ref_ohem_loss(x2, y2, rate=0.5, smooth=0.05)
    assert jnp.allclose(got2, ref2, rtol=1e-5, atol=1e-5), (got2, ref2)

    # Config 3: multiple row tiles + ragged last tile (block_rows forced to 128).
    n3, c3 = 300, 32
    x3 = jax.random.normal(k2, (n3, c3), dtype=jnp.float32)
    y3 = jax.random.randint(k1, (n3,), 0, c3, dtype=jnp.int32)
    got3 = jax.block_until_ready(
        ohem_loss(x3, y3, rate=0.7, smooth=0.1, block_rows=128))
    ref3 = _ref_ohem_loss(x3, y3, rate=0.7, smooth=0.1)
    assert jnp.allclose(got3, ref3, rtol=1e-5, atol=1e-5), (got3, ref3)

    print("KERNEL_OK")
</pallas_src>

<mosaic_0001>
module attributes {stable_mosaic.version = 11 : i64} {
  func.func @_ohem_kernel(%arg0: i32, %arg1: memref<128x32xf32, #tpu.memory_space<vmem>>, %arg2: memref<128x1xi32, #tpu.memory_space<vmem>>, %arg3: memref<1x1xf32, #tpu.memory_space<vmem>>, %arg4: memref<1x128x1xf32, #tpu.memory_space<vmem>>) attributes {dimension_semantics = [#tpu.dimension_semantics<arbitrary>], iteration_bounds = array<i64: 1>, scalar_prefetch = 0 : i64, scratch_operands = 1 : i64, tpu.core_type = #tpu.core_type<tc>, window_params = [{transform_indices = @transform_0, window_bounds = array<i64: 128, 32>}, {transform_indices = @transform_1, window_bounds = array<i64: 128, 1>}, {pipeline_mode = #tpu.pipeline_mode<synchronous>, transform_indices = @transform_2, window_bounds = array<i64: 1, 1>}]} {
    %c0 = arith.constant 0 : index
    %c0_0 = arith.constant 0 : index
    %0 = vector.load %arg1[%c0, %c0_0] : memref<128x32xf32, #tpu.memory_space<vmem>>, vector<128x32xf32>
    %c0_1 = arith.constant 0 : index
    %c0_2 = arith.constant 0 : index
    %1 = vector.load %arg2[%c0_1, %c0_2] : memref<128x1xi32, #tpu.memory_space<vmem>>, vector<128x1xi32>
    %cst = arith.constant dense<0xFF800000> : vector<128xf32>
    %2 = vector.multi_reduction <maximumf>, %0, %cst [1] : vector<128x32xf32> to vector<128xf32>
    %3 = vector.shape_cast %2 : vector<128xf32> to vector<128x1xf32>
    %4 = vector.broadcast %3 : vector<128x1xf32> to vector<128x32xf32>
    %5 = arith.subf %0, %4 : vector<128x32xf32>
    %6 = math.exp %5 : vector<128x32xf32>
    %cst_3 = arith.constant dense<0.000000e+00> : vector<128xf32>
    %7 = vector.multi_reduction <add>, %6, %cst_3 [1] : vector<128x32xf32> to vector<128xf32>
    %8 = vector.shape_cast %7 : vector<128xf32> to vector<128x1xf32>
    %9 = math.log %8 : vector<128x1xf32>
    %10 = arith.addf %9, %3 : vector<128x1xf32>
    %11 = tpu.iota {dimensions = array<i32: 1>} : vector<128x32xi32>
    %12 = vector.broadcast %1 : vector<128x1xi32> to vector<128x32xi32>
    %13 = arith.cmpi eq, %11, %12 : vector<128x32xi32>
    %cst_4 = arith.constant 0.899999976 : f32
    %cst_5 = arith.constant 0.0032258064 : f32
    %14 = vector.broadcast %cst_4 : f32 to vector<128x32xf32>
    %15 = vector.broadcast %cst_5 : f32 to vector<128x32xf32>
    %16 = arith.select %13, %14, %15 : vector<128x32xi1>, vector<128x32xf32>
    %17 = arith.mulf %16, %0 : vector<128x32xf32>
    %cst_6 = arith.constant dense<0.000000e+00> : vector<128xf32>
    %18 = vector.multi_reduction <add>, %17, %cst_6 [1] : vector<128x32xf32> to vector<128xf32>
    %19 = vector.shape_cast %18 : vector<128xf32> to vector<128x1xf32>
    %20 = arith.subf %10, %19 : vector<128x1xf32>
    %cst_7 = arith.constant 0.000000e+00 : f32
    %21 = vector.broadcast %cst_7 : f32 to vector<128x1xf32>
    %22 = arith.maximumf %20, %21 : vector<128x1xf32>
    %c128_i32 = arith.constant 128 : i32
    %23 = arith.muli %arg0, %c128_i32 : i32
    %24 = tpu.iota {dimensions = array<i32: 0>} : vector<128x1xi32>
    %25 = vector.broadcast %23 : i32 to vector<128x1xi32>
    %26 = arith.addi %25, %24 : vector<128x1xi32>
    %c8_i32 = arith.constant 8 : i32
    %27 = vector.broadcast %c8_i32 : i32 to vector<128x1xi32>
    %28 = arith.cmpi slt, %26, %27 : vector<128x1xi32>
    %cst_8 = arith.constant -1.000000e+00 : f32
    %29 = vector.broadcast %cst_8 : f32 to vector<128x1xf32>
    %30 = arith.select %28, %22, %29 : vector<128x1xi1>, vector<128x1xf32>
    %31 = arith.index_cast %arg0 : i32 to index
    %c0_9 = arith.constant 0 : index
    %c0_10 = arith.constant 0 : index
    %32 = vector.load %arg4[%31, %c0_9, %c0_10] : memref<1x128x1xf32, #tpu.memory_space<vmem>>, vector<1x128x1xf32>
    %33 = vector.shape_cast %32 : vector<1x128x1xf32> to vector<128x1xf32>
    %34 = vector.shape_cast %30 : vector<128x1xf32> to vector<1x128x1xf32>
    tpu.vector_store %arg4[%31, %c0_9, %c0_10], %34 {strides = array<i32>} : memref<1x128x1xf32, #tpu.memory_space<vmem>>, vector<1x128x1xf32>,
    %c0_i32 = arith.constant 0 : i32
    %35 = arith.cmpi eq, %arg0, %c0_i32 : i32
    %36 = arith.extui %35 : i1 to i32
    %c0_i32_11 = arith.constant 0 : i32
    %37 = arith.cmpi ne, %36, %c0_i32_11 : i32
    scf.if %37 {
      %c0_12 = arith.constant 0 : index
      %c0_13 = arith.constant 0 : index
      %c0_14 = arith.constant 0 : index
      %38 = vector.load %arg4[%c0_12, %c0_13, %c0_14] : memref<1x128x1xf32, #tpu.memory_space<vmem>>, vector<1x128x1xf32>
      %39 = tpu.bitcast %38 : vector<1x128x1xf32> -> vector<1x128x1xi32>
      %c0_i32_15 = arith.constant 0 : i32
      %c536870912_i32 = arith.constant 536870912 : i32
      %40 = arith.ori %c0_i32_15, %c536870912_i32 : i32
      %c0_i32_16 = arith.constant 0 : i32
      %c1073741824_i32 = arith.constant 1073741824 : i32
      %41 = arith.ori %c0_i32_16, %c1073741824_i32 : i32
      %c0_i32_17 = arith.constant 0 : i32
      %c1610612736_i32 = arith.constant 1610612736 : i32
      %42 = arith.ori %c0_i32_17, %c1610612736_i32 : i32
      %43 = vector.broadcast %40 : i32 to vector<1x128x1xi32>
      %44 = arith.cmpi sge, %39, %43 : vector<1x128x1xi32>
      %45 = arith.extui %44 : vector<1x128x1xi1> to vector<1x128x1xi32>
      %46 = vector.shape_cast %45 : vector<1x128x1xi32> to vector<1x1x128x1xi32>
      %cst_18 = arith.constant dense<0> : vector<1xi32>
      %47 = vector.multi_reduction <add>, %46, %cst_18 [1, 2, 3] : vector<1x1x128x1xi32> to vector<1xi32>
      %48 = vector.shape_cast %47 : vector<1xi32> to vector<1x1x1x1xi32>
      %49 = vector.extract %48[0, 0, 0, 0] : i32 from vector<1x1x1x1xi32>
      %50 = vector.broadcast %41 : i32 to vector<1x128x1xi32>
      %51 = arith.cmpi sge, %39, %50 : vector<1x128x1xi32>
      %52 = arith.extui %51 : vector<1x128x1xi1> to vector<1x128x1xi32>
      %53 = vector.shape_cast %52 : vector<1x128x1xi32> to vector<1x1x128x1xi32>
      %cst_19 = arith.constant dense<0> : vector<1xi32>
      %54 = vector.multi_reduction <add>, %53, %cst_19 [1, 2, 3] : vector<1x1x128x1xi32> to vector<1xi32>
      %55 = vector.shape_cast %54 : vector<1xi32> to vector<1x1x1x1xi32>
      %56 = vector.extract %55[0, 0, 0, 0] : i32 from vector<1x1x1x1xi32>
      %57 = vector.broadcast %42 : i32 to vector<1x128x1xi32>
      %58 = arith.cmpi sge, %39, %57 : vector<1x128x1xi32>
      %59 = arith.extui %58 : vector<1x128x1xi1> to vector<1x128x1xi32>
      %60 = vector.shape_cast %59 : vector<1x128x1xi32> to vector<1x1x128x1xi32>
      %cst_20 = arith.constant dense<0> : vector<1xi32>
      %61 = vector.multi_reduction <add>, %60, %cst_20 [1, 2, 3] : vector<1x1x128x1xi32> to vector<1xi32>
      %62 = vector.shape_cast %61 : vector<1xi32> to vector<1x1x1x1xi32>
      %63 = vector.extract %62[0, 0, 0, 0] : i32 from vector<1x1x1x1xi32>
      %c5_i32 = arith.constant 5 : i32
      %64 = arith.cmpi sge, %49, %c5_i32 : i32
      %65 = arith.extui %64 : i1 to i32
      %c5_i32_21 = arith.constant 5 : i32
      %66 = arith.cmpi sge, %56, %c5_i32_21 : i32
      %67 = arith.extui %66 : i1 to i32
      %68 = arith.addi %65, %67 : i32
      %c5_i32_22 = arith.constant 5 : i32
      %69 = arith.cmpi sge, %63, %c5_i32_22 : i32
      %70 = arith.extui %69 : i1 to i32
      %71 = arith.addi %68, %70 : i32
      %c29_i32 = arith.constant 29 : i32
      %72 = arith.shli %71, %c29_i32 : i32
      %c0_i32_23 = arith.constant 0 : i32
      %73 = arith.ori %c0_i32_23, %72 : i32
      %c134217728_i32 = arith.constant 134217728 : i32
      %74 = arith.ori %73, %c134217728_i32 : i32
      %c268435456_i32 = arith.constant 268435456 : i32
      %75 = arith.ori %73, %c268435456_i32 : i32
      %c402653184_i32 = arith.constant 402653184 : i32
      %76 = arith.ori %73, %c402653184_i32 : i32
      %77 = vector.broadcast %74 : i32 to vector<1x128x1xi32>
      %78 = arith.cmpi sge, %39, %77 : vector<1x128x1xi32>
      %79 = arith.extui %78 : vector<1x128x1xi1> to vector<1x128x1xi32>
      %80 = vector.shape_cast %79 : vector<1x128x1xi32> to vector<1x1x128x1xi32>
      %cst_24 = arith.constant dense<0> : vector<1xi32>
      %81 = vector.multi_reduction <add>, %80, %cst_24 [1, 2, 3] : vector<1x1x128x1xi32> to vector<1xi32>
      %82 = vector.shape_cast %81 : vector<1xi32> to vector<1x1x1x1xi32>
      %83 = vector.extract %82[0, 0, 0, 0] : i32 from vector<1x1x1x1xi32>
      %84 = vector.broadcast %75 : i32 to vector<1x128x1xi32>
      %85 = arith.cmpi sge, %39, %84 : vector<1x128x1xi32>
      %86 = arith.extui %85 : vector<1x128x1xi1> to vector<1x128x1xi32>
      %87 = vector.shape_cast %86 : vector<1x128x1xi32> to vector<1x1x128x1xi32>
      %cst_25 = arith.constant dense<0> : vector<1xi32>
      %88 = vector.multi_reduction <add>, %87, %cst_25 [1, 2, 3] : vector<1x1x128x1xi32> to vector<1xi32>
      %89 = vector.shape_cast %88 : vector<1xi32> to vector<1x1x1x1xi32>
      %90 = vector.extract %89[0, 0, 0, 0] : i32 from vector<1x1x1x1xi32>
      %91 = vector.broadcast %76 : i32 to vector<1x128x1xi32>
      %92 = arith.cmpi sge, %39, %91 : vector<1x128x1xi32>
      %93 = arith.extui %92 : vector<1x128x1xi1> to vector<1x128x1xi32>
      %94 = vector.shape_cast %93 : vector<1x128x1xi32> to vector<1x1x128x1xi32>
      %cst_26 = arith.constant dense<0> : vector<1xi32>
      %95 = vector.multi_reduction <add>, %94, %cst_26 [1, 2, 3] : vector<1x1x128x1xi32> to vector<1xi32>
      %96 = vector.shape_cast %95 : vector<1xi32> to vector<1x1x1x1xi32>
      %97 = vector.extract %96[0, 0, 0, 0] : i32 from vector<1x1x1x1xi32>
      %c5_i32_27 = arith.constant 5 : i32
      %98 = arith.cmpi sge, %83, %c5_i32_27 : i32
      %99 = arith.extui %98 : i1 to i32
      %c5_i32_28 = arith.constant 5 : i32
      %100 = arith.cmpi sge, %90, %c5_i32_28 : i32
      %101 = arith.extui %100 : i1 to i32
      %102 = arith.addi %99, %101 : i32
      %c5_i32_29 = arith.constant 5 : i32
      %103 = arith.cmpi sge, %97, %c5_i32_29 : i32
      %104 = arith.extui %103 : i1 to i32
      %105 = arith.addi %102, %104 : i32
      %c27_i32 = arith.constant 27 : i32
      %106 = arith.shli %105, %c27_i32 : i32
      %107 = arith.ori %73, %106 : i32
      %c33554432_i32 = arith.constant 33554432 : i32
      %108 = arith.ori %107, %c33554432_i32 : i32
      %c67108864_i32 = arith.constant 67108864 : i32
      %109 = arith.ori %107, %c67108864_i32 : i32
      %c100663296_i32 = arith.constant 100663296 : i32
      %110 = arith.ori %107, %c100663296_i32 : i32
      %111 = vector.broadcast %108 : i32 to vector<1x128x1xi32>
      %112 = arith.cmpi sge, %39, %111 : vector<1x128x1xi32>
      %113 = arith.extui %112 : vector<1x128x1xi1> to vector<1x128x1xi32>
      %114 = vector.shape_cast %113 : vector<1x128x1xi32> to vector<1x1x128x1xi32>
      %cst_30 = arith.constant dense<0> : vector<1xi32>
      %115 = vector.multi_reduction <add>, %114, %cst_30 [1, 2, 3] : vector<1x1x128x1xi32> to vector<1xi32>
      %116 = vector.shape_cast %115 : vector<1xi32> to vector<1x1x1x1xi32>
      %117 = vector.extract %116[0, 0, 0, 0] : i32 from vector<1x1x1x1xi32>
      %118 = vector.broadcast %109 : i32 to vector<1x128x1xi32>
      %119 = arith.cmpi sge, %39, %118 : vector<1x128x1xi32>
      %120 = arith.extui %119 : vector<1x128x1xi1> to vector<1x128x1xi32>
      %121 = vector.shape_cast %120 : vector<1x128x1xi32> to vector<1x1x128x1xi32>
      %cst_31 = arith.constant dense<0> : vector<1xi32>
      %122 = vector.multi_reduction <add>, %121, %cst_31 [1, 2, 3] : vector<1x1x128x1xi32> to vector<1xi32>
      %123 = vector.shape_cast %122 : vector<1xi32> to vector<1x1x1x1xi32>
      %124 = vector.extract %123[0, 0, 0, 0] : i32 from vector<1x1x1x1xi32>
      %125 = vector.broadcast %110 : i32 to vector<1x128x1xi32>
      %126 = arith.cmpi sge, %39, %125 : vector<1x128x1xi32>
      %127 = arith.extui %126 : vector<1x128x1xi1> to vector<1x128x1xi32>
      %128 = vector.shape_cast %127 : vector<1x128x1xi32> to vector<1x1x128x1xi32>
      %cst_32 = arith.constant dense<0> : vector<1xi32>
      %129 = vector.multi_reduction <add>, %128, %cst_32 [1, 2, 3] : vector<1x1x128x1xi32> to vector<1xi32>
      %130 = vector.shape_cast %129 : vector<1xi32> to vector<1x1x1x1xi32>
      %131 = vector.extract %130[0, 0, 0, 0] : i32 from vector<1x1x1x1xi32>
      %c5_i32_33 = arith.constant 5 : i32
      %132 = arith.cmpi sge, %117, %c5_i32_33 : i32
      %133 = arith.extui %132 : i1 to i32
      %c5_i32_34 = arith.constant 5 : i32
      %134 = arith.cmpi sge, %124, %c5_i32_34 : i32
      %135 = arith.extui %134 : i1 to i32
      %136 = arith.addi %133, %135 : i32
      %c5_i32_35 = arith.constant 5 : i32
      %137 = arith.cmpi sge, %131, %c5_i32_35 : i32
      %138 = arith.extui %137 : i1 to i32
      %139 = arith.addi %136, %138 : i32
      %c25_i32 = arith.constant 25 : i32
      %140 = arith.shli %139, %c25_i32 : i32
      %141 = arith.ori %107, %140 : i32
      %c8388608_i32 = arith.constant 8388608 : i32
      %142 = arith.ori %141, %c8388608_i32 : i32
      %c16777216_i32 = arith.constant 16777216 : i32
      %143 = arith.ori %141, %c16777216_i32 : i32
      %c25165824_i32 = arith.constant 25165824 : i32
      %144 = arith.ori %141, %c25165824_i32 : i32
      %145 = vector.broadcast %142 : i32 to vector<1x128x1xi32>
      %146 = arith.cmpi sge, %39, %145 : vector<1x128x1xi32>
      %147 = arith.extui %146 : vector<1x128x1xi1> to vector<1x128x1xi32>
      %148 = vector.shape_cast %147 : vector<1x128x1xi32> to vector<1x1x128x1xi32>
      %cst_36 = arith.constant dense<0> : vector<1xi32>
      %149 = vector.multi_reduction <add>, %148, %cst_36 [1, 2, 3] : vector<1x1x128x1xi32> to vector<1xi32>
      %150 = vector.shape_cast %149 : vector<1xi32> to vector<1x1x1x1xi32>
      %151 = vector.extract %150[0, 0, 0, 0] : i32 from vector<1x1x1x1xi32>
      %152 = vector.broadcast %143 : i32 to vector<1x128x1xi32>
      %153 = arith.cmpi sge, %39, %152 : vector<1x128x1xi32>
      %154 = arith.extui %153 : vector<1x128x1xi1> to vector<1x128x1xi32>
      %155 = vector.shape_cast %154 : vector<1x128x1xi32> to vector<1x1x128x1xi32>
      %cst_37 = arith.constant dense<0> : vector<1xi32>
      %156 = vector.multi_reduction <add>, %155, %cst_37 [1, 2, 3] : vector<1x1x128x1xi32> to vector<1xi32>
      %157 = vector.shape_cast %156 : vector<1xi32> to vector<1x1x1x1xi32>
      %158 = vector.extract %157[0, 0, 0, 0] : i32 from vector<1x1x1x1xi32>
      %159 = vector.broadcast %144 : i32 to vector<1x128x1xi32>
      %160 = arith.cmpi sge, %39, %159 : vector<1x128x1xi32>
      %161 = arith.extui %160 : vector<1x128x1xi1> to vector<1x128x1xi32>
      %162 = vector.shape_cast %161 : vector<1x128x1xi32> to vector<1x1x128x1xi32>
      %cst_38 = arith.constant dense<0> : vector<1xi32>
      %163 = vector.multi_reduction <add>, %162, %cst_38 [1, 2, 3] : vector<1x1x128x1xi32> to vector<1xi32>
      %164 = vector.shape_cast %163 : vector<1xi32> to vector<1x1x1x1xi32>
      %165 = vector.extract %164[0, 0, 0, 0] : i32 from vector<1x1x1x1xi32>
      %c5_i32_39 = arith.constant 5 : i32
      %166 = arith.cmpi sge, %151, %c5_i32_39 : i32
      %167 = arith.extui %166 : i1 to i32
      %c5_i32_40 = arith.constant 5 : i32
      %168 = arith.cmpi sge, %158, %c5_i32_40 : i32
      %169 = arith.extui %168 : i1 to i32
      %170 = arith.addi %167, %169 : i32
      %c5_i32_41 = arith.constant 5 : i32
      %171 = arith.cmpi sge, %165, %c5_i32_41 : i32
      %172 = arith.extui %171 : i1 to i32
      %173 = arith.addi %170, %172 : i32
      %c23_i32 = arith.constant 23 : i32
      %174 = arith.shli %173, %c23_i32 : i32
      %175 = arith.ori %141, %174 : i32
      %c2097152_i32 = arith.constant 2097152 : i32
      %176 = arith.ori %175, %c2097152_i32 : i32
      %c4194304_i32 = arith.constant 4194304 : i32
      %177 = arith.ori %175, %c4194304_i32 : i32
      %c6291456_i32 = arith.constant 6291456 : i32
      %178 = arith.ori %175, %c6291456_i32 : i32
      %179 = vector.broadcast %176 : i32 to vector<1x128x1xi32>
      %180 = arith.cmpi sge, %39, %179 : vector<1x128x1xi32>
      %181 = arith.extui %180 : vector<1x128x1xi1> to vector<1x128x1xi32>
      %182 = vector.shape_cast %181 : vector<1x128x1xi32> to vector<1x1x128x1xi32>
      %cst_42 = arith.constant dense<0> : vector<1xi32>
      %183 = vector.multi_reduction <add>, %182, %cst_42 [1, 2, 3] : vector<1x1x128x1xi32> to vector<1xi32>
      %184 = vector.shape_cast %183 : vector<1xi32> to vector<1x1x1x1xi32>
      %185 = vector.extract %184[0, 0, 0, 0] : i32 from vector<1x1x1x1xi32>
      %186 = vector.broadcast %177 : i32 to vector<1x128x1xi32>
      %187 = arith.cmpi sge, %39, %186 : vector<1x128x1xi32>
      %188 = arith.extui %187 : vector<1x128x1xi1> to vector<1x128x1xi32>
      %189 = vector.shape_cast %188 : vector<1x128x1xi32> to vector<1x1x128x1xi32>
      %cst_43 = arith.constant dense<0> : vector<1xi32>
      %190 = vector.multi_reduction <add>, %189, %cst_43 [1, 2, 3] : vector<1x1x128x1xi32> to vector<1xi32>
      %191 = vector.shape_cast %190 : vector<1xi32> to vector<1x1x1x1xi32>
      %192 = vector.extract %191[0, 0, 0, 0] : i32 from vector<1x1x1x1xi32>
      %193 = vector.broadcast %178 : i32 to vector<1x128x1xi32>
      %194 = arith.cmpi sge, %39, %193 : vector<1x128x1xi32>
      %195 = arith.extui %194 : vector<1x128x1xi1> to vector<1x128x1xi32>
      %196 = vector.shape_cast %195 : vector<1x128x1xi32> to vector<1x1x128x1xi32>
      %cst_44 = arith.constant dense<0> : vector<1xi32>
      %197 = vector.multi_reduction <add>, %196, %cst_44 [1, 2, 3] : vector<1x1x128x1xi32> to vector<1xi32>
      %198 = vector.shape_cast %197 : vector<1xi32> to vector<1x1x1x1xi32>
      %199 = vector.extract %198[0, 0, 0, 0] : i32 from vector<1x1x1x1xi32>
      %c5_i32_45 = arith.constant 5 : i32
      %200 = arith.cmpi sge, %185, %c5_i32_45 : i32
      %201 = arith.extui %200 : i1 to i32
      %c5_i32_46 = arith.constant 5 : i32
      %202 = arith.cmpi sge, %192, %c5_i32_46 : i32
      %203 = arith.extui %202 : i1 to i32
      %204 = arith.addi %201, %203 : i32
      %c5_i32_47 = arith.constant 5 : i32
      %205 = arith.cmpi sge, %199, %c5_i32_47 : i32
      %206 = arith.extui %205 : i1 to i32
      %207 = arith.addi %204, %206 : i32
      %c21_i32 = arith.constant 21 : i32
      %208 = arith.shli %207, %c21_i32 : i32
      %209 = arith.ori %175, %208 : i32
      %c524288_i32 = arith.constant 524288 : i32
      %210 = arith.ori %209, %c524288_i32 : i32
      %c1048576_i32 = arith.constant 1048576 : i32
      %211 = arith.ori %209, %c1048576_i32 : i32
      %c1572864_i32 = arith.constant 1572864 : i32
      %212 = arith.ori %209, %c1572864_i32 : i32
      %213 = vector.broadcast %210 : i32 to vector<1x128x1xi32>
      %214 = arith.cmpi sge, %39, %213 : vector<1x128x1xi32>
      %215 = arith.extui %214 : vector<1x128x1xi1> to vector<1x128x1xi32>
      %216 = vector.shape_cast %215 : vector<1x128x1xi32> to vector<1x1x128x1xi32>
      %cst_48 = arith.constant dense<0> : vector<1xi32>
      %217 = vector.multi_reduction <add>, %216, %cst_48 [1, 2, 3] : vector<1x1x128x1xi32> to vector<1xi32>
      %218 = vector.shape_cast %217 : vector<1xi32> to vector<1x1x1x1xi32>
      %219 = vector.extract %218[0, 0, 0, 0] : i32 from vector<1x1x1x1xi32>
      %220 = vector.broadcast %211 : i32 to vector<1x128x1xi32>
      %221 = arith.cmpi sge, %39, %220 : vector<1x128x1xi32>
      %222 = arith.extui %221 : vector<1x128x1xi1> to vector<1x128x1xi32>
      %223 = vector.shape_cast %222 : vector<1x128x1xi32> to vector<1x1x128x1xi32>
      %cst_49 = arith.constant dense<0> : vector<1xi32>
      %224 = vector.multi_reduction <add>, %223, %cst_49 [1, 2, 3] : vector<1x1x128x1xi32> to vector<1xi32>
      %225 = vector.shape_cast %224 : vector<1xi32> to vector<1x1x1x1xi32>
      %226 = vector.extract %225[0, 0, 0, 0] : i32 from vector<1x1x1x1xi32>
      %227 = vector.broadcast %212 : i32 to vector<1x128x1xi32>
      %228 = arith.cmpi sge, %39, %227 : vector<1x128x1xi32>
      %229 = arith.extui %228 : vector<1x128x1xi1> to vector<1x128x1xi32>
      %230 = vector.shape_cast %229 : vector<1x128x1xi32> to vector<1x1x128x1xi32>
      %cst_50 = arith.constant dense<0> : vector<1xi32>
      %231 = vector.multi_reduction <add>, %230, %cst_50 [1, 2, 3] : vector<1x1x128x1xi32> to vector<1xi32>
      %232 = vector.shape_cast %231 : vector<1xi32> to vector<1x1x1x1xi32>
      %233 = vector.extract %232[0, 0, 0, 0] : i32 from vector<1x1x1x1xi32>
      %c5_i32_51 = arith.constant 5 : i32
      %234 = arith.cmpi sge, %219, %c5_i32_51 : i32
      %235 = arith.extui %234 : i1 to i32
      %c5_i32_52 = arith.constant 5 : i32
      %236 = arith.cmpi sge, %226, %c5_i32_52 : i32
      %237 = arith.extui %236 : i1 to i32
      %238 = arith.addi %235, %237 : i32
      %c5_i32_53 = arith.constant 5 : i32
      %239 = arith.cmpi sge, %233, %c5_i32_53 : i32
      %240 = arith.extui %239 : i1 to i32
      %241 = arith.addi %238, %240 : i32
      %c19_i32 = arith.constant 19 : i32
      %242 = arith.shli %241, %c19_i32 : i32
      %243 = arith.ori %209, %242 : i32
      %c131072_i32 = arith.constant 131072 : i32
      %244 = arith.ori %243, %c131072_i32 : i32
      %c262144_i32 = arith.constant 262144 : i32
      %245 = arith.ori %243, %c262144_i32 : i32
      %c393216_i32 = arith.constant 393216 : i32
      %246 = arith.ori %243, %c393216_i32 : i32
      %247 = vector.broadcast %244 : i32 to vector<1x128x1xi32>
      %248 = arith.cmpi sge, %39, %247 : vector<1x128x1xi32>
      %249 = arith.extui %248 : vector<1x128x1xi1> to vector<1x128x1xi32>
      %250 = vector.shape_cast %249 : vector<1x128x1xi32> to vector<1x1x128x1xi32>
      %cst_54 = arith.constant dense<0> : vector<1xi32>
      %251 = vector.multi_reduction <add>, %250, %cst_54 [1, 2, 3] : vector<1x1x128x1xi32> to vector<1xi32>
      %252 = vector.shape_cast %251 : vector<1xi32> to vector<1x1x1x1xi32>
      %253 = vector.extract %252[0, 0, 0, 0] : i32 from vector<1x1x1x1xi32>
      %254 = vector.broadcast %245 : i32 to vector<1x128x1xi32>
      %255 = arith.cmpi sge, %39, %254 : vector<1x128x1xi32>
      %256 = arith.extui %255 : vector<1x128x1xi1> to vector<1x128x1xi32>
      %257 = vector.shape_cast %256 : vector<1x128x1xi32> to vector<1x1x128x1xi32>
      %cst_55 = arith.constant dense<0> : vector<1xi32>
      %258 = vector.multi_reduction <add>, %257, %cst_55 [1, 2, 3] : vector<1x1x128x1xi32> to vector<1xi32>
      %259 = vector.shape_cast %258 : vector<1xi32> to vector<1x1x1x1xi32>
      %260 = vector.extract %259[0, 0, 0, 0] : i32 from vector<1x1x1x1xi32>
      %261 = vector.broadcast %246 : i32 to vector<1x128x1xi32>
      %262 = arith.cmpi sge, %39, %261 : vector<1x128x1xi32>
      %263 = arith.extui %262 : vector<1x128x1xi1> to vector<1x128x1xi32>
      %264 = vector.shape_cast %263 : vector<1x128x1xi32> to vector<1x1x128x1xi32>
      %cst_56 = arith.constant dense<0> : vector<1xi32>
      %265 = vector.multi_reduction <add>, %264, %cst_56 [1, 2, 3] : vector<1x1x128x1xi32> to vector<1xi32>
      %266 = vector.shape_cast %265 : vector<1xi32> to vector<1x1x1x1xi32>
      %267 = vector.extract %266[0, 0, 0, 0] : i32 from vector<1x1x1x1xi32>
      %c5_i32_57 = arith.constant 5 : i32
      %268 = arith.cmpi sge, %253, %c5_i32_57 : i32
      %269 = arith.extui %268 : i1 to i32
      %c5_i32_58 = arith.constant 5 : i32
      %270 = arith.cmpi sge, %260, %c5_i32_58 : i32
      %271 = arith.extui %270 : i1 to i32
      %272 = arith.addi %269, %271 : i32
      %c5_i32_59 = arith.constant 5 : i32
      %273 = arith.cmpi sge, %267, %c5_i32_59 : i32
      %274 = arith.extui %273 : i1 to i32
      %275 = arith.addi %272, %274 : i32
      %c17_i32 = arith.constant 17 : i32
      %276 = arith.shli %275, %c17_i32 : i32
      %277 = arith.ori %243, %276 : i32
      %c32768_i32 = arith.constant 32768 : i32
      %278 = arith.ori %277, %c32768_i32 : i32
      %c65536_i32 = arith.constant 65536 : i32
      %279 = arith.ori %277, %c65536_i32 : i32
      %c98304_i32 = arith.constant 98304 : i32
      %280 = arith.ori %277, %c98304_i32 : i32
      %281 = vector.broadcast %278 : i32 to vector<1x128x1xi32>
      %282 = arith.cmpi sge, %39, %281 : vector<1x128x1xi32>
      %283 = arith.extui %282 : vector<1x128x1xi1> to vector<1x128x1xi32>
      %284 = vector.shape_cast %283 : vector<1x128x1xi32> to vector<1x1x128x1xi32>
      %cst_60 = arith.constant dense<0> : vector<1xi32>
      %285 = vector.multi_reduction <add>, %284, %cst_60 [1, 2, 3] : vector<1x1x128x1xi32> to vector<1xi32>
      %286 = vector.shape_cast %285 : vector<1xi32> to vector<1x1x1x1xi32>
      %287 = vector.extract %286[0, 0, 0, 0] : i32 from vector<1x1x1x1xi32>
      %288 = vector.broadcast %279 : i32 to vector<1x128x1xi32>
      %289 = arith.cmpi sge, %39, %288 : vector<1x128x1xi32>
      %290 = arith.extui %289 : vector<1x128x1xi1> to vector<1x128x1xi32>
      %291 = vector.shape_cast %290 : vector<1x128x1xi32> to vector<1x1x128x1xi32>
      %cst_61 = arith.constant dense<0> : vector<1xi32>
      %292 = vector.multi_reduction <add>, %291, %cst_61 [1, 2, 3] : vector<1x1x128x1xi32> to vector<1xi32>
      %293 = vector.shape_cast %292 : vector<1xi32> to vector<1x1x1x1xi32>
      %294 = vector.extract %293[0, 0, 0, 0] : i32 from vector<1x1x1x1xi32>
      %295 = vector.broadcast %280 : i32 to vector<1x128x1xi32>
      %296 = arith.cmpi sge, %39, %295 : vector<1x128x1xi32>
      %297 = arith.extui %296 : vector<1x128x1xi1> to vector<1x128x1xi32>
      %298 = vector.shape_cast %297 : vector<1x128x1xi32> to vector<1x1x128x1xi32>
      %cst_62 = arith.constant dense<0> : vector<1xi32>
      %299 = vector.multi_reduction <add>, %298, %cst_62 [1, 2, 3] : vector<1x1x128x1xi32> to vector<1xi32>
      %300 = vector.shape_cast %299 : vector<1xi32> to vector<1x1x1x1xi32>
      %301 = vector.extract %300[0, 0, 0, 0] : i32 from vector<1x1x1x1xi32>
      %c5_i32_63 = arith.constant 5 : i32
      %302 = arith.cmpi sge, %287, %c5_i32_63 : i32
      %303 = arith.extui %302 : i1 to i32
      %c5_i32_64 = arith.constant 5 : i32
      %304 = arith.cmpi sge, %294, %c5_i32_64 : i32
      %305 = arith.extui %304 : i1 to i32
      %306 = arith.addi %303, %305 : i32
      %c5_i32_65 = arith.constant 5 : i32
      %307 = arith.cmpi sge, %301, %c5_i32_65 : i32
      %308 = arith.extui %307 : i1 to i32
      %309 = arith.addi %306, %308 : i32
      %c15_i32 = arith.constant 15 : i32
      %310 = arith.shli %309, %c15_i32 : i32
      %311 = arith.ori %277, %310 : i32
      %c8192_i32 = arith.constant 8192 : i32
      %312 = arith.ori %311, %c8192_i32 : i32
      %c16384_i32 = arith.constant 16384 : i32
      %313 = arith.ori %311, %c16384_i32 : i32
      %c24576_i32 = arith.constant 24576 : i32
      %314 = arith.ori %311, %c24576_i32 : i32
      %315 = vector.broadcast %312 : i32 to vector<1x128x1xi32>
      %316 = arith.cmpi sge, %39, %315 : vector<1x128x1xi32>
      %317 = arith.extui %316 : vector<1x128x1xi1> to vector<1x128x1xi32>
      %318 = vector.shape_cast %317 : vector<1x128x1xi32> to vector<1x1x128x1xi32>
      %cst_66 = arith.constant dense<0> : vector<1xi32>
      %319 = vector.multi_reduction <add>, %318, %cst_66 [1, 2, 3] : vector<1x1x128x1xi32> to vector<1xi32>
      %320 = vector.shape_cast %319 : vector<1xi32> to vector<1x1x1x1xi32>
      %321 = vector.extract %320[0, 0, 0, 0] : i32 from vector<1x1x1x1xi32>
      %322 = vector.broadcast %313 : i32 to vector<1x128x1xi32>
      %323 = arith.cmpi sge, %39, %322 : vector<1x128x1xi32>
      %324 = arith.extui %323 : vector<1x128x1xi1> to vector<1x128x1xi32>
      %325 = vector.shape_cast %324 : vector<1x128x1xi32> to vector<1x1x128x1xi32>
      %cst_67 = arith.constant dense<0> : vector<1xi32>
      %326 = vector.multi_reduction <add>, %325, %cst_67 [1, 2, 3] : vector<1x1x128x1xi32> to vector<1xi32>
      %327 = vector.shape_cast %326 : vector<1xi32> to vector<1x1x1x1xi32>
      %328 = vector.extract %327[0, 0, 0, 0] : i32 from vector<1x1x1x1xi32>
      %329 = vector.broadcast %314 : i32 to vector<1x128x1xi32>
      %330 = arith.cmpi sge, %39, %329 : vector<1x128x1xi32>
      %331 = arith.extui %330 : vector<1x128x1xi1> to vector<1x128x1xi32>
      %332 = vector.shape_cast %331 : vector<1x128x1xi32> to vector<1x1x128x1xi32>
      %cst_68 = arith.constant dense<0> : vector<1xi32>
      %333 = vector.multi_reduction <add>, %332, %cst_68 [1, 2, 3] : vector<1x1x128x1xi32> to vector<1xi32>
      %334 = vector.shape_cast %333 : vector<1xi32> to vector<1x1x1x1xi32>
      %335 = vector.extract %334[0, 0, 0, 0] : i32 from vector<1x1x1x1xi32>
      %c5_i32_69 = arith.constant 5 : i32
      %336 = arith.cmpi sge, %321, %c5_i32_69 : i32
      %337 = arith.extui %336 : i1 to i32
      %c5_i32_70 = arith.constant 5 : i32
      %338 = arith.cmpi sge, %328, %c5_i32_70 : i32
      %339 = arith.extui %338 : i1 to i32
      %340 = arith.addi %337, %339 : i32
      %c5_i32_71 = arith.constant 5 : i32
      %341 = arith.cmpi sge, %335, %c5_i32_71 : i32
      %342 = arith.extui %341 : i1 to i32
      %343 = arith.addi %340, %342 : i32
      %c13_i32 = arith.constant 13 : i32
      %344 = arith.shli %343, %c13_i32 : i32
      %345 = arith.ori %311, %344 : i32
      %c2048_i32 = arith.constant 2048 : i32
      %346 = arith.ori %345, %c2048_i32 : i32
      %c4096_i32 = arith.constant 4096 : i32
      %347 = arith.ori %345, %c4096_i32 : i32
      %c6144_i32 = arith.constant 6144 : i32
      %348 = arith.ori %345, %c6144_i32 : i32
      %349 = vector.broadcast %346 : i32 to vector<1x128x1xi32>
      %350 = arith.cmpi sge, %39, %349 : vector<1x128x1xi32>
      %351 = arith.extui %350 : vector<1x128x1xi1> to vector<1x128x1xi32>
      %352 = vector.shape_cast %351 : vector<1x128x1xi32> to vector<1x1x128x1xi32>
      %cst_72 = arith.constant dense<0> : vector<1xi32>
      %353 = vector.multi_reduction <add>, %352, %cst_72 [1, 2, 3] : vector<1x1x128x1xi32> to vector<1xi32>
      %354 = vector.shape_cast %353 : vector<1xi32> to vector<1x1x1x1xi32>
      %355 = vector.extract %354[0, 0, 0, 0] : i32 from vector<1x1x1x1xi32>
      %356 = vector.broadcast %347 : i32 to vector<1x128x1xi32>
      %357 = arith.cmpi sge, %39, %356 : vector<1x128x1xi32>
      %358 = arith.extui %357 : vector<1x128x1xi1> to vector<1x128x1xi32>
      %359 = vector.shape_cast %358 : vector<1x128x1xi32> to vector<1x1x128x1xi32>
      %cst_73 = arith.constant dense<0> : vector<1xi32>
      %360 = vector.multi_reduction <add>, %359, %cst_73 [1, 2, 3] : vector<1x1x128x1xi32> to vector<1xi32>
      %361 = vector.shape_cast %360 : vector<1xi32> to vector<1x1x1x1xi32>
      %362 = vector.extract %361[0, 0, 0, 0] : i32 from vector<1x1x1x1xi32>
      %363 = vector.broadcast %348 : i32 to vector<1x128x1xi32>
      %364 = arith.cmpi sge, %39, %363 : vector<1x128x1xi32>
      %365 = arith.extui %364 : vector<1x128x1xi1> to vector<1x128x1xi32>
      %366 = vector.shape_cast %365 : vector<1x128x1xi32> to vector<1x1x128x1xi32>
      %cst_74 = arith.constant dense<0> : vector<1xi32>
      %367 = vector.multi_reduction <add>, %366, %cst_74 [1, 2, 3] : vector<1x1x128x1xi32> to vector<1xi32>
      %368 = vector.shape_cast %367 : vector<1xi32> to vector<1x1x1x1xi32>
      %369 = vector.extract %368[0, 0, 0, 0] : i32 from vector<1x1x1x1xi32>
      %c5_i32_75 = arith.constant 5 : i32
      %370 = arith.cmpi sge, %355, %c5_i32_75 : i32
      %371 = arith.extui %370 : i1 to i32
      %c5_i32_76 = arith.constant 5 : i32
      %372 = arith.cmpi sge, %362, %c5_i32_76 : i32
      %373 = arith.extui %372 : i1 to i32
      %374 = arith.addi %371, %373 : i32
      %c5_i32_77 = arith.constant 5 : i32
      %375 = arith.cmpi sge, %369, %c5_i32_77 : i32
      %376 = arith.extui %375 : i1 to i32
      %377 = arith.addi %374, %376 : i32
      %c11_i32 = arith.constant 11 : i32
      %378 = arith.shli %377, %c11_i32 : i32
      %379 = arith.ori %345, %378 : i32
      %c512_i32 = arith.constant 512 : i32
      %380 = arith.ori %379, %c512_i32 : i32
      %c1024_i32 = arith.constant 1024 : i32
      %381 = arith.ori %379, %c1024_i32 : i32
      %c1536_i32 = arith.constant 1536 : i32
      %382 = arith.ori %379, %c1536_i32 : i32
      %383 = vector.broadcast %380 : i32 to vector<1x128x1xi32>
      %384 = arith.cmpi sge, %39, %383 : vector<1x128x1xi32>
      %385 = arith.extui %384 : vector<1x128x1xi1> to vector<1x128x1xi32>
      %386 = vector.shape_cast %385 : vector<1x128x1xi32> to vector<1x1x128x1xi32>
      %cst_78 = arith.constant dense<0> : vector<1xi32>
      %387 = vector.multi_reduction <add>, %386, %cst_78 [1, 2, 3] : vector<1x1x128x1xi32> to vector<1xi32>
      %388 = vector.shape_cast %387 : vector<1xi32> to vector<1x1x1x1xi32>
      %389 = vector.extract %388[0, 0, 0, 0] : i32 from vector<1x1x1x1xi32>
      %390 = vector.broadcast %381 : i32 to vector<1x128x1xi32>
      %391 = arith.cmpi sge, %39, %390 : vector<1x128x1xi32>
      %392 = arith.extui %391 : vector<1x128x1xi1> to vector<1x128x1xi32>
      %393 = vector.shape_cast %392 : vector<1x128x1xi32> to vector<1x1x128x1xi32>
      %cst_79 = arith.constant dense<0> : vector<1xi32>
      %394 = vector.multi_reduction <add>, %393, %cst_79 [1, 2, 3] : vector<1x1x128x1xi32> to vector<1xi32>
      %395 = vector.shape_cast %394 : vector<1xi32> to vector<1x1x1x1xi32>
      %396 = vector.extract %395[0, 0, 0, 0] : i32 from vector<1x1x1x1xi32>
      %397 = vector.broadcast %382 : i32 to vector<1x128x1xi32>
      %398 = arith.cmpi sge, %39, %397 : vector<1x128x1xi32>
      %399 = arith.extui %398 : vector<1x128x1xi1> to vector<1x128x1xi32>
      %400 = vector.shape_cast %399 : vector<1x128x1xi32> to vector<1x1x128x1xi32>
      %cst_80 = arith.constant dense<0> : vector<1xi32>
      %401 = vector.multi_reduction <add>, %400, %cst_80 [1, 2, 3] : vector<1x1x128x1xi32> to vector<1xi32>
      %402 = vector.shape_cast %401 : vector<1xi32> to vector<1x1x1x1xi32>
      %403 = vector.extract %402[0, 0, 0, 0] : i32 from vector<1x1x1x1xi32>
      %c5_i32_81 = arith.constant 5 : i32
      %404 = arith.cmpi sge, %389, %c5_i32_81 : i32
      %405 = arith.extui %404 : i1 to i32
      %c5_i32_82 = arith.constant 5 : i32
      %406 = arith.cmpi sge, %396, %c5_i32_82 : i32
      %407 = arith.extui %406 : i1 to i32
      %408 = arith.addi %405, %407 : i32
      %c5_i32_83 = arith.constant 5 : i32
      %409 = arith.cmpi sge, %403, %c5_i32_83 : i32
      %410 = arith.extui %409 : i1 to i32
      %411 = arith.addi %408, %410 : i32
      %c9_i32 = arith.constant 9 : i32
      %412 = arith.shli %411, %c9_i32 : i32
      %413 = arith.ori %379, %412 : i32
      %c128_i32_84 = arith.constant 128 : i32
      %414 = arith.ori %413, %c128_i32_84 : i32
      %c256_i32 = arith.constant 256 : i32
      %415 = arith.ori %413, %c256_i32 : i32
      %c384_i32 = arith.constant 384 : i32
      %416 = arith.ori %413, %c384_i32 : i32
      %417 = vector.broadcast %414 : i32 to vector<1x128x1xi32>
      %418 = arith.cmpi sge, %39, %417 : vector<1x128x1xi32>
      %419 = arith.extui %418 : vector<1x128x1xi1> to vector<1x128x1xi32>
      %420 = vector.shape_cast %419 : vector<1x128x1xi32> to vector<1x1x128x1xi32>
      %cst_85 = arith.constant dense<0> : vector<1xi32>
      %421 = vector.multi_reduction <add>, %420, %cst_85 [1, 2, 3] : vector<1x1x128x1xi32> to vector<1xi32>
      %422 = vector.shape_cast %421 : vector<1xi32> to vector<1x1x1x1xi32>
      %423 = vector.extract %422[0, 0, 0, 0] : i32 from vector<1x1x1x1xi32>
      %424 = vector.broadcast %415 : i32 to vector<1x128x1xi32>
      %425 = arith.cmpi sge, %39, %424 : vector<1x128x1xi32>
      %426 = arith.extui %425 : vector<1x128x1xi1> to vector<1x128x1xi32>
      %427 = vector.shape_cast %426 : vector<1x128x1xi32> to vector<1x1x128x1xi32>
      %cst_86 = arith.constant dense<0> : vector<1xi32>
      %428 = vector.multi_reduction <add>, %427, %cst_86 [1, 2, 3] : vector<1x1x128x1xi32> to vector<1xi32>
      %429 = vector.shape_cast %428 : vector<1xi32> to vector<1x1x1x1xi32>
      %430 = vector.extract %429[0, 0, 0, 0] : i32 from vector<1x1x1x1xi32>
      %431 = vector.broadcast %416 : i32 to vector<1x128x1xi32>
      %432 = arith.cmpi sge, %39, %431 : vector<1x128x1xi32>
      %433 = arith.extui %432 : vector<1x128x1xi1> to vector<1x128x1xi32>
      %434 = vector.shape_cast %433 : vector<1x128x1xi32> to vector<1x1x128x1xi32>
      %cst_87 = arith.constant dense<0> : vector<1xi32>
      %435 = vector.multi_reduction <add>, %434, %cst_87 [1, 2, 3] : vector<1x1x128x1xi32> to vector<1xi32>
      %436 = vector.shape_cast %435 : vector<1xi32> to vector<1x1x1x1xi32>
      %437 = vector.extract %436[0, 0, 0, 0] : i32 from vector<1x1x1x1xi32>
      %c5_i32_88 = arith.constant 5 : i32
      %438 = arith.cmpi sge, %423, %c5_i32_88 : i32
      %439 = arith.extui %438 : i1 to i32
      %c5_i32_89 = arith.constant 5 : i32
      %440 = arith.cmpi sge, %430, %c5_i32_89 : i32
      %441 = arith.extui %440 : i1 to i32
      %442 = arith.addi %439, %441 : i32
      %c5_i32_90 = arith.constant 5 : i32
      %443 = arith.cmpi sge, %437, %c5_i32_90 : i32
      %444 = arith.extui %443 : i1 to i32
      %445 = arith.addi %442, %444 : i32
      %c7_i32 = arith.constant 7 : i32
      %446 = arith.shli %445, %c7_i32 : i32
      %447 = arith.ori %413, %446 : i32
      %c32_i32 = arith.constant 32 : i32
      %448 = arith.ori %447, %c32_i32 : i32
      %c64_i32 = arith.constant 64 : i32
      %449 = arith.ori %447, %c64_i32 : i32
      %c96_i32 = arith.constant 96 : i32
      %450 = arith.ori %447, %c96_i32 : i32
      %451 = vector.broadcast %448 : i32 to vector<1x128x1xi32>
      %452 = arith.cmpi sge, %39, %451 : vector<1x128x1xi32>
      %453 = arith.extui %452 : vector<1x128x1xi1> to vector<1x128x1xi32>
      %454 = vector.shape_cast %453 : vector<1x128x1xi32> to vector<1x1x128x1xi32>
      %cst_91 = arith.constant dense<0> : vector<1xi32>
      %455 = vector.multi_reduction <add>, %454, %cst_91 [1, 2, 3] : vector<1x1x128x1xi32> to vector<1xi32>
      %456 = vector.shape_cast %455 : vector<1xi32> to vector<1x1x1x1xi32>
      %457 = vector.extract %456[0, 0, 0, 0] : i32 from vector<1x1x1x1xi32>
      %458 = vector.broadcast %449 : i32 to vector<1x128x1xi32>
      %459 = arith.cmpi sge, %39, %458 : vector<1x128x1xi32>
      %460 = arith.extui %459 : vector<1x128x1xi1> to vector<1x128x1xi32>
      %461 = vector.shape_cast %460 : vector<1x128x1xi32> to vector<1x1x128x1xi32>
      %cst_92 = arith.constant dense<0> : vector<1xi32>
      %462 = vector.multi_reduction <add>, %461, %cst_92 [1, 2, 3] : vector<1x1x128x1xi32> to vector<1xi32>
      %463 = vector.shape_cast %462 : vector<1xi32> to vector<1x1x1x1xi32>
      %464 = vector.extract %463[0, 0, 0, 0] : i32 from vector<1x1x1x1xi32>
      %465 = vector.broadcast %450 : i32 to vector<1x128x1xi32>
      %466 = arith.cmpi sge, %39, %465 : vector<1x128x1xi32>
      %467 = arith.extui %466 : vector<1x128x1xi1> to vector<1x128x1xi32>
      %468 = vector.shape_cast %467 : vector<1x128x1xi32> to vector<1x1x128x1xi32>
      %cst_93 = arith.constant dense<0> : vector<1xi32>
      %469 = vector.multi_reduction <add>, %468, %cst_93 [1, 2, 3] : vector<1x1x128x1xi32> to vector<1xi32>
      %470 = vector.shape_cast %469 : vector<1xi32> to vector<1x1x1x1xi32>
      %471 = vector.extract %470[0, 0, 0, 0] : i32 from vector<1x1x1x1xi32>
      %c5_i32_94 = arith.constant 5 : i32
      %472 = arith.cmpi sge, %457, %c5_i32_94 : i32
      %473 = arith.extui %472 : i1 to i32
      %c5_i32_95 = arith.constant 5 : i32
      %474 = arith.cmpi sge, %464, %c5_i32_95 : i32
      %475 = arith.extui %474 : i1 to i32
      %476 = arith.addi %473, %475 : i32
      %c5_i32_96 = arith.constant 5 : i32
      %477 = arith.cmpi sge, %471, %c5_i32_96 : i32
      %478 = arith.extui %477 : i1 to i32
      %479 = arith.addi %476, %478 : i32
      %c5_i32_97 = arith.constant 5 : i32
      %480 = arith.shli %479, %c5_i32_97 : i32
      %481 = arith.ori %447, %480 : i32
      %c8_i32_98 = arith.constant 8 : i32
      %482 = arith.ori %481, %c8_i32_98 : i32
      %c16_i32 = arith.constant 16 : i32
      %483 = arith.ori %481, %c16_i32 : i32
      %c24_i32 = arith.constant 24 : i32
      %484 = arith.ori %481, %c24_i32 : i32
      %485 = vector.broadcast %482 : i32 to vector<1x128x1xi32>
      %486 = arith.cmpi sge, %39, %485 : vector<1x128x1xi32>
      %487 = arith.extui %486 : vector<1x128x1xi1> to vector<1x128x1xi32>
      %488 = vector.shape_cast %487 : vector<1x128x1xi32> to vector<1x1x128x1xi32>
      %cst_99 = arith.constant dense<0> : vector<1xi32>
      %489 = vector.multi_reduction <add>, %488, %cst_99 [1, 2, 3] : vector<1x1x128x1xi32> to vector<1xi32>
      %490 = vector.shape_cast %489 : vector<1xi32> to vector<1x1x1x1xi32>
      %491 = vector.extract %490[0, 0, 0, 0] : i32 from vector<1x1x1x1xi32>
      %492 = vector.broadcast %483 : i32 to vector<1x128x1xi32>
      %493 = arith.cmpi sge, %39, %492 : vector<1x128x1xi32>
      %494 = arith.extui %493 : vector<1x128x1xi1> to vector<1x128x1xi32>
      %495 = vector.shape_cast %494 : vector<1x128x1xi32> to vector<1x1x128x1xi32>
      %cst_100 = arith.constant dense<0> : vector<1xi32>
      %496 = vector.multi_reduction <add>, %495, %cst_100 [1, 2, 3] : vector<1x1x128x1xi32> to vector<1xi32>
      %497 = vector.shape_cast %496 : vector<1xi32> to vector<1x1x1x1xi32>
      %498 = vector.extract %497[0, 0, 0, 0] : i32 from vector<1x1x1x1xi32>
      %499 = vector.broadcast %484 : i32 to vector<1x128x1xi32>
      %500 = arith.cmpi sge, %39, %499 : vector<1x128x1xi32>
      %501 = arith.extui %500 : vector<1x128x1xi1> to vector<1x128x1xi32>
      %502 = vector.shape_cast %501 : vector<1x128x1xi32> to vector<1x1x128x1xi32>
      %cst_101 = arith.constant dense<0> : vector<1xi32>
      %503 = vector.multi_reduction <add>, %502, %cst_101 [1, 2, 3] : vector<1x1x128x1xi32> to vector<1xi32>
      %504 = vector.shape_cast %503 : vector<1xi32> to vector<1x1x1x1xi32>
      %505 = vector.extract %504[0, 0, 0, 0] : i32 from vector<1x1x1x1xi32>
      %c5_i32_102 = arith.constant 5 : i32
      %506 = arith.cmpi sge, %491, %c5_i32_102 : i32
      %507 = arith.extui %506 : i1 to i32
      %c5_i32_103 = arith.constant 5 : i32
      %508 = arith.cmpi sge, %498, %c5_i32_103 : i32
      %509 = arith.extui %508 : i1 to i32
      %510 = arith.addi %507, %509 : i32
      %c5_i32_104 = arith.constant 5 : i32
      %511 = arith.cmpi sge, %505, %c5_i32_104 : i32
      %512 = arith.extui %511 : i1 to i32
      %513 = arith.addi %510, %512 : i32
      %c3_i32 = arith.constant 3 : i32
      %514 = arith.shli %513, %c3_i32 : i32
      %515 = arith.ori %481, %514 : i32
      %c2_i32 = arith.constant 2 : i32
      %516 = arith.ori %515, %c2_i32 : i32
      %c4_i32 = arith.constant 4 : i32
      %517 = arith.ori %515, %c4_i32 : i32
      %c6_i32 = arith.constant 6 : i32
      %518 = arith.ori %515, %c6_i32 : i32
      %519 = vector.broadcast %516 : i32 to vector<1x128x1xi32>
      %520 = arith.cmpi sge, %39, %519 : vector<1x128x1xi32>
      %521 = arith.extui %520 : vector<1x128x1xi1> to vector<1x128x1xi32>
      %522 = vector.shape_cast %521 : vector<1x128x1xi32> to vector<1x1x128x1xi32>
      %cst_105 = arith.constant dense<0> : vector<1xi32>
      %523 = vector.multi_reduction <add>, %522, %cst_105 [1, 2, 3] : vector<1x1x128x1xi32> to vector<1xi32>
      %524 = vector.shape_cast %523 : vector<1xi32> to vector<1x1x1x1xi32>
      %525 = vector.extract %524[0, 0, 0, 0] : i32 from vector<1x1x1x1xi32>
      %526 = vector.broadcast %517 : i32 to vector<1x128x1xi32>
      %527 = arith.cmpi sge, %39, %526 : vector<1x128x1xi32>
      %528 = arith.extui %527 : vector<1x128x1xi1> to vector<1x128x1xi32>
      %529 = vector.shape_cast %528 : vector<1x128x1xi32> to vector<1x1x128x1xi32>
      %cst_106 = arith.constant dense<0> : vector<1xi32>
      %530 = vector.multi_reduction <add>, %529, %cst_106 [1, 2, 3] : vector<1x1x128x1xi32> to vector<1xi32>
      %531 = vector.shape_cast %530 : vector<1xi32> to vector<1x1x1x1xi32>
      %532 = vector.extract %531[0, 0, 0, 0] : i32 from vector<1x1x1x1xi32>
      %533 = vector.broadcast %518 : i32 to vector<1x128x1xi32>
      %534 = arith.cmpi sge, %39, %533 : vector<1x128x1xi32>
      %535 = arith.extui %534 : vector<1x128x1xi1> to vector<1x128x1xi32>
      %536 = vector.shape_cast %535 : vector<1x128x1xi32> to vector<1x1x128x1xi32>
      %cst_107 = arith.constant dense<0> : vector<1xi32>
      %537 = vector.multi_reduction <add>, %536, %cst_107 [1, 2, 3] : vector<1x1x128x1xi32> to vector<1xi32>
      %538 = vector.shape_cast %537 : vector<1xi32> to vector<1x1x1x1xi32>
      %539 = vector.extract %538[0, 0, 0, 0] : i32 from vector<1x1x1x1xi32>
      %c5_i32_108 = arith.constant 5 : i32
      %540 = arith.cmpi sge, %525, %c5_i32_108 : i32
      %541 = arith.extui %540 : i1 to i32
      %c5_i32_109 = arith.constant 5 : i32
      %542 = arith.cmpi sge, %532, %c5_i32_109 : i32
      %543 = arith.extui %542 : i1 to i32
      %544 = arith.addi %541, %543 : i32
      %c5_i32_110 = arith.constant 5 : i32
      %545 = arith.cmpi sge, %539, %c5_i32_110 : i32
      %546 = arith.extui %545 : i1 to i32
      %547 = arith.addi %544, %546 : i32
      %c1_i32 = arith.constant 1 : i32
      %548 = arith.shli %547, %c1_i32 : i32
      %549 = arith.ori %515, %548 : i32
      %c1_i32_111 = arith.constant 1 : i32
      %550 = arith.ori %549, %c1_i32_111 : i32
      %551 = vector.broadcast %550 : i32 to vector<1x128x1xi32>
      %552 = arith.cmpi sge, %39, %551 : vector<1x128x1xi32>
      %553 = arith.extui %552 : vector<1x128x1xi1> to vector<1x128x1xi32>
      %554 = vector.shape_cast %553 : vector<1x128x1xi32> to vector<1x1x128x1xi32>
      %cst_112 = arith.constant dense<0> : vector<1xi32>
      %555 = vector.multi_reduction <add>, %554, %cst_112 [1, 2, 3] : vector<1x1x128x1xi32> to vector<1xi32>
      %556 = vector.shape_cast %555 : vector<1xi32> to vector<1x1x1x1xi32>
      %557 = vector.extract %556[0, 0, 0, 0] : i32 from vector<1x1x1x1xi32>
      %c5_i32_113 = arith.constant 5 : i32
      %558 = arith.cmpi sge, %557, %c5_i32_113 : i32
      %559 = arith.select %558, %550, %549 : i32
      %560 = vector.broadcast %559 : i32 to vector<1x128x1xi32>
      %561 = arith.cmpi sgt, %39, %560 : vector<1x128x1xi32>
      %562 = arith.extui %561 : vector<1x128x1xi1> to vector<1x128x1xi32>
      %563 = vector.shape_cast %562 : vector<1x128x1xi32> to vector<1x1x128x1xi32>
      %cst_114 = arith.constant dense<0> : vector<1xi32>
      %564 = vector.multi_reduction <add>, %563, %cst_114 [1, 2, 3] : vector<1x1x128x1xi32> to vector<1xi32>
      %565 = vector.shape_cast %564 : vector<1xi32> to vector<1x1x1x1xi32>
      %566 = vector.extract %565[0, 0, 0, 0] : i32 from vector<1x1x1x1xi32>
      %567 = arith.sitofp %566 : i32 to f32
      %cst_115 = arith.constant 0.000000e+00 : f32
      %568 = vector.broadcast %cst_115 : f32 to vector<1x128x1xf32>
      %569 = arith.select %561, %38, %568 : vector<1x128x1xi1>, vector<1x128x1xf32>
      %570 = vector.shape_cast %569 : vector<1x128x1xf32> to vector<1x1x128x1xf32>
      %cst_116 = arith.constant dense<0.000000e+00> : vector<1xf32>
      %571 = vector.multi_reduction <add>, %570, %cst_116 [1, 2, 3] : vector<1x1x128x1xf32> to vector<1xf32>
      %572 = vector.shape_cast %571 : vector<1xf32> to vector<1x1x1x1xf32>
      %573 = vector.extract %572[0, 0, 0, 0] : f32 from vector<1x1x1x1xf32>
      %574 = vector.broadcast %559 : i32 to vector<1x128x1xi32>
      %575 = arith.cmpi sle, %39, %574 : vector<1x128x1xi32>
      %cst_117 = arith.constant 0xFF800000 : f32
      %576 = vector.broadcast %cst_117 : f32 to vector<1x128x1xf32>
      %577 = arith.select %575, %38, %576 : vector<1x128x1xi1>, vector<1x128x1xf32>
      %578 = vector.shape_cast %577 : vector<1x128x1xf32> to vector<1x1x128x1xf32>
      %cst_118 = arith.constant dense<0xFF800000> : vector<1xf32>
      %579 = vector.multi_reduction <maximumf>, %578, %cst_118 [1, 2, 3] : vector<1x1x128x1xf32> to vector<1xf32>
      %580 = vector.shape_cast %579 : vector<1xf32> to vector<1x1x1x1xf32>
      %581 = vector.extract %580[0, 0, 0, 0] : f32 from vector<1x1x1x1xf32>
      %cst_119 = arith.constant 5.000000e+00 : f32
      %582 = arith.subf %cst_119, %567 : f32
      %583 = arith.mulf %582, %581 : f32
      %584 = arith.addf %573, %583 : f32
      %cst_120 = arith.constant 5.000000e+00 : f32
      %585 = arith.divf %584, %cst_120 : f32
      %586 = vector.broadcast %585 : f32 to vector<1x1xf32>
      %c0_121 = arith.constant 0 : index
      %c0_122 = arith.constant 0 : index
      %587 = vector.load %arg3[%c0_121, %c0_122] : memref<1x1xf32, #tpu.memory_space<vmem>>, vector<1x1xf32>
      tpu.vector_store %arg3[%c0_121, %c0_122], %586 {strides = array<i32>} : memref<1x1xf32, #tpu.memory_space<vmem>>, vector<1x1xf32>,
    } else {
    }
    return
  }
  func.func @transform_0(%arg0: i32) -> (i32, i32) {
    %c0_i32 = arith.constant 0 : i32
    %c0_i32_0 = arith.constant 0 : i32
    return %arg0, %c0_i32 : i32, i32
  }
  func.func @transform_1(%arg0: i32) -> (i32, i32) {
    %c0_i32 = arith.constant 0 : i32
    %c0_i32_0 = arith.constant 0 : i32
    return %arg0, %c0_i32 : i32, i32
  }
  func.func @transform_2(%arg0: i32) -> (i32, i32) {
    %c0_i32 = arith.constant 0 : i32
    %c0_i32_0 = arith.constant 0 : i32
    %c0_i32_1 = arith.constant 0 : i32
    return %c0_i32, %c0_i32_0 : i32, i32
  }
}

</mosaic_0001>

<llo_original>
// kernel: tpu_custom_call.1
$region0: #{tpu_custom_call.1}
  #allocation0 [shape = 'u32[]', space=smem, size = 0x4, offset = 0x4, fixed_abs, tag = 'smem constant byte address 0x4 - core index']
  #allocation1 [shape = 'u32[144,128]{1,0:T(1,128)}', space=vmem, size = 0x12000, scoped, tag = 'internal scratch']
  #allocation2 [shape = 'f32[1,128,1]{2,1,0:T(8,128)}', space=vmem, size = 0x10000, scoped, tag = 'scratch operand']
  %s0 = inlined_call_operand.vmem [shape: f32[8,32], index: 0, kind: input, shape index: {}]
  %s1 = inlined_call_operand.vmem [shape: s32[8,1], index: 1, kind: input, shape index: {}]
  %s2 = inlined_call_operand.hbm [shape: f32[1,1], index: 2, kind: output, shape index: {}]
  %s3 = sld [smem:[#allocation0]]
  $region22: #{tpu_custom_call.1} parent=0
    _
  %s5 = ssub.s32 1, %s3
  %s6 = scalar_select 0, %s5, %s3
  $region1: #{tpu_custom_call.1} parent=0
    #allocation3 [shape = 'u8[512]{0}', space=vmem, size = 0x400, scoped, tag = 'output window, operand 0, single buffered']
    #allocation4 [shape = 's32[1]{0}', space=sflag, size = 0x4, scoped, tag = 'scoped memory for tpu_custom_call.1']
    %7 = vsyncpa [#allocation4], 0
    // Predicated region
    $region2: #{tpu_custom_call.1} parent=1 // pred_check
      _
    $region3: #{tpu_custom_call.1} parent=1 // pred_check_branch
      %9 = sbr.rel (0) target = $region5
    $region4: #{tpu_custom_call.1} parent=1 // pred_region
      _
    $region5: #{tpu_custom_call.1} parent=1 // pred_fallthru
      _
    // Predicated region
    $region6: #{tpu_custom_call.1} parent=1 // pred_check
      _
    $region7: #{tpu_custom_call.1} parent=1 // pred_check_branch
      %11 = sbr.rel (0) target = $region9
    $region8: #{tpu_custom_call.1} parent=1 // pred_region
      _
    $region9: #{tpu_custom_call.1} parent=1 // pred_fallthru
      _
    %v12 = vld [vmem:[%s0] sm:$0xff]
    %v13 = vld [vmem:[%s0 + $0x8] sm:$0xff]
    %v14 = vld [vmem:[%s0 + $0x10] sm:$0xff]
    %v15 = vld [vmem:[%s0 + $0x18] sm:$0xff]
    %v16 = vld [vmem:[%s0 + $0x20] sm:$0xff]
    %v17 = vld [vmem:[%s0 + $0x28] sm:$0xff]
    %v18 = vld [vmem:[%s0 + $0x30] sm:$0xff]
    %v19 = vld [vmem:[%s0 + $0x38] sm:$0xff]
    %v20 = vld [vmem:[%s0 + $0x40] sm:$0xff]
    %v21 = vld [vmem:[%s0 + $0x48] sm:$0xff]
    %v22 = vld [vmem:[%s0 + $0x50] sm:$0xff]
    %v23 = vld [vmem:[%s0 + $0x58] sm:$0xff]
    %v24 = vld [vmem:[%s0 + $0x60] sm:$0xff]
    %v25 = vld [vmem:[%s0 + $0x68] sm:$0xff]
    %v26 = vld [vmem:[%s0 + $0x70] sm:$0xff]
    %v27 = vld [vmem:[%s0 + $0x78] sm:$0xff]
    %v28 = vld [vmem:[%s1] sm:$0xff]
    %v29 = vld [vmem:[%s1 + $0x8] sm:$0xff]
    %v30 = vld [vmem:[%s1 + $0x10] sm:$0xff]
    %v31 = vld [vmem:[%s1 + $0x18] sm:$0xff]
    %v32 = vld [vmem:[%s1 + $0x20] sm:$0xff]
    %v33 = vld [vmem:[%s1 + $0x28] sm:$0xff]
    %v34 = vld [vmem:[%s1 + $0x30] sm:$0xff]
    %v35 = vld [vmem:[%s1 + $0x38] sm:$0xff]
    %v36 = vld [vmem:[%s1 + $0x40] sm:$0xff]
    %v37 = vld [vmem:[%s1 + $0x48] sm:$0xff]
    %v38 = vld [vmem:[%s1 + $0x50] sm:$0xff]
    %v39 = vld [vmem:[%s1 + $0x58] sm:$0xff]
    %v40 = vld [vmem:[%s1 + $0x60] sm:$0xff]
    %v41 = vld [vmem:[%s1 + $0x68] sm:$0xff]
    %v42 = vld [vmem:[%s1 + $0x70] sm:$0xff]
    %v43 = vld [vmem:[%s1 + $0x78] sm:$0xff]
    %vm44 = vcmask 261120
    %v45 = vsel %vm44, %v12, -inf
    %46 = vmax.xlane.f32.xlu0 %v45
    %v47 = vpop.xlane.xlu0 %46
    %v48 = vsel %vm44, %v13, -inf
    %49 = vmax.xlane.f32.xlu0 %v48
    %v50 = vpop.xlane.xlu0 %49
    %v51 = vsel %vm44, %v14, -inf
    %52 = vmax.xlane.f32.xlu0 %v51
    %v53 = vpop.xlane.xlu0 %52
    %v54 = vsel %vm44, %v15, -inf
    %55 = vmax.xlane.f32.xlu0 %v54
    %v56 = vpop.xlane.xlu0 %55
    %v57 = vsel %vm44, %v16, -inf
    %58 = vmax.xlane.f32.xlu0 %v57
    %v59 = vpop.xlane.xlu0 %58
    %v60 = vsel %vm44, %v17, -inf
    %61 = vmax.xlane.f32.xlu0 %v60
    %v62 = vpop.xlane.xlu0 %61
    %v63 = vsel %vm44, %v18, -inf
    %64 = vmax.xlane.f32.xlu0 %v63
    %v65 = vpop.xlane.xlu0 %64
    %v66 = vsel %vm44, %v19, -inf
    %67 = vmax.xlane.f32.xlu0 %v66
    %v68 = vpop.xlane.xlu0 %67
    %v69 = vsel %vm44, %v20, -inf
    %70 = vmax.xlane.f32.xlu0 %v69
    %v71 = vpop.xlane.xlu0 %70
    %v72 = vsel %vm44, %v21, -inf
    %73 = vmax.xlane.f32.xlu0 %v72
    %v74 = vpop.xlane.xlu0 %73
    %v75 = vsel %vm44, %v22, -inf
    %76 = vmax.xlane.f32.xlu0 %v75
    %v77 = vpop.xlane.xlu0 %76
    %v78 = vsel %vm44, %v23, -inf
    %79 = vmax.xlane.f32.xlu0 %v78
    %v80 = vpop.xlane.xlu0 %79
    %v81 = vsel %vm44, %v24, -inf
    %82 = vmax.xlane.f32.xlu0 %v81
    %v83 = vpop.xlane.xlu0 %82
    %v84 = vsel %vm44, %v25, -inf
    %85 = vmax.xlane.f32.xlu0 %v84
    %v86 = vpop.xlane.xlu0 %85
    %v87 = vsel %vm44, %v26, -inf
    %88 = vmax.xlane.f32.xlu0 %v87
    %v89 = vpop.xlane.xlu0 %88
    %v90 = vsel %vm44, %v27, -inf
    %91 = vmax.xlane.f32.xlu0 %v90
    %v92 = vpop.xlane.xlu0 %91
    %v93 = vsub.f32 %v12, %v47
    %v94 = vsub.f32 %v13, %v50
    %v95 = vsub.f32 %v14, %v53
    %v96 = vsub.f32 %v15, %v56
    %v97 = vsub.f32 %v16, %v59
    %v98 = vsub.f32 %v17, %v62
    %v99 = vsub.f32 %v18, %v65
    %v100 = vsub.f32 %v19, %v68
    %v101 = vsub.f32 %v20, %v71
    %v102 = vsub.f32 %v21, %v74
    %v103 = vsub.f32 %v22, %v77
    %v104 = vsub.f32 %v23, %v80
    %v105 = vsub.f32 %v24, %v83
    %v106 = vsub.f32 %v25, %v86
    %v107 = vsub.f32 %v26, %v89
    %v108 = vsub.f32 %v27, %v92
    %v109 = vmul.f32 %v93, 1.442695
    %v110 = vpow.pop %v109
    %v111 = vmul.f32 %v94, 1.442695
    %v112 = vpow.pop %v111
    %v113 = vmul.f32 %v95, 1.442695
    %v114 = vpow.pop %v113
    %v115 = vmul.f32 %v96, 1.442695
    %v116 = vpow.pop %v115
    %v117 = vmul.f32 %v97, 1.442695
    %v118 = vpow.pop %v117
    %v119 = vmul.f32 %v98, 1.442695
    %v120 = vpow.pop %v119
    %v121 = vmul.f32 %v99, 1.442695
    %v122 = vpow.pop %v121
    %v123 = vmul.f32 %v100, 1.442695
    %v124 = vpow.pop %v123
    %v125 = vmul.f32 %v101, 1.442695
    %v126 = vpow.pop %v125
    %v127 = vmul.f32 %v102, 1.442695
    %v128 = vpow.pop %v127
    %v129 = vmul.f32 %v103, 1.442695
    %v130 = vpow.pop %v129
    %v131 = vmul.f32 %v104, 1.442695
    %v132 = vpow.pop %v131
    %v133 = vmul.f32 %v105, 1.442695
    %v134 = vpow.pop %v133
    %v135 = vmul.f32 %v106, 1.442695
    %v136 = vpow.pop %v135
    %v137 = vmul.f32 %v107, 1.442695
    %v138 = vpow.pop %v137
    %v139 = vmul.f32 %v108, 1.442695
    %v140 = vpow.pop %v139
    %v141 = vsel %vm44, %v110, 0.0
    %142 = vadd.xlane.f32.xlu0 %v141
    %v143 = vpop.xlane.xlu0 %142
    %v144 = vsel %vm44, %v112, 0.0
    %145 = vadd.xlane.f32.xlu0 %v144
    %v146 = vpop.xlane.xlu0 %145
    %v147 = vsel %vm44, %v114, 0.0
    %148 = vadd.xlane.f32.xlu0 %v147
    %v149 = vpop.xlane.xlu0 %148
    %v150 = vsel %vm44, %v116, 0.0
    %151 = vadd.xlane.f32.xlu0 %v150
    %v152 = vpop.xlane.xlu0 %151
    %v153 = vsel %vm44, %v118, 0.0
    %154 = vadd.xlane.f32.xlu0 %v153
    %v155 = vpop.xlane.xlu0 %154
    %v156 = vsel %vm44, %v120, 0.0
    %157 = vadd.xlane.f32.xlu0 %v156
    %v158 = vpop.xlane.xlu0 %157
    %v159 = vsel %vm44, %v122, 0.0
    %160 = vadd.xlane.f32.xlu0 %v159
    %v161 = vpop.xlane.xlu0 %160
    %v162 = vsel %vm44, %v124, 0.0
    %163 = vadd.xlane.f32.xlu0 %v162
    %v164 = vpop.xlane.xlu0 %163
    %v165 = vsel %vm44, %v126, 0.0
    %166 = vadd.xlane.f32.xlu0 %v165
    %v167 = vpop.xlane.xlu0 %166
    %v168 = vsel %vm44, %v128, 0.0
    %169 = vadd.xlane.f32.xlu0 %v168
    %v170 = vpop.xlane.xlu0 %169
    %v171 = vsel %vm44, %v130, 0.0
    %172 = vadd.xlane.f32.xlu0 %v171
    %v173 = vpop.xlane.xlu0 %172
    %v174 = vsel %vm44, %v132, 0.0
    %175 = vadd.xlane.f32.xlu0 %v174
    %v176 = vpop.xlane.xlu0 %175
    %v177 = vsel %vm44, %v134, 0.0
    %178 = vadd.xlane.f32.xlu0 %v177
    %v179 = vpop.xlane.xlu0 %178
    %v180 = vsel %vm44, %v136, 0.0
    %181 = vadd.xlane.f32.xlu0 %v180
    %v182 = vpop.xlane.xlu0 %181
    %v183 = vsel %vm44, %v138, 0.0
    %184 = vadd.xlane.f32.xlu0 %v183
    %v185 = vpop.xlane.xlu0 %184
    %v186 = vsel %vm44, %v140, 0.0
    %187 = vadd.xlane.f32.xlu0 %v186
    %v188 = vpop.xlane.xlu0 %187
    %v189 = vlog2.pop %v143
    %v190 = vmul.f32 %v189, 0.6931472
    %v191 = vlog2.pop %v146
    %v192 = vmul.f32 %v191, 0.6931472
    %v193 = vlog2.pop %v149
    %v194 = vmul.f32 %v193, 0.6931472
    %v195 = vlog2.pop %v152
    %v196 = vmul.f32 %v195, 0.6931472
    %v197 = vlog2.pop %v155
    %v198 = vmul.f32 %v197, 0.6931472
    %v199 = vlog2.pop %v158
    %v200 = vmul.f32 %v199, 0.6931472
    %v201 = vlog2.pop %v161
    %v202 = vmul.f32 %v201, 0.6931472
    %v203 = vlog2.pop %v164
    %v204 = vmul.f32 %v203, 0.6931472
    %v205 = vlog2.pop %v167
    %v206 = vmul.f32 %v205, 0.6931472
    %v207 = vlog2.pop %v170
    %v208 = vmul.f32 %v207, 0.6931472
    %v209 = vlog2.pop %v173
    %v210 = vmul.f32 %v209, 0.6931472
    %v211 = vlog2.pop %v176
    %v212 = vmul.f32 %v211, 0.6931472
    %v213 = vlog2.pop %v179
    %v214 = vmul.f32 %v213, 0.6931472
    %v215 = vlog2.pop %v182
    %v216 = vmul.f32 %v215, 0.6931472
    %v217 = vlog2.pop %v185
    %v218 = vmul.f32 %v217, 0.6931472
    %v219 = vlog2.pop %v188
    %v220 = vmul.f32 %v219, 0.6931472
    %v221 = vadd.f32 %v190, %v47
    %v222 = vadd.f32 %v192, %v50
    %v223 = vadd.f32 %v194, %v53
    %v224 = vadd.f32 %v196, %v56
    %v225 = vadd.f32 %v198, %v59
    %v226 = vadd.f32 %v200, %v62
    %v227 = vadd.f32 %v202, %v65
    %v228 = vadd.f32 %v204, %v68
    %v229 = vadd.f32 %v206, %v71
    %v230 = vadd.f32 %v208, %v74
    %v231 = vadd.f32 %v210, %v77
    %v232 = vadd.f32 %v212, %v80
    %v233 = vadd.f32 %v214, %v83
    %v234 = vadd.f32 %v216, %v86
    %v235 = vadd.f32 %v218, %v89
    %v236 = vadd.f32 %v220, %v92
    %v237 = vlaneseq
    %v238 = vand.u32 %v237, 127
    %239 = vset.pattern.permute.xlu0 0
    %240 = vperm.xlu0 %239, %v28
    %v241 = vpop.permute.xlu0 %240
    %242 = vset.pattern.permute.xlu0 0
    %243 = vperm.xlu0 %242, %v29
    %v244 = vpop.permute.xlu0 %243
    %245 = vset.pattern.permute.xlu0 0
    %246 = vperm.xlu0 %245, %v30
    %v247 = vpop.permute.xlu0 %246
    %248 = vset.pattern.permute.xlu0 0
    %249 = vperm.xlu0 %248, %v31
    %v250 = vpop.permute.xlu0 %249
    %251 = vset.pattern.permute.xlu0 0
    %252 = vperm.xlu0 %251, %v32
    %v253 = vpop.permute.xlu0 %252
    %254 = vset.pattern.permute.xlu0 0
    %255 = vperm.xlu0 %254, %v33
    %v256 = vpop.permute.xlu0 %255
    %257 = vset.pattern.permute.xlu0 0
    %258 = vperm.xlu0 %257, %v34
    %v259 = vpop.permute.xlu0 %258
    %260 = vset.pattern.permute.xlu0 0
    %261 = vperm.xlu0 %260, %v35
    %v262 = vpop.permute.xlu0 %261
    %263 = vset.pattern.permute.xlu0 0
    %264 = vperm.xlu0 %263, %v36
    %v265 = vpop.permute.xlu0 %264
    %266 = vset.pattern.permute.xlu0 0
    %267 = vperm.xlu0 %266, %v37
    %v268 = vpop.permute.xlu0 %267
    %269 = vset.pattern.permute.xlu0 0
    %270 = vperm.xlu0 %269, %v38
    %v271 = vpop.permute.xlu0 %270
    %272 = vset.pattern.permute.xlu0 0
    %273 = vperm.xlu0 %272, %v39
    %v274 = vpop.permute.xlu0 %273
    %275 = vset.pattern.permute.xlu0 0
    %276 = vperm.xlu0 %275, %v40
    %v277 = vpop.permute.xlu0 %276
    %278 = vset.pattern.permute.xlu0 0
    %279 = vperm.xlu0 %278, %v41
    %v280 = vpop.permute.xlu0 %279
    %281 = vset.pattern.permute.xlu0 0
    %282 = vperm.xlu0 %281, %v42
    %v283 = vpop.permute.xlu0 %282
    %284 = vset.pattern.permute.xlu0 0
    %285 = vperm.xlu0 %284, %v43
    %v286 = vpop.permute.xlu0 %285
    %vm287 = vcmp.eq.s32.totalorder %v238, %v241
    %vm288 = vcmp.eq.s32.totalorder %v238, %v244
    %vm289 = vcmp.eq.s32.totalorder %v238, %v247
    %vm290 = vcmp.eq.s32.totalorder %v238, %v250
    %vm291 = vcmp.eq.s32.totalorder %v238, %v253
    %vm292 = vcmp.eq.s32.totalorder %v238, %v256
    %vm293 = vcmp.eq.s32.totalorder %v238, %v259
    %vm294 = vcmp.eq.s32.totalorder %v238, %v262
    %vm295 = vcmp.eq.s32.totalorder %v238, %v265
    %vm296 = vcmp.eq.s32.totalorder %v238, %v268
    %vm297 = vcmp.eq.s32.totalorder %v238, %v271
    %vm298 = vcmp.eq.s32.totalorder %v238, %v274
    %vm299 = vcmp.eq.s32.totalorder %v238, %v277
    %vm300 = vcmp.eq.s32.totalorder %v238, %v280
    %vm301 = vcmp.eq.s32.totalorder %v238, %v283
    %vm302 = vcmp.eq.s32.totalorder %v238, %v286
    %v303 = vsel %vm287, 0.9, 0.0032258064
    %v304 = vsel %vm288, 0.9, 0.0032258064
    %v305 = vsel %vm289, 0.9, 0.0032258064
    %v306 = vsel %vm290, 0.9, 0.0032258064
    %v307 = vsel %vm291, 0.9, 0.0032258064
    %v308 = vsel %vm292, 0.9, 0.0032258064
    %v309 = vsel %vm293, 0.9, 0.0032258064
    %v310 = vsel %vm294, 0.9, 0.0032258064
    %v311 = vsel %vm295, 0.9, 0.0032258064
    %v312 = vsel %vm296, 0.9, 0.0032258064
    %v313 = vsel %vm297, 0.9, 0.0032258064
    %v314 = vsel %vm298, 0.9, 0.0032258064
    %v315 = vsel %vm299, 0.9, 0.0032258064
    %v316 = vsel %vm300, 0.9, 0.0032258064
    %v317 = vsel %vm301, 0.9, 0.0032258064
    %v318 = vsel %vm302, 0.9, 0.0032258064
    %v319 = vmul.f32 %v303, %v12
    %v320 = vmul.f32 %v304, %v13
    %v321 = vmul.f32 %v305, %v14
    %v322 = vmul.f32 %v306, %v15
    %v323 = vmul.f32 %v307, %v16
    %v324 = vmul.f32 %v308, %v17
    %v325 = vmul.f32 %v309, %v18
    %v326 = vmul.f32 %v310, %v19
    %v327 = vmul.f32 %v311, %v20
    %v328 = vmul.f32 %v312, %v21
    %v329 = vmul.f32 %v313, %v22
    %v330 = vmul.f32 %v314, %v23
    %v331 = vmul.f32 %v315, %v24
    %v332 = vmul.f32 %v316, %v25
    %v333 = vmul.f32 %v317, %v26
    %v334 = vmul.f32 %v318, %v27
    %v335 = vsel %vm44, %v319, 0.0
    %336 = vadd.xlane.f32.xlu0 %v335
    %v337 = vpop.xlane.xlu0 %336
    %v338 = vsel %vm44, %v320, 0.0
    %339 = vadd.xlane.f32.xlu0 %v338
    %v340 = vpop.xlane.xlu0 %339
    %v341 = vsel %vm44, %v321, 0.0
    %342 = vadd.xlane.f32.xlu0 %v341
    %v343 = vpop.xlane.xlu0 %342
    %v344 = vsel %vm44, %v322, 0.0
    %345 = vadd.xlane.f32.xlu0 %v344
    %v346 = vpop.xlane.xlu0 %345
    %v347 = vsel %vm44, %v323, 0.0
    %348 = vadd.xlane.f32.xlu0 %v347
    %v349 = vpop.xlane.xlu0 %348
    %v350 = vsel %vm44, %v324, 0.0
    %351 = vadd.xlane.f32.xlu0 %v350
    %v352 = vpop.xlane.xlu0 %351
    %v353 = vsel %vm44, %v325, 0.0
    %354 = vadd.xlane.f32.xlu0 %v353
    %v355 = vpop.xlane.xlu0 %354
    %v356 = vsel %vm44, %v326, 0.0
    %357 = vadd.xlane.f32.xlu0 %v356
    %v358 = vpop.xlane.xlu0 %357
    %v359 = vsel %vm44, %v327, 0.0
    %360 = vadd.xlane.f32.xlu0 %v359
    %v361 = vpop.xlane.xlu0 %360
    %v362 = vsel %vm44, %v328, 0.0
    %363 = vadd.xlane.f32.xlu0 %v362
    %v364 = vpop.xlane.xlu0 %363
    %v365 = vsel %vm44, %v329, 0.0
    %366 = vadd.xlane.f32.xlu0 %v365
    %v367 = vpop.xlane.xlu0 %366
    %v368 = vsel %vm44, %v330, 0.0
    %369 = vadd.xlane.f32.xlu0 %v368
    %v370 = vpop.xlane.xlu0 %369
    %v371 = vsel %vm44, %v331, 0.0
    %372 = vadd.xlane.f32.xlu0 %v371
    %v373 = vpop.xlane.xlu0 %372
    %v374 = vsel %vm44, %v332, 0.0
    %375 = vadd.xlane.f32.xlu0 %v374
    %v376 = vpop.xlane.xlu0 %375
    %v377 = vsel %vm44, %v333, 0.0
    %378 = vadd.xlane.f32.xlu0 %v377
    %v379 = vpop.xlane.xlu0 %378
    %v380 = vsel %vm44, %v334, 0.0
    %381 = vadd.xlane.f32.xlu0 %v380
    %v382 = vpop.xlane.xlu0 %381
    %v383 = vsub.f32 %v221, %v337
    %v384 = vsub.f32 %v222, %v340
    %v385 = vsub.f32 %v223, %v343
    %v386 = vsub.f32 %v224, %v346
    %v387 = vsub.f32 %v225, %v349
    %v388 = vsub.f32 %v226, %v352
    %v389 = vsub.f32 %v227, %v355
    %v390 = vsub.f32 %v228, %v358
    %v391 = vsub.f32 %v229, %v361
    %v392 = vsub.f32 %v230, %v364
    %v393 = vsub.f32 %v231, %v367
    %v394 = vsub.f32 %v232, %v370
    %v395 = vsub.f32 %v233, %v373
    %v396 = vsub.f32 %v234, %v376
    %v397 = vsub.f32 %v235, %v379
    %v398 = vsub.f32 %v236, %v382
    %v399 = vmax.f32 %v383, 0.0
    %v400 = vmax.f32 %v384, 0.0
    %v401 = vmax.f32 %v385, 0.0
    %v402 = vmax.f32 %v386, 0.0
    %v403 = vmax.f32 %v387, 0.0
    %v404 = vmax.f32 %v388, 0.0
    %v405 = vmax.f32 %v389, 0.0
    %v406 = vmax.f32 %v390, 0.0
    %v407 = vmax.f32 %v391, 0.0
    %v408 = vmax.f32 %v392, 0.0
    %v409 = vmax.f32 %v393, 0.0
    %v410 = vmax.f32 %v394, 0.0
    %v411 = vmax.f32 %v395, 0.0
    %v412 = vmax.f32 %v396, 0.0
    %v413 = vmax.f32 %v397, 0.0
    %v414 = vmax.f32 %v398, 0.0
    %s415 = smul.u32 0, 128
    %v416 = vlaneseq
    %v417 = vshrl.u32 %v416, 7
    %v418 = vadd.s32 %v417, 8
    %v419 = vadd.s32 %v417, 16
    %v420 = vadd.s32 %v417, 24
    %v421 = vadd.s32 %v417, 32
    %v422 = vadd.s32 %v417, 40
    %v423 = vadd.s32 %v417, 48
    %v424 = vadd.s32 %v417, 56
    %v425 = vadd.s32 %v417, 64
    %v426 = vadd.s32 %v417, 72
    %v427 = vadd.s32 %v417, 80
    %v428 = vadd.s32 %v417, 88
    %v429 = vadd.s32 %v417, 96
    %v430 = vadd.s32 %v417, 104
    %v431 = vadd.s32 %v417, 112
    %v432 = vadd.s32 %v417, 120
    %v433 = vstv %s415
    %v434 = vadd.s32 %v433, %v417
    %v435 = vadd.s32 %v433, %v418
    %v436 = vadd.s32 %v433, %v419
    %v437 = vadd.s32 %v433, %v420
    %v438 = vadd.s32 %v433, %v421
    %v439 = vadd.s32 %v433, %v422
    %v440 = vadd.s32 %v433, %v423
    %v441 = vadd.s32 %v433, %v424
    %v442 = vadd.s32 %v433, %v425
    %v443 = vadd.s32 %v433, %v426
    %v444 = vadd.s32 %v433, %v427
    %v445 = vadd.s32 %v433, %v428
    %v446 = vadd.s32 %v433, %v429
    %v447 = vadd.s32 %v433, %v430
    %v448 = vadd.s32 %v433, %v431
    %v449 = vadd.s32 %v433, %v432
    %vm450 = vcmp.lt.s32.totalorder %v434, 8
    %vm451 = vcmp.lt.s32.totalorder %v435, 8
    %vm452 = vcmp.lt.s32.totalorder %v436, 8
    %vm453 = vcmp.lt.s32.totalorder %v437, 8
    %vm454 = vcmp.lt.s32.totalorder %v438, 8
    %vm455 = vcmp.lt.s32.totalorder %v439, 8
    %vm456 = vcmp.lt.s32.totalorder %v440, 8
    %vm457 = vcmp.lt.s32.totalorder %v441, 8
    %vm458 = vcmp.lt.s32.totalorder %v442, 8
    %vm459 = vcmp.lt.s32.totalorder %v443, 8
    %vm460 = vcmp.lt.s32.totalorder %v444, 8
    %vm461 = vcmp.lt.s32.totalorder %v445, 8
    %vm462 = vcmp.lt.s32.totalorder %v446, 8
    %vm463 = vcmp.lt.s32.totalorder %v447, 8
    %vm464 = vcmp.lt.s32.totalorder %v448, 8
    %vm465 = vcmp.lt.s32.totalorder %v449, 8
    %v466 = vsel %vm450, %v399, -1.0
    %v467 = vsel %vm451, %v400, -1.0
    %v468 = vsel %vm452, %v401, -1.0
    %v469 = vsel %vm453, %v402, -1.0
    %v470 = vsel %vm454, %v403, -1.0
    %v471 = vsel %vm455, %v404, -1.0
    %v472 = vsel %vm456, %v405, -1.0
    %v473 = vsel %vm457, %v406, -1.0
    %v474 = vsel %vm458, %v407, -1.0
    %v475 = vsel %vm459, %v408, -1.0
    %v476 = vsel %vm460, %v409, -1.0
    %v477 = vsel %vm461, %v410, -1.0
    %v478 = vsel %vm462, %v411, -1.0
    %v479 = vsel %vm463, %v412, -1.0
    %v480 = vsel %vm464, %v413, -1.0
    %v481 = vsel %vm465, %v414, -1.0
    %s482 = scalar_lea.vmem [#allocation2], %s415
    %vm483 = vcmask 7168
    %484 = vst.msk [vmem:[%s482] sm:$0xff] %vm483, %v466
    %485 = vst.msk [vmem:[%s482 + $0x8] sm:$0xff] %vm483, %v467
    %486 = vst.msk [vmem:[%s482 + $0x10] sm:$0xff] %vm483, %v468
    %487 = vst.msk [vmem:[%s482 + $0x18] sm:$0xff] %vm483, %v469
    %488 = vst.msk [vmem:[%s482 + $0x20] sm:$0xff] %vm483, %v470
    %489 = vst.msk [vmem:[%s482 + $0x28] sm:$0xff] %vm483, %v471
    %490 = vst.msk [vmem:[%s482 + $0x30] sm:$0xff] %vm483, %v472
    %491 = vst.msk [vmem:[%s482 + $0x38] sm:$0xff] %vm483, %v473
    %492 = vst.msk [vmem:[%s482 + $0x40] sm:$0xff] %vm483, %v474
    %493 = vst.msk [vmem:[%s482 + $0x48] sm:$0xff] %vm483, %v475
    %494 = vst.msk [vmem:[%s482 + $0x50] sm:$0xff] %vm483, %v476
    %495 = vst.msk [vmem:[%s482 + $0x58] sm:$0xff] %vm483, %v477
    %496 = vst.msk [vmem:[%s482 + $0x60] sm:$0xff] %vm483, %v478
    %497 = vst.msk [vmem:[%s482 + $0x68] sm:$0xff] %vm483, %v479
    %498 = vst.msk [vmem:[%s482 + $0x70] sm:$0xff] %vm483, %v480
    %499 = vst.msk [vmem:[%s482 + $0x78] sm:$0xff] %vm483, %v481
    %p500 = scmp.eq.s32.totalorder 0, 0
    // Predicated region
    $region10: #{tpu_custom_call.1} parent=1 // pred_check
      %p501 = pneg %p500
    $region11: #{tpu_custom_call.1} parent=1 // pred_check_branch
      %503 = sbr.rel (%p501) target = $region13
    $region12: #{tpu_custom_call.1} parent=1 // pred_region
      %v504 = vld [vmem:[#allocation2] sm:$0xff]
      %v505 = vld [vmem:[#allocation2 + $0x8] sm:$0xff]
      %v506 = vld [vmem:[#allocation2 + $0x10] sm:$0xff]
      %v507 = vld [vmem:[#allocation2 + $0x18] sm:$0xff]
      %v508 = vld [vmem:[#allocation2 + $0x20] sm:$0xff]
      %v509 = vld [vmem:[#allocation2 + $0x28] sm:$0xff]
      %v510 = vld [vmem:[#allocation2 + $0x30] sm:$0xff]
      %v511 = vld [vmem:[#allocation2 + $0x38] sm:$0xff]
      %v512 = vld [vmem:[#allocation2 + $0x40] sm:$0xff]
      %v513 = vld [vmem:[#allocation2 + $0x48] sm:$0xff]
      %v514 = vld [vmem:[#allocation2 + $0x50] sm:$0xff]
      %v515 = vld [vmem:[#allocation2 + $0x58] sm:$0xff]
      %v516 = vld [vmem:[#allocation2 + $0x60] sm:$0xff]
      %v517 = vld [vmem:[#allocation2 + $0x68] sm:$0xff]
      %v518 = vld [vmem:[#allocation2 + $0x70] sm:$0xff]
      %v519 = vld [vmem:[#allocation2 + $0x78] sm:$0xff]
      %vm536 = vcmp.ge.s32.totalorder %v504, 536870912
      %vm537 = vcmp.ge.s32.totalorder %v505, 536870912
      %vm538 = vcmp.ge.s32.totalorder %v506, 536870912
      %vm539 = vcmp.ge.s32.totalorder %v507, 536870912
      %vm540 = vcmp.ge.s32.totalorder %v508, 536870912
      %vm541 = vcmp.ge.s32.totalorder %v509, 536870912
      %vm542 = vcmp.ge.s32.totalorder %v510, 536870912
      %vm543 = vcmp.ge.s32.totalorder %v511, 536870912
      %vm544 = vcmp.ge.s32.totalorder %v512, 536870912
      %vm545 = vcmp.ge.s32.totalorder %v513, 536870912
      %vm546 = vcmp.ge.s32.totalorder %v514, 536870912
      %vm547 = vcmp.ge.s32.totalorder %v515, 536870912
      %vm548 = vcmp.ge.s32.totalorder %v516, 536870912
      %vm549 = vcmp.ge.s32.totalorder %v517, 536870912
      %vm550 = vcmp.ge.s32.totalorder %v518, 536870912
      %vm551 = vcmp.ge.s32.totalorder %v519, 536870912
      %v552 = vsel %vm536, 1, 0
      %v553 = vsel %vm537, 1, 0
      %v554 = vsel %vm538, 1, 0
      %v555 = vsel %vm539, 1, 0
      %v556 = vsel %vm540, 1, 0
      %v557 = vsel %vm541, 1, 0
      %v558 = vsel %vm542, 1, 0
      %v559 = vsel %vm543, 1, 0
      %v560 = vsel %vm544, 1, 0
      %v561 = vsel %vm545, 1, 0
      %v562 = vsel %vm546, 1, 0
      %v563 = vsel %vm547, 1, 0
      %v564 = vsel %vm548, 1, 0
      %v565 = vsel %vm549, 1, 0
      %v566 = vsel %vm550, 1, 0
      %v567 = vsel %vm551, 1, 0
      %v568 = vsel %vm483, %v552, 0
      %v569 = vsel %vm483, %v553, 0
      %v570 = vsel %vm483, %v554, 0
      %v571 = vsel %vm483, %v555, 0
      %v572 = vsel %vm483, %v556, 0
      %v573 = vadd.s32 %v568, %v572
      %v574 = vsel %vm483, %v557, 0
      %v575 = vadd.s32 %v569, %v574
      %v576 = vsel %vm483, %v558, 0
      %v577 = vadd.s32 %v570, %v576
      %v578 = vsel %vm483, %v559, 0
      %v579 = vadd.s32 %v571, %v578
      %v580 = vsel %vm483, %v560, 0
      %v581 = vadd.s32 %v573, %v580
      %v582 = vsel %vm483, %v561, 0
      %v583 = vadd.s32 %v575, %v582
      %v584 = vsel %vm483, %v562, 0
      %v585 = vadd.s32 %v577, %v584
      %v586 = vsel %vm483, %v563, 0
      %v587 = vadd.s32 %v579, %v586
      %v588 = vsel %vm483, %v564, 0
      %v589 = vadd.s32 %v581, %v588
      %v590 = vsel %vm483, %v565, 0
      %v591 = vadd.s32 %v583, %v590
      %v592 = vsel %vm483, %v566, 0
      %v593 = vadd.s32 %v585, %v592
      %v594 = vsel %vm483, %v567, 0
      %v595 = vadd.s32 %v587, %v594
      %v596 = vadd.s32 %v589, %v591
      %v597 = vadd.s32 %v593, %v595
      %v598 = vadd.s32 %v596, %v597
      %v599 = vand.u32 %v598, 65535
      %v600 = vshrl.u32 %v598, 16
      %v601 = vcvt.s32.f32 %v599
      %v602 = vcvt.s32.f32 %v600
      %603 = vadd.xlane.f32.xlu0 %v601
      %v604 = vpop.xlane.xlu0 %603
      %605 = vadd.xlane.f32.xlu0 %v602
      %v606 = vpop.xlane.xlu0 %605
      %v607 = vcvt.f32.s32 %v604
      %v608 = vcvt.f32.s32 %v606
      %v609 = vshll.u32 %v608, 16
      %v610 = vadd.s32 %v609, %v607
      %v611 = vrot.slane %v610, 4
      %v612 = vadd.s32 %v610, %v611
      %v613 = vrot.slane %v612, 2
      %v614 = vadd.s32 %v612, %v613
      %v615 = vrot.slane %v614, 1
      %v616 = vadd.s32 %v614, %v615
      %s617 = vtos %v616
      %vm618 = vcmp.ge.s32.totalorder %v504, 1073741824
      %vm619 = vcmp.ge.s32.totalorder %v505, 1073741824
      %vm620 = vcmp.ge.s32.totalorder %v506, 1073741824
      %vm621 = vcmp.ge.s32.totalorder %v507, 1073741824
      %vm622 = vcmp.ge.s32.totalorder %v508, 1073741824
      %vm623 = vcmp.ge.s32.totalorder %v509, 1073741824
      %vm624 = vcmp.ge.s32.totalorder %v510, 1073741824
      %vm625 = vcmp.ge.s32.totalorder %v511, 1073741824
      %vm626 = vcmp.ge.s32.totalorder %v512, 1073741824
      %vm627 = vcmp.ge.s32.totalorder %v513, 1073741824
      %vm628 = vcmp.ge.s32.totalorder %v514, 1073741824
      %vm629 = vcmp.ge.s32.totalorder %v515, 1073741824
      %vm630 = vcmp.ge.s32.totalorder %v516, 1073741824
      %vm631 = vcmp.ge.s32.totalorder %v517, 1073741824
      %vm632 = vcmp.ge.s32.totalorder %v518, 1073741824
      %vm633 = vcmp.ge.s32.totalorder %v519, 1073741824
      %v634 = vsel %vm618, 1, 0
      %v635 = vsel %vm619, 1, 0
      %v636 = vsel %vm620, 1, 0
      %v637 = vsel %vm621, 1, 0
      %v638 = vsel %vm622, 1, 0
      %v639 = vsel %vm623, 1, 0
      %v640 = vsel %vm624, 1, 0
      %v641 = vsel %vm625, 1, 0
      %v642 = vsel %vm626, 1, 0
      %v643 = vsel %vm627, 1, 0
      %v644 = vsel %vm628, 1, 0
      %v645 = vsel %vm629, 1, 0
      %v646 = vsel %vm630, 1, 0
      %v647 = vsel %vm631, 1, 0
      %v648 = vsel %vm632, 1, 0
      %v649 = vsel %vm633, 1, 0
      %v650 = vsel %vm483, %v634, 0
      %v651 = vsel %vm483, %v635, 0
      %v652 = vsel %vm483, %v636, 0
      %v653 = vsel %vm483, %v637, 0
      %v654 = vsel %vm483, %v638, 0
      %v655 = vadd.s32 %v650, %v654
      %v656 = vsel %vm483, %v639, 0
      %v657 = vadd.s32 %v651, %v656
      %v658 = vsel %vm483, %v640, 0
      %v659 = vadd.s32 %v652, %v658
      %v660 = vsel %vm483, %v641, 0
      %v661 = vadd.s32 %v653, %v660
      %v662 = vsel %vm483, %v642, 0
      %v663 = vadd.s32 %v655, %v662
      %v664 = vsel %vm483, %v643, 0
      %v665 = vadd.s32 %v657, %v664
      %v666 = vsel %vm483, %v644, 0
      %v667 = vadd.s32 %v659, %v666
      %v668 = vsel %vm483, %v645, 0
      %v669 = vadd.s32 %v661, %v668
      %v670 = vsel %vm483, %v646, 0
      %v671 = vadd.s32 %v663, %v670
      %v672 = vsel %vm483, %v647, 0
      %v673 = vadd.s32 %v665, %v672
      %v674 = vsel %vm483, %v648, 0
      %v675 = vadd.s32 %v667, %v674
      %v676 = vsel %vm483, %v649, 0
      %v677 = vadd.s32 %v669, %v676
      %v678 = vadd.s32 %v671, %v673
      %v679 = vadd.s32 %v675, %v677
      %v680 = vadd.s32 %v678, %v679
      %v681 = vand.u32 %v680, 65535
      %v682 = vshrl.u32 %v680, 16
      %v683 = vcvt.s32.f32 %v681
      %v684 = vcvt.s32.f32 %v682
      %685 = vadd.xlane.f32.xlu0 %v683
      %v686 = vpop.xlane.xlu0 %685
      %687 = vadd.xlane.f32.xlu0 %v684
      %v688 = vpop.xlane.xlu0 %687
      %v689 = vcvt.f32.s32 %v686
      %v690 = vcvt.f32.s32 %v688
      %v691 = vshll.u32 %v690, 16
      %v692 = vadd.s32 %v691, %v689
      %v693 = vrot.slane %v692, 4
      %v694 = vadd.s32 %v692, %v693
      %v695 = vrot.slane %v694, 2
      %v696 = vadd.s32 %v694, %v695
      %v697 = vrot.slane %v696, 1
      %v698 = vadd.s32 %v696, %v697
      %s699 = vtos %v698
      %vm700 = vcmp.ge.s32.totalorder %v504, 1610612736
      %vm701 = vcmp.ge.s32.totalorder %v505, 1610612736
      %vm702 = vcmp.ge.s32.totalorder %v506, 1610612736
      %vm703 = vcmp.ge.s32.totalorder %v507, 1610612736
      %vm704 = vcmp.ge.s32.totalorder %v508, 1610612736
      %vm705 = vcmp.ge.s32.totalorder %v509, 1610612736
      %vm706 = vcmp.ge.s32.totalorder %v510, 1610612736
      %vm707 = vcmp.ge.s32.totalorder %v511, 1610612736
      %vm708 = vcmp.ge.s32.totalorder %v512, 1610612736
      %vm709 = vcmp.ge.s32.totalorder %v513, 1610612736
      %vm710 = vcmp.ge.s32.totalorder %v514, 1610612736
      %vm711 = vcmp.ge.s32.totalorder %v515, 1610612736
      %vm712 = vcmp.ge.s32.totalorder %v516, 1610612736
      %vm713 = vcmp.ge.s32.totalorder %v517, 1610612736
      %vm714 = vcmp.ge.s32.totalorder %v518, 1610612736
      %vm715 = vcmp.ge.s32.totalorder %v519, 1610612736
      %v716 = vsel %vm700, 1, 0
      %v717 = vsel %vm701, 1, 0
      %v718 = vsel %vm702, 1, 0
      %v719 = vsel %vm703, 1, 0
      %v720 = vsel %vm704, 1, 0
      %v721 = vsel %vm705, 1, 0
      %v722 = vsel %vm706, 1, 0
      %v723 = vsel %vm707, 1, 0
      %v724 = vsel %vm708, 1, 0
      %v725 = vsel %vm709, 1, 0
      %v726 = vsel %vm710, 1, 0
      %v727 = vsel %vm711, 1, 0
      %v728 = vsel %vm712, 1, 0
      %v729 = vsel %vm713, 1, 0
      %v730 = vsel %vm714, 1, 0
      %v731 = vsel %vm715, 1, 0
      %v732 = vsel %vm483, %v716, 0
      %v733 = vsel %vm483, %v717, 0
      %v734 = vsel %vm483, %v718, 0
      %v735 = vsel %vm483, %v719, 0
      %v736 = vsel %vm483, %v720, 0
      %v737 = vadd.s32 %v732, %v736
      %v738 = vsel %vm483, %v721, 0
      %v739 = vadd.s32 %v733, %v738
      %v740 = vsel %vm483, %v722, 0
      %v741 = vadd.s32 %v734, %v740
      %v742 = vsel %vm483, %v723, 0
      %v743 = vadd.s32 %v735, %v742
      %v744 = vsel %vm483, %v724, 0
      %v745 = vadd.s32 %v737, %v744
      %v746 = vsel %vm483, %v725, 0
      %v747 = vadd.s32 %v739, %v746
      %v748 = vsel %vm483, %v726, 0
      %v749 = vadd.s32 %v741, %v748
      %v750 = vsel %vm483, %v727, 0
      %v751 = vadd.s32 %v743, %v750
      %v752 = vsel %vm483, %v728, 0
      %v753 = vadd.s32 %v745, %v752
      %v754 = vsel %vm483, %v729, 0
      %v755 = vadd.s32 %v747, %v754
      %v756 = vsel %vm483, %v730, 0
      %v757 = vadd.s32 %v749, %v756
      %v758 = vsel %vm483, %v731, 0
      %v759 = vadd.s32 %v751, %v758
      %v760 = vadd.s32 %v753, %v755
      %v761 = vadd.s32 %v757, %v759
      %v762 = vadd.s32 %v760, %v761
      %v763 = vand.u32 %v762, 65535
      %v764 = vshrl.u32 %v762, 16
      %v765 = vcvt.s32.f32 %v763
      %v766 = vcvt.s32.f32 %v764
      %767 = vadd.xlane.f32.xlu0 %v765
      %v768 = vpop.xlane.xlu0 %767
      %769 = vadd.xlane.f32.xlu0 %v766
      %v770 = vpop.xlane.xlu0 %769
      %v771 = vcvt.f32.s32 %v768
      %v772 = vcvt.f32.s32 %v770
      %v773 = vshll.u32 %v772, 16
      %v774 = vadd.s32 %v773, %v771
      %v775 = vrot.slane %v774, 4
      %v776 = vadd.s32 %v774, %v775
      %v777 = vrot.slane %v776, 2
      %v778 = vadd.s32 %v776, %v777
      %v779 = vrot.slane %v778, 1
      %v780 = vadd.s32 %v778, %v779
      %s781 = vtos %v780
      %p782 = scmp.ge.s32.totalorder %s617, 5
      %s783 = scalar_select %p782, 1, 0
      %p784 = scmp.ge.s32.totalorder %s699, 5
      %s785 = scalar_select %p784, 1, 0
      %s786 = sadd.s32 %s783, %s785
      %p787 = scmp.ge.s32.totalorder %s781, 5
      %s788 = scalar_select %p787, 1, 0
      %s789 = sadd.s32 %s786, %s788
      %s790 = sshll.u32 %s789, 29
      %s791 = sor.u32 %s790, 134217728
      %s792 = sor.u32 %s790, 268435456
      %s793 = sor.u32 %s790, 402653184
      %v794 = vstv %s791
      %vm795 = vcmp.ge.s32.totalorder %v504, %v794
      %vm796 = vcmp.ge.s32.totalorder %v505, %v794
      %vm797 = vcmp.ge.s32.totalorder %v506, %v794
      %vm798 = vcmp.ge.s32.totalorder %v507, %v794
      %vm799 = vcmp.ge.s32.totalorder %v508, %v794
      %vm800 = vcmp.ge.s32.totalorder %v509, %v794
      %vm801 = vcmp.ge.s32.totalorder %v510, %v794
      %vm802 = vcmp.ge.s32.totalorder %v511, %v794
      %vm803 = vcmp.ge.s32.totalorder %v512, %v794
      %vm804 = vcmp.ge.s32.totalorder %v513, %v794
      %vm805 = vcmp.ge.s32.totalorder %v514, %v794
      %vm806 = vcmp.ge.s32.totalorder %v515, %v794
      %vm807 = vcmp.ge.s32.totalorder %v516, %v794
      %vm808 = vcmp.ge.s32.totalorder %v517, %v794
      %vm809 = vcmp.ge.s32.totalorder %v518, %v794
      %vm810 = vcmp.ge.s32.totalorder %v519, %v794
      %v811 = vsel %vm795, 1, 0
      %v812 = vsel %vm796, 1, 0
      %v813 = vsel %vm797, 1, 0
      %v814 = vsel %vm798, 1, 0
      %v815 = vsel %vm799, 1, 0
      %v816 = vsel %vm800, 1, 0
      %v817 = vsel %vm801, 1, 0
      %v818 = vsel %vm802, 1, 0
      %v819 = vsel %vm803, 1, 0
      %v820 = vsel %vm804, 1, 0
      %v821 = vsel %vm805, 1, 0
      %v822 = vsel %vm806, 1, 0
      %v823 = vsel %vm807, 1, 0
      %v824 = vsel %vm808, 1, 0
      %v825 = vsel %vm809, 1, 0
      %v826 = vsel %vm810, 1, 0
      %v827 = vsel %vm483, %v811, 0
      %v828 = vsel %vm483, %v812, 0
      %v829 = vsel %vm483, %v813, 0
      %v830 = vsel %vm483, %v814, 0
      %v831 = vsel %vm483, %v815, 0
      %v832 = vadd.s32 %v827, %v831
      %v833 = vsel %vm483, %v816, 0
      %v834 = vadd.s32 %v828, %v833
      %v835 = vsel %vm483, %v817, 0
      %v836 = vadd.s32 %v829, %v835
      %v837 = vsel %vm483, %v818, 0
      %v838 = vadd.s32 %v830, %v837
      %v839 = vsel %vm483, %v819, 0
      %v840 = vadd.s32 %v832, %v839
      %v841 = vsel %vm483, %v820, 0
      %v842 = vadd.s32 %v834, %v841
      %v843 = vsel %vm483, %v821, 0
      %v844 = vadd.s32 %v836, %v843
      %v845 = vsel %vm483, %v822, 0
      %v846 = vadd.s32 %v838, %v845
      %v847 = vsel %vm483, %v823, 0
      %v848 = vadd.s32 %v840, %v847
      %v849 = vsel %vm483, %v824, 0
      %v850 = vadd.s32 %v842, %v849
      %v851 = vsel %vm483, %v825, 0
      %v852 = vadd.s32 %v844, %v851
      %v853 = vsel %vm483, %v826, 0
      %v854 = vadd.s32 %v846, %v853
      %v855 = vadd.s32 %v848, %v850
      %v856 = vadd.s32 %v852, %v854
      %v857 = vadd.s32 %v855, %v856
      %v858 = vand.u32 %v857, 65535
      %v859 = vshrl.u32 %v857, 16
      %v860 = vcvt.s32.f32 %v858
      %v861 = vcvt.s32.f32 %v859
      %862 = vadd.xlane.f32.xlu0 %v860
      %v863 = vpop.xlane.xlu0 %862
      %864 = vadd.xlane.f32.xlu0 %v861
      %v865 = vpop.xlane.xlu0 %864
      %v866 = vcvt.f32.s32 %v863
      %v867 = vcvt.f32.s32 %v865
      %v868 = vshll.u32 %v867, 16
      %v869 = vadd.s32 %v868, %v866
      %v870 = vrot.slane %v869, 4
      %v871 = vadd.s32 %v869, %v870
      %v872 = vrot.slane %v871, 2
      %v873 = vadd.s32 %v871, %v872
      %v874 = vrot.slane %v873, 1
      %v875 = vadd.s32 %v873, %v874
      %s876 = vtos %v875
      %v877 = vstv %s792
      %vm878 = vcmp.ge.s32.totalorder %v504, %v877
      %vm879 = vcmp.ge.s32.totalorder %v505, %v877
      %vm880 = vcmp.ge.s32.totalorder %v506, %v877
      %vm881 = vcmp.ge.s32.totalorder %v507, %v877
      %vm882 = vcmp.ge.s32.totalorder %v508, %v877
      %vm883 = vcmp.ge.s32.totalorder %v509, %v877
      %vm884 = vcmp.ge.s32.totalorder %v510, %v877
      %vm885 = vcmp.ge.s32.totalorder %v511, %v877
      %vm886 = vcmp.ge.s32.totalorder %v512, %v877
      %vm887 = vcmp.ge.s32.totalorder %v513, %v877
      %vm888 = vcmp.ge.s32.totalorder %v514, %v877
      %vm889 = vcmp.ge.s32.totalorder %v515, %v877
      %vm890 = vcmp.ge.s32.totalorder %v516, %v877
      %vm891 = vcmp.ge.s32.totalorder %v517, %v877
      %vm892 = vcmp.ge.s32.totalorder %v518, %v877
      %vm893 = vcmp.ge.s32.totalorder %v519, %v877
      %v894 = vsel %vm878, 1, 0
      %v895 = vsel %vm879, 1, 0
      %v896 = vsel %vm880, 1, 0
      %v897 = vsel %vm881, 1, 0
      %v898 = vsel %vm882, 1, 0
      %v899 = vsel %vm883, 1, 0
      %v900 = vsel %vm884, 1, 0
      %v901 = vsel %vm885, 1, 0
      %v902 = vsel %vm886, 1, 0
      %v903 = vsel %vm887, 1, 0
      %v904 = vsel %vm888, 1, 0
      %v905 = vsel %vm889, 1, 0
      %v906 = vsel %vm890, 1, 0
      %v907 = vsel %vm891, 1, 0
      %v908 = vsel %vm892, 1, 0
      %v909 = vsel %vm893, 1, 0
      %v910 = vsel %vm483, %v894, 0
      %v911 = vsel %vm483, %v895, 0
      %v912 = vsel %vm483, %v896, 0
      %v913 = vsel %vm483, %v897, 0
      %v914 = vsel %vm483, %v898, 0
      %v915 = vadd.s32 %v910, %v914
      %v916 = vsel %vm483, %v899, 0
      %v917 = vadd.s32 %v911, %v916
      %v918 = vsel %vm483, %v900, 0
      %v919 = vadd.s32 %v912, %v918
      %v920 = vsel %vm483, %v901, 0
      %v921 = vadd.s32 %v913, %v920
      %v922 = vsel %vm483, %v902, 0
      %v923 = vadd.s32 %v915, %v922
      %v924 = vsel %vm483, %v903, 0
      %v925 = vadd.s32 %v917, %v924
      %v926 = vsel %vm483, %v904, 0
      %v927 = vadd.s32 %v919, %v926
      %v928 = vsel %vm483, %v905, 0
      %v929 = vadd.s32 %v921, %v928
      %v930 = vsel %vm483, %v906, 0
      %v931 = vadd.s32 %v923, %v930
      %v932 = vsel %vm483, %v907, 0
      %v933 = vadd.s32 %v925, %v932
      %v934 = vsel %vm483, %v908, 0
      %v935 = vadd.s32 %v927, %v934
      %v936 = vsel %vm483, %v909, 0
      %v937 = vadd.s32 %v929, %v936
      %v938 = vadd.s32 %v931, %v933
      %v939 = vadd.s32 %v935, %v937
      %v940 = vadd.s32 %v938, %v939
      %v941 = vand.u32 %v940, 65535
      %v942 = vshrl.u32 %v940, 16
      %v943 = vcvt.s32.f32 %v941
      %v944 = vcvt.s32.f32 %v942
      %945 = vadd.xlane.f32.xlu0 %v943
      %v946 = vpop.xlane.xlu0 %945
      %947 = vadd.xlane.f32.xlu0 %v944
      %v948 = vpop.xlane.xlu0 %947
      %v949 = vcvt.f32.s32 %v946
      %v950 = vcvt.f32.s32 %v948
      %v951 = vshll.u32 %v950, 16
      %v952 = vadd.s32 %v951, %v949
      %v953 = vrot.slane %v952, 4
      %v954 = vadd.s32 %v952, %v953
      %v955 = vrot.slane %v954, 2
      %v956 = vadd.s32 %v954, %v955
      %v957 = vrot.slane %v956, 1
      %v958 = vadd.s32 %v956, %v957
      %s959 = vtos %v958
      %v960 = vstv %s793
      %vm961 = vcmp.ge.s32.totalorder %v504, %v960
      %vm962 = vcmp.ge.s32.totalorder %v505, %v960
      %vm963 = vcmp.ge.s32.totalorder %v506, %v960
      %vm964 = vcmp.ge.s32.totalorder %v507, %v960
      %vm965 = vcmp.ge.s32.totalorder %v508, %v960
      %vm966 = vcmp.ge.s32.totalorder %v509, %v960
      %vm967 = vcmp.ge.s32.totalorder %v510, %v960
      %vm968 = vcmp.ge.s32.totalorder %v511, %v960
      %vm969 = vcmp.ge.s32.totalorder %v512, %v960
      %vm970 = vcmp.ge.s32.totalorder %v513, %v960
      %vm971 = vcmp.ge.s32.totalorder %v514, %v960
      %vm972 = vcmp.ge.s32.totalorder %v515, %v960
      %vm973 = vcmp.ge.s32.totalorder %v516, %v960
      %vm974 = vcmp.ge.s32.totalorder %v517, %v960
      %vm975 = vcmp.ge.s32.totalorder %v518, %v960
      %vm976 = vcmp.ge.s32.totalorder %v519, %v960
      %v977 = vsel %vm961, 1, 0
      %v978 = vsel %vm962, 1, 0
      %v979 = vsel %vm963, 1, 0
      %v980 = vsel %vm964, 1, 0
      %v981 = vsel %vm965, 1, 0
      %v982 = vsel %vm966, 1, 0
      %v983 = vsel %vm967, 1, 0
      %v984 = vsel %vm968, 1, 0
      %v985 = vsel %vm969, 1, 0
      %v986 = vsel %vm970, 1, 0
      %v987 = vsel %vm971, 1, 0
      %v988 = vsel %vm972, 1, 0
      %v989 = vsel %vm973, 1, 0
      %v990 = vsel %vm974, 1, 0
      %v991 = vsel %vm975, 1, 0
      %v992 = vsel %vm976, 1, 0
      %v993 = vsel %vm483, %v977, 0
      %v994 = vsel %vm483, %v978, 0
      %v995 = vsel %vm483, %v979, 0
      %v996 = vsel %vm483, %v980, 0
      %v997 = vsel %vm483, %v981, 0
      %v998 = vadd.s32 %v993, %v997
      %v999 = vsel %vm483, %v982, 0
      %v1000 = vadd.s32 %v994, %v999
      %v1001 = vsel %vm483, %v983, 0
      %v1002 = vadd.s32 %v995, %v1001
      %v1003 = vsel %vm483, %v984, 0
      %v1004 = vadd.s32 %v996, %v1003
      %v1005 = vsel %vm483, %v985, 0
      %v1006 = vadd.s32 %v998, %v1005
      %v1007 = vsel %vm483, %v986, 0
      %v1008 = vadd.s32 %v1000, %v1007
      %v1009 = vsel %vm483, %v987, 0
      %v1010 = vadd.s32 %v1002, %v1009
      %v1011 = vsel %vm483, %v988, 0
      %v1012 = vadd.s32 %v1004, %v1011
      %v1013 = vsel %vm483, %v989, 0
      %v1014 = vadd.s32 %v1006, %v1013
      %v1015 = vsel %vm483, %v990, 0
      %v1016 = vadd.s32 %v1008, %v1015
      %v1017 = vsel %vm483, %v991, 0
      %v1018 = vadd.s32 %v1010, %v1017
      %v1019 = vsel %vm483, %v992, 0
      %v1020 = vadd.s32 %v1012, %v1019
      %v1021 = vadd.s32 %v1014, %v1016
      %v1022 = vadd.s32 %v1018, %v1020
      %v1023 = vadd.s32 %v1021, %v1022
      %v1024 = vand.u32 %v1023, 65535
      %v1025 = vshrl.u32 %v1023, 16
      %v1026 = vcvt.s32.f32 %v1024
      %v1027 = vcvt.s32.f32 %v1025
      %1028 = vadd.xlane.f32.xlu0 %v1026
      %v1029 = vpop.xlane.xlu0 %1028
      %1030 = vadd.xlane.f32.xlu0 %v1027
      %v1031 = vpop.xlane.xlu0 %1030
      %v1032 = vcvt.f32.s32 %v1029
      %v1033 = vcvt.f32.s32 %v1031
      %v1034 = vshll.u32 %v1033, 16
      %v1035 = vadd.s32 %v1034, %v1032
      %v1036 = vrot.slane %v1035, 4
      %v1037 = vadd.s32 %v1035, %v1036
      %v1038 = vrot.slane %v1037, 2
      %v1039 = vadd.s32 %v1037, %v1038
      %v1040 = vrot.slane %v1039, 1
      %v1041 = vadd.s32 %v1039, %v1040
      %s1042 = vtos %v1041
      %p1043 = scmp.ge.s32.totalorder %s876, 5
      %s1044 = scalar_select %p1043, 1, 0
      %p1045 = scmp.ge.s32.totalorder %s959, 5
      %s1046 = scalar_select %p1045, 1, 0
      %s1047 = sadd.s32 %s1044, %s1046
      %p1048 = scmp.ge.s32.totalorder %s1042, 5
      %s1049 = scalar_select %p1048, 1, 0
      %s1050 = sadd.s32 %s1047, %s1049
      %s1051 = sshll.u32 %s1050, 27
      %s1052 = sor.u32 %s790, %s1051
      %s1053 = sor.u32 %s1052, 33554432
      %s1054 = sor.u32 %s1052, 67108864
      %s1055 = sor.u32 %s1052, 100663296
      %v1056 = vstv %s1053
      %vm1057 = vcmp.ge.s32.totalorder %v504, %v1056
      %vm1058 = vcmp.ge.s32.totalorder %v505, %v1056
      %vm1059 = vcmp.ge.s32.totalorder %v506, %v1056
      %vm1060 = vcmp.ge.s32.totalorder %v507, %v1056
      %vm1061 = vcmp.ge.s32.totalorder %v508, %v1056
      %vm1062 = vcmp.ge.s32.totalorder %v509, %v1056
      %vm1063 = vcmp.ge.s32.totalorder %v510, %v1056
      %vm1064 = vcmp.ge.s32.totalorder %v511, %v1056
      %vm1065 = vcmp.ge.s32.totalorder %v512, %v1056
      %vm1066 = vcmp.ge.s32.totalorder %v513, %v1056
      %vm1067 = vcmp.ge.s32.totalorder %v514, %v1056
      %vm1068 = vcmp.ge.s32.totalorder %v515, %v1056
      %vm1069 = vcmp.ge.s32.totalorder %v516, %v1056
      %vm1070 = vcmp.ge.s32.totalorder %v517, %v1056
      %vm1071 = vcmp.ge.s32.totalorder %v518, %v1056
      %vm1072 = vcmp.ge.s32.totalorder %v519, %v1056
      %v1073 = vsel %vm1057, 1, 0
      %v1074 = vsel %vm1058, 1, 0
      %v1075 = vsel %vm1059, 1, 0
      %v1076 = vsel %vm1060, 1, 0
      %v1077 = vsel %vm1061, 1, 0
      %v1078 = vsel %vm1062, 1, 0
      %v1079 = vsel %vm1063, 1, 0
      %v1080 = vsel %vm1064, 1, 0
      %v1081 = vsel %vm1065, 1, 0
      %v1082 = vsel %vm1066, 1, 0
      %v1083 = vsel %vm1067, 1, 0
      %v1084 = vsel %vm1068, 1, 0
      %v1085 = vsel %vm1069, 1, 0
      %v1086 = vsel %vm1070, 1, 0
      %v1087 = vsel %vm1071, 1, 0
      %v1088 = vsel %vm1072, 1, 0
      %v1089 = vsel %vm483, %v1073, 0
      %v1090 = vsel %vm483, %v1074, 0
      %v1091 = vsel %vm483, %v1075, 0
      %v1092 = vsel %vm483, %v1076, 0
      %v1093 = vsel %vm483, %v1077, 0
      %v1094 = vadd.s32 %v1089, %v1093
      %v1095 = vsel %vm483, %v1078, 0
      %v1096 = vadd.s32 %v1090, %v1095
      %v1097 = vsel %vm483, %v1079, 0
      %v1098 = vadd.s32 %v1091, %v1097
      %v1099 = vsel %vm483, %v1080, 0
      %v1100 = vadd.s32 %v1092, %v1099
      %v1101 = vsel %vm483, %v1081, 0
      %v1102 = vadd.s32 %v1094, %v1101
      %v1103 = vsel %vm483, %v1082, 0
      %v1104 = vadd.s32 %v1096, %v1103
      %v1105 = vsel %vm483, %v1083, 0
      %v1106 = vadd.s32 %v1098, %v1105
      %v1107 = vsel %vm483, %v1084, 0
      %v1108 = vadd.s32 %v1100, %v1107
      %v1109 = vsel %vm483, %v1085, 0
      %v1110 = vadd.s32 %v1102, %v1109
      %v1111 = vsel %vm483, %v1086, 0
      %v1112 = vadd.s32 %v1104, %v1111
      %v1113 = vsel %vm483, %v1087, 0
      %v1114 = vadd.s32 %v1106, %v1113
      %v1115 = vsel %vm483, %v1088, 0
      %v1116 = vadd.s32 %v1108, %v1115
      %v1117 = vadd.s32 %v1110, %v1112
      %v1118 = vadd.s32 %v1114, %v1116
      %v1119 = vadd.s32 %v1117, %v1118
      %v1120 = vand.u32 %v1119, 65535
      %v1121 = vshrl.u32 %v1119, 16
      %v1122 = vcvt.s32.f32 %v1120
      %v1123 = vcvt.s32.f32 %v1121
      %1124 = vadd.xlane.f32.xlu0 %v1122
      %v1125 = vpop.xlane.xlu0 %1124
      %1126 = vadd.xlane.f32.xlu0 %v1123
      %v1127 = vpop.xlane.xlu0 %1126
      %v1128 = vcvt.f32.s32 %v1125
      %v1129 = vcvt.f32.s32 %v1127
      %v1130 = vshll.u32 %v1129, 16
      %v1131 = vadd.s32 %v1130, %v1128
      %v1132 = vrot.slane %v1131, 4
      %v1133 = vadd.s32 %v1131, %v1132
      %v1134 = vrot.slane %v1133, 2
      %v1135 = vadd.s32 %v1133, %v1134
      %v1136 = vrot.slane %v1135, 1
      %v1137 = vadd.s32 %v1135, %v1136
      %s1138 = vtos %v1137
      %v1139 = vstv %s1054
      %vm1140 = vcmp.ge.s32.totalorder %v504, %v1139
      %vm1141 = vcmp.ge.s32.totalorder %v505, %v1139
      %vm1142 = vcmp.ge.s32.totalorder %v506, %v1139
      %vm1143 = vcmp.ge.s32.totalorder %v507, %v1139
      %vm1144 = vcmp.ge.s32.totalorder %v508, %v1139
      %vm1145 = vcmp.ge.s32.totalorder %v509, %v1139
      %vm1146 = vcmp.ge.s32.totalorder %v510, %v1139
      %vm1147 = vcmp.ge.s32.totalorder %v511, %v1139
      %vm1148 = vcmp.ge.s32.totalorder %v512, %v1139
      %vm1149 = vcmp.ge.s32.totalorder %v513, %v1139
      %vm1150 = vcmp.ge.s32.totalorder %v514, %v1139
      %vm1151 = vcmp.ge.s32.totalorder %v515, %v1139
      %vm1152 = vcmp.ge.s32.totalorder %v516, %v1139
      %vm1153 = vcmp.ge.s32.totalorder %v517, %v1139
      %vm1154 = vcmp.ge.s32.totalorder %v518, %v1139
      %vm1155 = vcmp.ge.s32.totalorder %v519, %v1139
      %v1156 = vsel %vm1140, 1, 0
      %v1157 = vsel %vm1141, 1, 0
      %v1158 = vsel %vm1142, 1, 0
      %v1159 = vsel %vm1143, 1, 0
      %v1160 = vsel %vm1144, 1, 0
      %v1161 = vsel %vm1145, 1, 0
      %v1162 = vsel %vm1146, 1, 0
      %v1163 = vsel %vm1147, 1, 0
      %v1164 = vsel %vm1148, 1, 0
      %v1165 = vsel %vm1149, 1, 0
      %v1166 = vsel %vm1150, 1, 0
      %v1167 = vsel %vm1151, 1, 0
      %v1168 = vsel %vm1152, 1, 0
      %v1169 = vsel %vm1153, 1, 0
      %v1170 = vsel %vm1154, 1, 0
      %v1171 = vsel %vm1155, 1, 0
      %v1172 = vsel %vm483, %v1156, 0
      %v1173 = vsel %vm483, %v1157, 0
      %v1174 = vsel %vm483, %v1158, 0
      %v1175 = vsel %vm483, %v1159, 0
      %v1176 = vsel %vm483, %v1160, 0
      %v1177 = vadd.s32 %v1172, %v1176
      %v1178 = vsel %vm483, %v1161, 0
      %v1179 = vadd.s32 %v1173, %v1178
      %v1180 = vsel %vm483, %v1162, 0
      %v1181 = vadd.s32 %v1174, %v1180
      %v1182 = vsel %vm483, %v1163, 0
      %v1183 = vadd.s32 %v1175, %v1182
      %v1184 = vsel %vm483, %v1164, 0
      %v1185 = vadd.s32 %v1177, %v1184
      %v1186 = vsel %vm483, %v1165, 0
      %v1187 = vadd.s32 %v1179, %v1186
      %v1188 = vsel %vm483, %v1166, 0
      %v1189 = vadd.s32 %v1181, %v1188
      %v1190 = vsel %vm483, %v1167, 0
      %v1191 = vadd.s32 %v1183, %v1190
      %v1192 = vsel %vm483, %v1168, 0
      %v1193 = vadd.s32 %v1185, %v1192
      %v1194 = vsel %vm483, %v1169, 0
      %v1195 = vadd.s32 %v1187, %v1194
      %v1196 = vsel %vm483, %v1170, 0
      %v1197 = vadd.s32 %v1189, %v1196
      %v1198 = vsel %vm483, %v1171, 0
      %v1199 = vadd.s32 %v1191, %v1198
      %v1200 = vadd.s32 %v1193, %v1195
      %v1201 = vadd.s32 %v1197, %v1199
      %v1202 = vadd.s32 %v1200, %v1201
      %v1203 = vand.u32 %v1202, 65535
      %v1204 = vshrl.u32 %v1202, 16
      %v1205 = vcvt.s32.f32 %v1203
      %v1206 = vcvt.s32.f32 %v1204
      %1207 = vadd.xlane.f32.xlu0 %v1205
      %v1208 = vpop.xlane.xlu0 %1207
      %1209 = vadd.xlane.f32.xlu0 %v1206
      %v1210 = vpop.xlane.xlu0 %1209
      %v1211 = vcvt.f32.s32 %v1208
      %v1212 = vcvt.f32.s32 %v1210
      %v1213 = vshll.u32 %v1212, 16
      %v1214 = vadd.s32 %v1213, %v1211
      %v1215 = vrot.slane %v1214, 4
      %v1216 = vadd.s32 %v1214, %v1215
      %v1217 = vrot.slane %v1216, 2
      %v1218 = vadd.s32 %v1216, %v1217
      %v1219 = vrot.slane %v1218, 1
      %v1220 = vadd.s32 %v1218, %v1219
      %s1221 = vtos %v1220
      %v1222 = vstv %s1055
      %vm1223 = vcmp.ge.s32.totalorder %v504, %v1222
      %vm1224 = vcmp.ge.s32.totalorder %v505, %v1222
      %vm1225 = vcmp.ge.s32.totalorder %v506, %v1222
      %vm1226 = vcmp.ge.s32.totalorder %v507, %v1222
      %vm1227 = vcmp.ge.s32.totalorder %v508, %v1222
      %vm1228 = vcmp.ge.s32.totalorder %v509, %v1222
      %vm1229 = vcmp.ge.s32.totalorder %v510, %v1222
      %vm1230 = vcmp.ge.s32.totalorder %v511, %v1222
      %vm1231 = vcmp.ge.s32.totalorder %v512, %v1222
      %vm1232 = vcmp.ge.s32.totalorder %v513, %v1222
      %vm1233 = vcmp.ge.s32.totalorder %v514, %v1222
      %vm1234 = vcmp.ge.s32.totalorder %v515, %v1222
      %vm1235 = vcmp.ge.s32.totalorder %v516, %v1222
      %vm1236 = vcmp.ge.s32.totalorder %v517, %v1222
      %vm1237 = vcmp.ge.s32.totalorder %v518, %v1222
      %vm1238 = vcmp.ge.s32.totalorder %v519, %v1222
      %v1239 = vsel %vm1223, 1, 0
      %v1240 = vsel %vm1224, 1, 0
      %v1241 = vsel %vm1225, 1, 0
      %v1242 = vsel %vm1226, 1, 0
      %v1243 = vsel %vm1227, 1, 0
      %v1244 = vsel %vm1228, 1, 0
      %v1245 = vsel %vm1229, 1, 0
      %v1246 = vsel %vm1230, 1, 0
      %v1247 = vsel %vm1231, 1, 0
      %v1248 = vsel %vm1232, 1, 0
      %v1249 = vsel %vm1233, 1, 0
      %v1250 = vsel %vm1234, 1, 0
      %v1251 = vsel %vm1235, 1, 0
      %v1252 = vsel %vm1236, 1, 0
      %v1253 = vsel %vm1237, 1, 0
      %v1254 = vsel %vm1238, 1, 0
      %v1255 = vsel %vm483, %v1239, 0
      %v1256 = vsel %vm483, %v1240, 0
      %v1257 = vsel %vm483, %v1241, 0
      %v1258 = vsel %vm483, %v1242, 0
      %v1259 = vsel %vm483, %v1243, 0
      %v1260 = vadd.s32 %v1255, %v1259
      %v1261 = vsel %vm483, %v1244, 0
      %v1262 = vadd.s32 %v1256, %v1261
      %v1263 = vsel %vm483, %v1245, 0
      %v1264 = vadd.s32 %v1257, %v1263
      %v1265 = vsel %vm483, %v1246, 0
      %v1266 = vadd.s32 %v1258, %v1265
      %v1267 = vsel %vm483, %v1247, 0
      %v1268 = vadd.s32 %v1260, %v1267
      %v1269 = vsel %vm483, %v1248, 0
      %v1270 = vadd.s32 %v1262, %v1269
      %v1271 = vsel %vm483, %v1249, 0
      %v1272 = vadd.s32 %v1264, %v1271
      %v1273 = vsel %vm483, %v1250, 0
      %v1274 = vadd.s32 %v1266, %v1273
      %v1275 = vsel %vm483, %v1251, 0
      %v1276 = vadd.s32 %v1268, %v1275
      %v1277 = vsel %vm483, %v1252, 0
      %v1278 = vadd.s32 %v1270, %v1277
      %v1279 = vsel %vm483, %v1253, 0
      %v1280 = vadd.s32 %v1272, %v1279
      %v1281 = vsel %vm483, %v1254, 0
      %v1282 = vadd.s32 %v1274, %v1281
      %v1283 = vadd.s32 %v1276, %v1278
      %v1284 = vadd.s32 %v1280, %v1282
      %v1285 = vadd.s32 %v1283, %v1284
      %v1286 = vand.u32 %v1285, 65535
      %v1287 = vshrl.u32 %v1285, 16
      %v1288 = vcvt.s32.f32 %v1286
      %v1289 = vcvt.s32.f32 %v1287
      %1290 = vadd.xlane.f32.xlu0 %v1288
      %v1291 = vpop.xlane.xlu0 %1290
      %1292 = vadd.xlane.f32.xlu0 %v1289
      %v1293 = vpop.xlane.xlu0 %1292
      %v1294 = vcvt.f32.s32 %v1291
      %v1295 = vcvt.f32.s32 %v1293
      %v1296 = vshll.u32 %v1295, 16
      %v1297 = vadd.s32 %v1296, %v1294
      %v1298 = vrot.slane %v1297, 4
      %v1299 = vadd.s32 %v1297, %v1298
      %v1300 = vrot.slane %v1299, 2
      %v1301 = vadd.s32 %v1299, %v1300
      %v1302 = vrot.slane %v1301, 1
      %v1303 = vadd.s32 %v1301, %v1302
      %s1304 = vtos %v1303
      %p1305 = scmp.ge.s32.totalorder %s1138, 5
      %s1306 = scalar_select %p1305, 1, 0
      %p1307 = scmp.ge.s32.totalorder %s1221, 5
      %s1308 = scalar_select %p1307, 1, 0
      %s1309 = sadd.s32 %s1306, %s1308
      %p1310 = scmp.ge.s32.totalorder %s1304, 5
      %s1311 = scalar_select %p1310, 1, 0
      %s1312 = sadd.s32 %s1309, %s1311
      %s1313 = sshll.u32 %s1312, 25
      %s1314 = sor.u32 %s1052, %s1313
      %s1315 = sor.u32 %s1314, 8388608
      %s1316 = sor.u32 %s1314, 16777216
      %s1317 = sor.u32 %s1314, 25165824
      %v1318 = vstv %s1315
      %vm1319 = vcmp.ge.s32.totalorder %v504, %v1318
      %vm1320 = vcmp.ge.s32.totalorder %v505, %v1318
      %vm1321 = vcmp.ge.s32.totalorder %v506, %v1318
      %vm1322 = vcmp.ge.s32.totalorder %v507, %v1318
      %vm1323 = vcmp.ge.s32.totalorder %v508, %v1318
      %vm1324 = vcmp.ge.s32.totalorder %v509, %v1318
      %vm1325 = vcmp.ge.s32.totalorder %v510, %v1318
      %vm1326 = vcmp.ge.s32.totalorder %v511, %v1318
      %vm1327 = vcmp.ge.s32.totalorder %v512, %v1318
      %vm1328 = vcmp.ge.s32.totalorder %v513, %v1318
      %vm1329 = vcmp.ge.s32.totalorder %v514, %v1318
      %vm1330 = vcmp.ge.s32.totalorder %v515, %v1318
      %vm1331 = vcmp.ge.s32.totalorder %v516, %v1318
      %vm1332 = vcmp.ge.s32.totalorder %v517, %v1318
      %vm1333 = vcmp.ge.s32.totalorder %v518, %v1318
      %vm1334 = vcmp.ge.s32.totalorder %v519, %v1318
      %v1335 = vsel %vm1319, 1, 0
      %v1336 = vsel %vm1320, 1, 0
      %v1337 = vsel %vm1321, 1, 0
      %v1338 = vsel %vm1322, 1, 0
      %v1339 = vsel %vm1323, 1, 0
      %v1340 = vsel %vm1324, 1, 0
      %v1341 = vsel %vm1325, 1, 0
      %v1342 = vsel %vm1326, 1, 0
      %v1343 = vsel %vm1327, 1, 0
      %v1344 = vsel %vm1328, 1, 0
      %v1345 = vsel %vm1329, 1, 0
      %v1346 = vsel %vm1330, 1, 0
      %v1347 = vsel %vm1331, 1, 0
      %v1348 = vsel %vm1332, 1, 0
      %v1349 = vsel %vm1333, 1, 0
      %v1350 = vsel %vm1334, 1, 0
      %v1351 = vsel %vm483, %v1335, 0
      %v1352 = vsel %vm483, %v1336, 0
      %v1353 = vsel %vm483, %v1337, 0
      %v1354 = vsel %vm483, %v1338, 0
      %v1355 = vsel %vm483, %v1339, 0
      %v1356 = vadd.s32 %v1351, %v1355
      %v1357 = vsel %vm483, %v1340, 0
      %v1358 = vadd.s32 %v1352, %v1357
      %v1359 = vsel %vm483, %v1341, 0
      %v1360 = vadd.s32 %v1353, %v1359
      %v1361 = vsel %vm483, %v1342, 0
      %v1362 = vadd.s32 %v1354, %v1361
      %v1363 = vsel %vm483, %v1343, 0
      %v1364 = vadd.s32 %v1356, %v1363
      %v1365 = vsel %vm483, %v1344, 0
      %v1366 = vadd.s32 %v1358, %v1365
      %v1367 = vsel %vm483, %v1345, 0
      %v1368 = vadd.s32 %v1360, %v1367
      %v1369 = vsel %vm483, %v1346, 0
      %v1370 = vadd.s32 %v1362, %v1369
      %v1371 = vsel %vm483, %v1347, 0
      %v1372 = vadd.s32 %v1364, %v1371
      %v1373 = vsel %vm483, %v1348, 0
      %v1374 = vadd.s32 %v1366, %v1373
      %v1375 = vsel %vm483, %v1349, 0
      %v1376 = vadd.s32 %v1368, %v1375
      %v1377 = vsel %vm483, %v1350, 0
      %v1378 = vadd.s32 %v1370, %v1377
      %v1379 = vadd.s32 %v1372, %v1374
      %v1380 = vadd.s32 %v1376, %v1378
      %v1381 = vadd.s32 %v1379, %v1380
      %v1382 = vand.u32 %v1381, 65535
      %v1383 = vshrl.u32 %v1381, 16
      %v1384 = vcvt.s32.f32 %v1382
      %v1385 = vcvt.s32.f32 %v1383
      %1386 = vadd.xlane.f32.xlu0 %v1384
      %v1387 = vpop.xlane.xlu0 %1386
      %1388 = vadd.xlane.f32.xlu0 %v1385
      %v1389 = vpop.xlane.xlu0 %1388
      %v1390 = vcvt.f32.s32 %v1387
      %v1391 = vcvt.f32.s32 %v1389
      %v1392 = vshll.u32 %v1391, 16
      %v1393 = vadd.s32 %v1392, %v1390
      %v1394 = vrot.slane %v1393, 4
      %v1395 = vadd.s32 %v1393, %v1394
      %v1396 = vrot.slane %v1395, 2
      %v1397 = vadd.s32 %v1395, %v1396
      %v1398 = vrot.slane %v1397, 1
      %v1399 = vadd.s32 %v1397, %v1398
      %s1400 = vtos %v1399
      %v1401 = vstv %s1316
      %vm1402 = vcmp.ge.s32.totalorder %v504, %v1401
      %vm1403 = vcmp.ge.s32.totalorder %v505, %v1401
      %vm1404 = vcmp.ge.s32.totalorder %v506, %v1401
      %vm1405 = vcmp.ge.s32.totalorder %v507, %v1401
      %vm1406 = vcmp.ge.s32.totalorder %v508, %v1401
      %vm1407 = vcmp.ge.s32.totalorder %v509, %v1401
      %vm1408 = vcmp.ge.s32.totalorder %v510, %v1401
      %vm1409 = vcmp.ge.s32.totalorder %v511, %v1401
      %vm1410 = vcmp.ge.s32.totalorder %v512, %v1401
      %vm1411 = vcmp.ge.s32.totalorder %v513, %v1401
      %vm1412 = vcmp.ge.s32.totalorder %v514, %v1401
      %vm1413 = vcmp.ge.s32.totalorder %v515, %v1401
      %vm1414 = vcmp.ge.s32.totalorder %v516, %v1401
      %vm1415 = vcmp.ge.s32.totalorder %v517, %v1401
      %vm1416 = vcmp.ge.s32.totalorder %v518, %v1401
      %vm1417 = vcmp.ge.s32.totalorder %v519, %v1401
      %v1418 = vsel %vm1402, 1, 0
      %v1419 = vsel %vm1403, 1, 0
      %v1420 = vsel %vm1404, 1, 0
      %v1421 = vsel %vm1405, 1, 0
      %v1422 = vsel %vm1406, 1, 0
      %v1423 = vsel %vm1407, 1, 0
      %v1424 = vsel %vm1408, 1, 0
      %v1425 = vsel %vm1409, 1, 0
      %v1426 = vsel %vm1410, 1, 0
      %v1427 = vsel %vm1411, 1, 0
      %v1428 = vsel %vm1412, 1, 0
      %v1429 = vsel %vm1413, 1, 0
      %v1430 = vsel %vm1414, 1, 0
      %v1431 = vsel %vm1415, 1, 0
      %v1432 = vsel %vm1416, 1, 0
      %v1433 = vsel %vm1417, 1, 0
      %v1434 = vsel %vm483, %v1418, 0
      %v1435 = vsel %vm483, %v1419, 0
      %v1436 = vsel %vm483, %v1420, 0
      %v1437 = vsel %vm483, %v1421, 0
      %v1438 = vsel %vm483, %v1422, 0
      %v1439 = vadd.s32 %v1434, %v1438
      %v1440 = vsel %vm483, %v1423, 0
      %v1441 = vadd.s32 %v1435, %v1440
      %v1442 = vsel %vm483, %v1424, 0
      %v1443 = vadd.s32 %v1436, %v1442
      %v1444 = vsel %vm483, %v1425, 0
      %v1445 = vadd.s32 %v1437, %v1444
      %v1446 = vsel %vm483, %v1426, 0
      %v1447 = vadd.s32 %v1439, %v1446
      %v1448 = vsel %vm483, %v1427, 0
      %v1449 = vadd.s32 %v1441, %v1448
      %v1450 = vsel %vm483, %v1428, 0
      %v1451 = vadd.s32 %v1443, %v1450
      %v1452 = vsel %vm483, %v1429, 0
      %v1453 = vadd.s32 %v1445, %v1452
      %v1454 = vsel %vm483, %v1430, 0
      %v1455 = vadd.s32 %v1447, %v1454
      %v1456 = vsel %vm483, %v1431, 0
      %v1457 = vadd.s32 %v1449, %v1456
      %v1458 = vsel %vm483, %v1432, 0
      %v1459 = vadd.s32 %v1451, %v1458
      %v1460 = vsel %vm483, %v1433, 0
      %v1461 = vadd.s32 %v1453, %v1460
      %v1462 = vadd.s32 %v1455, %v1457
      %v1463 = vadd.s32 %v1459, %v1461
      %v1464 = vadd.s32 %v1462, %v1463
      %v1465 = vand.u32 %v1464, 65535
      %v1466 = vshrl.u32 %v1464, 16
      %v1467 = vcvt.s32.f32 %v1465
      %v1468 = vcvt.s32.f32 %v1466
      %1469 = vadd.xlane.f32.xlu0 %v1467
      %v1470 = vpop.xlane.xlu0 %1469
      %1471 = vadd.xlane.f32.xlu0 %v1468
      %v1472 = vpop.xlane.xlu0 %1471
      %v1473 = vcvt.f32.s32 %v1470
      %v1474 = vcvt.f32.s32 %v1472
      %v1475 = vshll.u32 %v1474, 16
      %v1476 = vadd.s32 %v1475, %v1473
      %v1477 = vrot.slane %v1476, 4
      %v1478 = vadd.s32 %v1476, %v1477
      %v1479 = vrot.slane %v1478, 2
      %v1480 = vadd.s32 %v1478, %v1479
      %v1481 = vrot.slane %v1480, 1
      %v1482 = vadd.s32 %v1480, %v1481
      %s1483 = vtos %v1482
      %v1484 = vstv %s1317
      %vm1485 = vcmp.ge.s32.totalorder %v504, %v1484
      %vm1486 = vcmp.ge.s32.totalorder %v505, %v1484
      %vm1487 = vcmp.ge.s32.totalorder %v506, %v1484
      %vm1488 = vcmp.ge.s32.totalorder %v507, %v1484
      %vm1489 = vcmp.ge.s32.totalorder %v508, %v1484
      %vm1490 = vcmp.ge.s32.totalorder %v509, %v1484
      %vm1491 = vcmp.ge.s32.totalorder %v510, %v1484
      %vm1492 = vcmp.ge.s32.totalorder %v511, %v1484
      %vm1493 = vcmp.ge.s32.totalorder %v512, %v1484
      %vm1494 = vcmp.ge.s32.totalorder %v513, %v1484
      %vm1495 = vcmp.ge.s32.totalorder %v514, %v1484
      %vm1496 = vcmp.ge.s32.totalorder %v515, %v1484
      %vm1497 = vcmp.ge.s32.totalorder %v516, %v1484
      %vm1498 = vcmp.ge.s32.totalorder %v517, %v1484
      %vm1499 = vcmp.ge.s32.totalorder %v518, %v1484
      %vm1500 = vcmp.ge.s32.totalorder %v519, %v1484
      %v1501 = vsel %vm1485, 1, 0
      %v1502 = vsel %vm1486, 1, 0
      %v1503 = vsel %vm1487, 1, 0
      %v1504 = vsel %vm1488, 1, 0
      %v1505 = vsel %vm1489, 1, 0
      %v1506 = vsel %vm1490, 1, 0
      %v1507 = vsel %vm1491, 1, 0
      %v1508 = vsel %vm1492, 1, 0
      %v1509 = vsel %vm1493, 1, 0
      %v1510 = vsel %vm1494, 1, 0
      %v1511 = vsel %vm1495, 1, 0
      %v1512 = vsel %vm1496, 1, 0
      %v1513 = vsel %vm1497, 1, 0
      %v1514 = vsel %vm1498, 1, 0
      %v1515 = vsel %vm1499, 1, 0
      %v1516 = vsel %vm1500, 1, 0
      %v1517 = vsel %vm483, %v1501, 0
      %v1518 = vsel %vm483, %v1502, 0
      %v1519 = vsel %vm483, %v1503, 0
      %v1520 = vsel %vm483, %v1504, 0
      %v1521 = vsel %vm483, %v1505, 0
      %v1522 = vadd.s32 %v1517, %v1521
      %v1523 = vsel %vm483, %v1506, 0
      %v1524 = vadd.s32 %v1518, %v1523
      %v1525 = vsel %vm483, %v1507, 0
      %v1526 = vadd.s32 %v1519, %v1525
      %v1527 = vsel %vm483, %v1508, 0
      %v1528 = vadd.s32 %v1520, %v1527
      %v1529 = vsel %vm483, %v1509, 0
      %v1530 = vadd.s32 %v1522, %v1529
      %v1531 = vsel %vm483, %v1510, 0
      %v1532 = vadd.s32 %v1524, %v1531
      %v1533 = vsel %vm483, %v1511, 0
      %v1534 = vadd.s32 %v1526, %v1533
      %v1535 = vsel %vm483, %v1512, 0
      %v1536 = vadd.s32 %v1528, %v1535
      %v1537 = vsel %vm483, %v1513, 0
      %v1538 = vadd.s32 %v1530, %v1537
      %v1539 = vsel %vm483, %v1514, 0
      %v1540 = vadd.s32 %v1532, %v1539
      %v1541 = vsel %vm483, %v1515, 0
      %v1542 = vadd.s32 %v1534, %v1541
      %v1543 = vsel %vm483, %v1516, 0
      %v1544 = vadd.s32 %v1536, %v1543
      %v1545 = vadd.s32 %v1538, %v1540
      %v1546 = vadd.s32 %v1542, %v1544
      %v1547 = vadd.s32 %v1545, %v1546
      %v1548 = vand.u32 %v1547, 65535
      %v1549 = vshrl.u32 %v1547, 16
      %v1550 = vcvt.s32.f32 %v1548
      %v1551 = vcvt.s32.f32 %v1549
      %1552 = vadd.xlane.f32.xlu0 %v1550
      %v1553 = vpop.xlane.xlu0 %1552
      %1554 = vadd.xlane.f32.xlu0 %v1551
      %v1555 = vpop.xlane.xlu0 %1554
      %v1556 = vcvt.f32.s32 %v1553
      %v1557 = vcvt.f32.s32 %v1555
      %v1558 = vshll.u32 %v1557, 16
      %v1559 = vadd.s32 %v1558, %v1556
      %v1560 = vrot.slane %v1559, 4
      %v1561 = vadd.s32 %v1559, %v1560
      %v1562 = vrot.slane %v1561, 2
      %v1563 = vadd.s32 %v1561, %v1562
      %v1564 = vrot.slane %v1563, 1
      %v1565 = vadd.s32 %v1563, %v1564
      %s1566 = vtos %v1565
      %p1567 = scmp.ge.s32.totalorder %s1400, 5
      %s1568 = scalar_select %p1567, 1, 0
      %p1569 = scmp.ge.s32.totalorder %s1483, 5
      %s1570 = scalar_select %p1569, 1, 0
      %s1571 = sadd.s32 %s1568, %s1570
      %p1572 = scmp.ge.s32.totalorder %s1566, 5
      %s1573 = scalar_select %p1572, 1, 0
      %s1574 = sadd.s32 %s1571, %s1573
      %s1575 = sshll.u32 %s1574, 23
      %s1576 = sor.u32 %s1314, %s1575
      %s1577 = sor.u32 %s1576, 2097152
      %s1578 = sor.u32 %s1576, 4194304
      %s1579 = sor.u32 %s1576, 6291456
      %v1580 = vstv %s1577
      %vm1581 = vcmp.ge.s32.totalorder %v504, %v1580
      %vm1582 = vcmp.ge.s32.totalorder %v505, %v1580
      %vm1583 = vcmp.ge.s32.totalorder %v506, %v1580
      %vm1584 = vcmp.ge.s32.totalorder %v507, %v1580
      %vm1585 = vcmp.ge.s32.totalorder %v508, %v1580
      %vm1586 = vcmp.ge.s32.totalorder %v509, %v1580
      %vm1587 = vcmp.ge.s32.totalorder %v510, %v1580
      %vm1588 = vcmp.ge.s32.totalorder %v511, %v1580
      %vm1589 = vcmp.ge.s32.totalorder %v512, %v1580
      %vm1590 = vcmp.ge.s32.totalorder %v513, %v1580
      %vm1591 = vcmp.ge.s32.totalorder %v514, %v1580
      %vm1592 = vcmp.ge.s32.totalorder %v515, %v1580
      %vm1593 = vcmp.ge.s32.totalorder %v516, %v1580
      %vm1594 = vcmp.ge.s32.totalorder %v517, %v1580
      %vm1595 = vcmp.ge.s32.totalorder %v518, %v1580
      %vm1596 = vcmp.ge.s32.totalorder %v519, %v1580
      %v1597 = vsel %vm1581, 1, 0
      %v1598 = vsel %vm1582, 1, 0
      %v1599 = vsel %vm1583, 1, 0
      %v1600 = vsel %vm1584, 1, 0
      %v1601 = vsel %vm1585, 1, 0
      %v1602 = vsel %vm1586, 1, 0
      %v1603 = vsel %vm1587, 1, 0
      %v1604 = vsel %vm1588, 1, 0
      %v1605 = vsel %vm1589, 1, 0
      %v1606 = vsel %vm1590, 1, 0
      %v1607 = vsel %vm1591, 1, 0
      %v1608 = vsel %vm1592, 1, 0
      %v1609 = vsel %vm1593, 1, 0
      %v1610 = vsel %vm1594, 1, 0
      %v1611 = vsel %vm1595, 1, 0
      %v1612 = vsel %vm1596, 1, 0
      %v1613 = vsel %vm483, %v1597, 0
      %v1614 = vsel %vm483, %v1598, 0
      %v1615 = vsel %vm483, %v1599, 0
      %v1616 = vsel %vm483, %v1600, 0
      %v1617 = vsel %vm483, %v1601, 0
      %v1618 = vadd.s32 %v1613, %v1617
      %v1619 = vsel %vm483, %v1602, 0
      %v1620 = vadd.s32 %v1614, %v1619
      %v1621 = vsel %vm483, %v1603, 0
      %v1622 = vadd.s32 %v1615, %v1621
      %v1623 = vsel %vm483, %v1604, 0
      %v1624 = vadd.s32 %v1616, %v1623
      %v1625 = vsel %vm483, %v1605, 0
      %v1626 = vadd.s32 %v1618, %v1625
      %v1627 = vsel %vm483, %v1606, 0
      %v1628 = vadd.s32 %v1620, %v1627
      %v1629 = vsel %vm483, %v1607, 0
      %v1630 = vadd.s32 %v1622, %v1629
      %v1631 = vsel %vm483, %v1608, 0
      %v1632 = vadd.s32 %v1624, %v1631
      %v1633 = vsel %vm483, %v1609, 0
      %v1634 = vadd.s32 %v1626, %v1633
      %v1635 = vsel %vm483, %v1610, 0
      %v1636 = vadd.s32 %v1628, %v1635
      %v1637 = vsel %vm483, %v1611, 0
      %v1638 = vadd.s32 %v1630, %v1637
      %v1639 = vsel %vm483, %v1612, 0
      %v1640 = vadd.s32 %v1632, %v1639
      %v1641 = vadd.s32 %v1634, %v1636
      %v1642 = vadd.s32 %v1638, %v1640
      %v1643 = vadd.s32 %v1641, %v1642
      %v1644 = vand.u32 %v1643, 65535
      %v1645 = vshrl.u32 %v1643, 16
      %v1646 = vcvt.s32.f32 %v1644
      %v1647 = vcvt.s32.f32 %v1645
      %1648 = vadd.xlane.f32.xlu0 %v1646
      %v1649 = vpop.xlane.xlu0 %1648
      %1650 = vadd.xlane.f32.xlu0 %v1647
      %v1651 = vpop.xlane.xlu0 %1650
      %v1652 = vcvt.f32.s32 %v1649
      %v1653 = vcvt.f32.s32 %v1651
      %v1654 = vshll.u32 %v1653, 16
      %v1655 = vadd.s32 %v1654, %v1652
      %v1656 = vrot.slane %v1655, 4
      %v1657 = vadd.s32 %v1655, %v1656
      %v1658 = vrot.slane %v1657, 2
      %v1659 = vadd.s32 %v1657, %v1658
      %v1660 = vrot.slane %v1659, 1
      %v1661 = vadd.s32 %v1659, %v1660
      %s1662 = vtos %v1661
      %v1663 = vstv %s1578
      %vm1664 = vcmp.ge.s32.totalorder %v504, %v1663
      %vm1665 = vcmp.ge.s32.totalorder %v505, %v1663
      %vm1666 = vcmp.ge.s32.totalorder %v506, %v1663
      %vm1667 = vcmp.ge.s32.totalorder %v507, %v1663
      %vm1668 = vcmp.ge.s32.totalorder %v508, %v1663
      %vm1669 = vcmp.ge.s32.totalorder %v509, %v1663
      %vm1670 = vcmp.ge.s32.totalorder %v510, %v1663
      %vm1671 = vcmp.ge.s32.totalorder %v511, %v1663
      %vm1672 = vcmp.ge.s32.totalorder %v512, %v1663
      %vm1673 = vcmp.ge.s32.totalorder %v513, %v1663
      %vm1674 = vcmp.ge.s32.totalorder %v514, %v1663
      %vm1675 = vcmp.ge.s32.totalorder %v515, %v1663
      %vm1676 = vcmp.ge.s32.totalorder %v516, %v1663
      %vm1677 = vcmp.ge.s32.totalorder %v517, %v1663
      %vm1678 = vcmp.ge.s32.totalorder %v518, %v1663
      %vm1679 = vcmp.ge.s32.totalorder %v519, %v1663
      %v1680 = vsel %vm1664, 1, 0
      %v1681 = vsel %vm1665, 1, 0
      %v1682 = vsel %vm1666, 1, 0
      %v1683 = vsel %vm1667, 1, 0
      %v1684 = vsel %vm1668, 1, 0
      %v1685 = vsel %vm1669, 1, 0
      %v1686 = vsel %vm1670, 1, 0
      %v1687 = vsel %vm1671, 1, 0
      %v1688 = vsel %vm1672, 1, 0
      %v1689 = vsel %vm1673, 1, 0
      %v1690 = vsel %vm1674, 1, 0
      %v1691 = vsel %vm1675, 1, 0
      %v1692 = vsel %vm1676, 1, 0
      %v1693 = vsel %vm1677, 1, 0
      %v1694 = vsel %vm1678, 1, 0
      %v1695 = vsel %vm1679, 1, 0
      %v1696 = vsel %vm483, %v1680, 0
      %v1697 = vsel %vm483, %v1681, 0
      %v1698 = vsel %vm483, %v1682, 0
      %v1699 = vsel %vm483, %v1683, 0
      %v1700 = vsel %vm483, %v1684, 0
      %v1701 = vadd.s32 %v1696, %v1700
      %v1702 = vsel %vm483, %v1685, 0
      %v1703 = vadd.s32 %v1697, %v1702
      %v1704 = vsel %vm483, %v1686, 0
      %v1705 = vadd.s32 %v1698, %v1704
      %v1706 = vsel %vm483, %v1687, 0
      %v1707 = vadd.s32 %v1699, %v1706
      %v1708 = vsel %vm483, %v1688, 0
      %v1709 = vadd.s32 %v1701, %v1708
      %v1710 = vsel %vm483, %v1689, 0
      %v1711 = vadd.s32 %v1703, %v1710
      %v1712 = vsel %vm483, %v1690, 0
      %v1713 = vadd.s32 %v1705, %v1712
      %v1714 = vsel %vm483, %v1691, 0
      %v1715 = vadd.s32 %v1707, %v1714
      %v1716 = vsel %vm483, %v1692, 0
      %v1717 = vadd.s32 %v1709, %v1716
      %v1718 = vsel %vm483, %v1693, 0
      %v1719 = vadd.s32 %v1711, %v1718
      %v1720 = vsel %vm483, %v1694, 0
      %v1721 = vadd.s32 %v1713, %v1720
      %v1722 = vsel %vm483, %v1695, 0
      %v1723 = vadd.s32 %v1715, %v1722
      %v1724 = vadd.s32 %v1717, %v1719
      %v1725 = vadd.s32 %v1721, %v1723
      %v1726 = vadd.s32 %v1724, %v1725
      %v1727 = vand.u32 %v1726, 65535
      %v1728 = vshrl.u32 %v1726, 16
      %v1729 = vcvt.s32.f32 %v1727
      %v1730 = vcvt.s32.f32 %v1728
      %1731 = vadd.xlane.f32.xlu0 %v1729
      %v1732 = vpop.xlane.xlu0 %1731
      %1733 = vadd.xlane.f32.xlu0 %v1730
      %v1734 = vpop.xlane.xlu0 %1733
      %v1735 = vcvt.f32.s32 %v1732
      %v1736 = vcvt.f32.s32 %v1734
      %v1737 = vshll.u32 %v1736, 16
      %v1738 = vadd.s32 %v1737, %v1735
      %v1739 = vrot.slane %v1738, 4
      %v1740 = vadd.s32 %v1738, %v1739
      %v1741 = vrot.slane %v1740, 2
      %v1742 = vadd.s32 %v1740, %v1741
      %v1743 = vrot.slane %v1742, 1
      %v1744 = vadd.s32 %v1742, %v1743
      %s1745 = vtos %v1744
      %v1746 = vstv %s1579
      %vm1747 = vcmp.ge.s32.totalorder %v504, %v1746
      %vm1748 = vcmp.ge.s32.totalorder %v505, %v1746
      %vm1749 = vcmp.ge.s32.totalorder %v506, %v1746
      %vm1750 = vcmp.ge.s32.totalorder %v507, %v1746
      %vm1751 = vcmp.ge.s32.totalorder %v508, %v1746
      %vm1752 = vcmp.ge.s32.totalorder %v509, %v1746
      %vm1753 = vcmp.ge.s32.totalorder %v510, %v1746
      %vm1754 = vcmp.ge.s32.totalorder %v511, %v1746
      %vm1755 = vcmp.ge.s32.totalorder %v512, %v1746
      %vm1756 = vcmp.ge.s32.totalorder %v513, %v1746
      %vm1757 = vcmp.ge.s32.totalorder %v514, %v1746
      %vm1758 = vcmp.ge.s32.totalorder %v515, %v1746
      %vm1759 = vcmp.ge.s32.totalorder %v516, %v1746
      %vm1760 = vcmp.ge.s32.totalorder %v517, %v1746
      %vm1761 = vcmp.ge.s32.totalorder %v518, %v1746
      %vm1762 = vcmp.ge.s32.totalorder %v519, %v1746
      %v1763 = vsel %vm1747, 1, 0
      %v1764 = vsel %vm1748, 1, 0
      %v1765 = vsel %vm1749, 1, 0
      %v1766 = vsel %vm1750, 1, 0
      %v1767 = vsel %vm1751, 1, 0
      %v1768 = vsel %vm1752, 1, 0
      %v1769 = vsel %vm1753, 1, 0
      %v1770 = vsel %vm1754, 1, 0
      %v1771 = vsel %vm1755, 1, 0
      %v1772 = vsel %vm1756, 1, 0
      %v1773 = vsel %vm1757, 1, 0
      %v1774 = vsel %vm1758, 1, 0
      %v1775 = vsel %vm1759, 1, 0
      %v1776 = vsel %vm1760, 1, 0
      %v1777 = vsel %vm1761, 1, 0
      %v1778 = vsel %vm1762, 1, 0
      %v1779 = vsel %vm483, %v1763, 0
      %v1780 = vsel %vm483, %v1764, 0
      %v1781 = vsel %vm483, %v1765, 0
      %v1782 = vsel %vm483, %v1766, 0
      %v1783 = vsel %vm483, %v1767, 0
      %v1784 = vadd.s32 %v1779, %v1783
      %v1785 = vsel %vm483, %v1768, 0
      %v1786 = vadd.s32 %v1780, %v1785
      %v1787 = vsel %vm483, %v1769, 0
      %v1788 = vadd.s32 %v1781, %v1787
      %v1789 = vsel %vm483, %v1770, 0
      %v1790 = vadd.s32 %v1782, %v1789
      %v1791 = vsel %vm483, %v1771, 0
      %v1792 = vadd.s32 %v1784, %v1791
      %v1793 = vsel %vm483, %v1772, 0
      %v1794 = vadd.s32 %v1786, %v1793
      %v1795 = vsel %vm483, %v1773, 0
      %v1796 = vadd.s32 %v1788, %v1795
      %v1797 = vsel %vm483, %v1774, 0
      %v1798 = vadd.s32 %v1790, %v1797
      %v1799 = vsel %vm483, %v1775, 0
      %v1800 = vadd.s32 %v1792, %v1799
      %v1801 = vsel %vm483, %v1776, 0
      %v1802 = vadd.s32 %v1794, %v1801
      %v1803 = vsel %vm483, %v1777, 0
      %v1804 = vadd.s32 %v1796, %v1803
      %v1805 = vsel %vm483, %v1778, 0
      %v1806 = vadd.s32 %v1798, %v1805
      %v1807 = vadd.s32 %v1800, %v1802
      %v1808 = vadd.s32 %v1804, %v1806
      %v1809 = vadd.s32 %v1807, %v1808
      %v1810 = vand.u32 %v1809, 65535
      %v1811 = vshrl.u32 %v1809, 16
      %v1812 = vcvt.s32.f32 %v1810
      %v1813 = vcvt.s32.f32 %v1811
      %1814 = vadd.xlane.f32.xlu0 %v1812
      %v1815 = vpop.xlane.xlu0 %1814
      %1816 = vadd.xlane.f32.xlu0 %v1813
      %v1817 = vpop.xlane.xlu0 %1816
      %v1818 = vcvt.f32.s32 %v1815
      %v1819 = vcvt.f32.s32 %v1817
      %v1820 = vshll.u32 %v1819, 16
      %v1821 = vadd.s32 %v1820, %v1818
      %v1822 = vrot.slane %v1821, 4
      %v1823 = vadd.s32 %v1821, %v1822
      %v1824 = vrot.slane %v1823, 2
      %v1825 = vadd.s32 %v1823, %v1824
      %v1826 = vrot.slane %v1825, 1
      %v1827 = vadd.s32 %v1825, %v1826
      %s1828 = vtos %v1827
      %p1829 = scmp.ge.s32.totalorder %s1662, 5
      %s1830 = scalar_select %p1829, 1, 0
      %p1831 = scmp.ge.s32.totalorder %s1745, 5
      %s1832 = scalar_select %p1831, 1, 0
      %s1833 = sadd.s32 %s1830, %s1832
      %p1834 = scmp.ge.s32.totalorder %s1828, 5
      %s1835 = scalar_select %p1834, 1, 0
      %s1836 = sadd.s32 %s1833, %s1835
      %s1837 = sshll.u32 %s1836, 21
      %s1838 = sor.u32 %s1576, %s1837
      %s1839 = sor.u32 %s1838, 524288
      %s1840 = sor.u32 %s1838, 1048576
      %s1841 = sor.u32 %s1838, 1572864
      %v1842 = vstv %s1839
      %vm1843 = vcmp.ge.s32.totalorder %v504, %v1842
      %vm1844 = vcmp.ge.s32.totalorder %v505, %v1842
      %vm1845 = vcmp.ge.s32.totalorder %v506, %v1842
      %vm1846 = vcmp.ge.s32.totalorder %v507, %v1842
      %vm1847 = vcmp.ge.s32.totalorder %v508, %v1842
      %vm1848 = vcmp.ge.s32.totalorder %v509, %v1842
      %vm1849 = vcmp.ge.s32.totalorder %v510, %v1842
      %vm1850 = vcmp.ge.s32.totalorder %v511, %v1842
      %vm1851 = vcmp.ge.s32.totalorder %v512, %v1842
      %vm1852 = vcmp.ge.s32.totalorder %v513, %v1842
      %vm1853 = vcmp.ge.s32.totalorder %v514, %v1842
      %vm1854 = vcmp.ge.s32.totalorder %v515, %v1842
      %vm1855 = vcmp.ge.s32.totalorder %v516, %v1842
      %vm1856 = vcmp.ge.s32.totalorder %v517, %v1842
      %vm1857 = vcmp.ge.s32.totalorder %v518, %v1842
      %vm1858 = vcmp.ge.s32.totalorder %v519, %v1842
      %v1859 = vsel %vm1843, 1, 0
      %v1860 = vsel %vm1844, 1, 0
      %v1861 = vsel %vm1845, 1, 0
      %v1862 = vsel %vm1846, 1, 0
      %v1863 = vsel %vm1847, 1, 0
      %v1864 = vsel %vm1848, 1, 0
      %v1865 = vsel %vm1849, 1, 0
      %v1866 = vsel %vm1850, 1, 0
      %v1867 = vsel %vm1851, 1, 0
      %v1868 = vsel %vm1852, 1, 0
      %v1869 = vsel %vm1853, 1, 0
      %v1870 = vsel %vm1854, 1, 0
      %v1871 = vsel %vm1855, 1, 0
      %v1872 = vsel %vm1856, 1, 0
      %v1873 = vsel %vm1857, 1, 0
      %v1874 = vsel %vm1858, 1, 0
      %v1875 = vsel %vm483, %v1859, 0
      %v1876 = vsel %vm483, %v1860, 0
      %v1877 = vsel %vm483, %v1861, 0
      %v1878 = vsel %vm483, %v1862, 0
      %v1879 = vsel %vm483, %v1863, 0
      %v1880 = vadd.s32 %v1875, %v1879
      %v1881 = vsel %vm483, %v1864, 0
      %v1882 = vadd.s32 %v1876, %v1881
      %v1883 = vsel %vm483, %v1865, 0
      %v1884 = vadd.s32 %v1877, %v1883
      %v1885 = vsel %vm483, %v1866, 0
      %v1886 = vadd.s32 %v1878, %v1885
      %v1887 = vsel %vm483, %v1867, 0
      %v1888 = vadd.s32 %v1880, %v1887
      %v1889 = vsel %vm483, %v1868, 0
      %v1890 = vadd.s32 %v1882, %v1889
      %v1891 = vsel %vm483, %v1869, 0
      %v1892 = vadd.s32 %v1884, %v1891
      %v1893 = vsel %vm483, %v1870, 0
      %v1894 = vadd.s32 %v1886, %v1893
      %v1895 = vsel %vm483, %v1871, 0
      %v1896 = vadd.s32 %v1888, %v1895
      %v1897 = vsel %vm483, %v1872, 0
      %v1898 = vadd.s32 %v1890, %v1897
      %v1899 = vsel %vm483, %v1873, 0
      %v1900 = vadd.s32 %v1892, %v1899
      %v1901 = vsel %vm483, %v1874, 0
      %v1902 = vadd.s32 %v1894, %v1901
      %v1903 = vadd.s32 %v1896, %v1898
      %v1904 = vadd.s32 %v1900, %v1902
      %v1905 = vadd.s32 %v1903, %v1904
      %v1906 = vand.u32 %v1905, 65535
      %v1907 = vshrl.u32 %v1905, 16
      %v1908 = vcvt.s32.f32 %v1906
      %v1909 = vcvt.s32.f32 %v1907
      %1910 = vadd.xlane.f32.xlu0 %v1908
      %v1911 = vpop.xlane.xlu0 %1910
      %1912 = vadd.xlane.f32.xlu0 %v1909
      %v1913 = vpop.xlane.xlu0 %1912
      %v1914 = vcvt.f32.s32 %v1911
      %v1915 = vcvt.f32.s32 %v1913
      %v1916 = vshll.u32 %v1915, 16
      %v1917 = vadd.s32 %v1916, %v1914
      %v1918 = vrot.slane %v1917, 4
      %v1919 = vadd.s32 %v1917, %v1918
      %v1920 = vrot.slane %v1919, 2
      %v1921 = vadd.s32 %v1919, %v1920
      %v1922 = vrot.slane %v1921, 1
      %v1923 = vadd.s32 %v1921, %v1922
      %s1924 = vtos %v1923
      %v1925 = vstv %s1840
      %vm1926 = vcmp.ge.s32.totalorder %v504, %v1925
      %vm1927 = vcmp.ge.s32.totalorder %v505, %v1925
      %vm1928 = vcmp.ge.s32.totalorder %v506, %v1925
      %vm1929 = vcmp.ge.s32.totalorder %v507, %v1925
      %vm1930 = vcmp.ge.s32.totalorder %v508, %v1925
      %vm1931 = vcmp.ge.s32.totalorder %v509, %v1925
      %vm1932 = vcmp.ge.s32.totalorder %v510, %v1925
      %vm1933 = vcmp.ge.s32.totalorder %v511, %v1925
      %vm1934 = vcmp.ge.s32.totalorder %v512, %v1925
      %vm1935 = vcmp.ge.s32.totalorder %v513, %v1925
      %vm1936 = vcmp.ge.s32.totalorder %v514, %v1925
      %vm1937 = vcmp.ge.s32.totalorder %v515, %v1925
      %vm1938 = vcmp.ge.s32.totalorder %v516, %v1925
      %vm1939 = vcmp.ge.s32.totalorder %v517, %v1925
      %vm1940 = vcmp.ge.s32.totalorder %v518, %v1925
      %vm1941 = vcmp.ge.s32.totalorder %v519, %v1925
      %v1942 = vsel %vm1926, 1, 0
      %v1943 = vsel %vm1927, 1, 0
      %v1944 = vsel %vm1928, 1, 0
      %v1945 = vsel %vm1929, 1, 0
      %v1946 = vsel %vm1930, 1, 0
      %v1947 = vsel %vm1931, 1, 0
      %v1948 = vsel %vm1932, 1, 0
      %v1949 = vsel %vm1933, 1, 0
      %v1950 = vsel %vm1934, 1, 0
      %v1951 = vsel %vm1935, 1, 0
      %v1952 = vsel %vm1936, 1, 0
      %v1953 = vsel %vm1937, 1, 0
      %v1954 = vsel %vm1938, 1, 0
      %v1955 = vsel %vm1939, 1, 0
      %v1956 = vsel %vm1940, 1, 0
      %v1957 = vsel %vm1941, 1, 0
      %v1958 = vsel %vm483, %v1942, 0
      %v1959 = vsel %vm483, %v1943, 0
      %v1960 = vsel %vm483, %v1944, 0
      %v1961 = vsel %vm483, %v1945, 0
      %v1962 = vsel %vm483, %v1946, 0
      %v1963 = vadd.s32 %v1958, %v1962
      %v1964 = vsel %vm483, %v1947, 0
      %v1965 = vadd.s32 %v1959, %v1964
      %v1966 = vsel %vm483, %v1948, 0
      %v1967 = vadd.s32 %v1960, %v1966
      %v1968 = vsel %vm483, %v1949, 0
      %v1969 = vadd.s32 %v1961, %v1968
      %v1970 = vsel %vm483, %v1950, 0
      %v1971 = vadd.s32 %v1963, %v1970
      %v1972 = vsel %vm483, %v1951, 0
      %v1973 = vadd.s32 %v1965, %v1972
      %v1974 = vsel %vm483, %v1952, 0
      %v1975 = vadd.s32 %v1967, %v1974
      %v1976 = vsel %vm483, %v1953, 0
      %v1977 = vadd.s32 %v1969, %v1976
      %v1978 = vsel %vm483, %v1954, 0
      %v1979 = vadd.s32 %v1971, %v1978
      %v1980 = vsel %vm483, %v1955, 0
      %v1981 = vadd.s32 %v1973, %v1980
      %v1982 = vsel %vm483, %v1956, 0
      %v1983 = vadd.s32 %v1975, %v1982
      %v1984 = vsel %vm483, %v1957, 0
      %v1985 = vadd.s32 %v1977, %v1984
      %v1986 = vadd.s32 %v1979, %v1981
      %v1987 = vadd.s32 %v1983, %v1985
      %v1988 = vadd.s32 %v1986, %v1987
      %v1989 = vand.u32 %v1988, 65535
      %v1990 = vshrl.u32 %v1988, 16
      %v1991 = vcvt.s32.f32 %v1989
      %v1992 = vcvt.s32.f32 %v1990
      %1993 = vadd.xlane.f32.xlu0 %v1991
      %v1994 = vpop.xlane.xlu0 %1993
      %1995 = vadd.xlane.f32.xlu0 %v1992
      %v1996 = vpop.xlane.xlu0 %1995
      %v1997 = vcvt.f32.s32 %v1994
      %v1998 = vcvt.f32.s32 %v1996
      %v1999 = vshll.u32 %v1998, 16
      %v2000 = vadd.s32 %v1999, %v1997
      %v2001 = vrot.slane %v2000, 4
      %v2002 = vadd.s32 %v2000, %v2001
      %v2003 = vrot.slane %v2002, 2
      %v2004 = vadd.s32 %v2002, %v2003
      %v2005 = vrot.slane %v2004, 1
      %v2006 = vadd.s32 %v2004, %v2005
      %s2007 = vtos %v2006
      %v2008 = vstv %s1841
      %vm2009 = vcmp.ge.s32.totalorder %v504, %v2008
      %vm2010 = vcmp.ge.s32.totalorder %v505, %v2008
      %vm2011 = vcmp.ge.s32.totalorder %v506, %v2008
      %vm2012 = vcmp.ge.s32.totalorder %v507, %v2008
      %vm2013 = vcmp.ge.s32.totalorder %v508, %v2008
      %vm2014 = vcmp.ge.s32.totalorder %v509, %v2008
      %vm2015 = vcmp.ge.s32.totalorder %v510, %v2008
      %vm2016 = vcmp.ge.s32.totalorder %v511, %v2008
      %vm2017 = vcmp.ge.s32.totalorder %v512, %v2008
      %vm2018 = vcmp.ge.s32.totalorder %v513, %v2008
      %vm2019 = vcmp.ge.s32.totalorder %v514, %v2008
      %vm2020 = vcmp.ge.s32.totalorder %v515, %v2008
      %vm2021 = vcmp.ge.s32.totalorder %v516, %v2008
      %vm2022 = vcmp.ge.s32.totalorder %v517, %v2008
      %vm2023 = vcmp.ge.s32.totalorder %v518, %v2008
      %vm2024 = vcmp.ge.s32.totalorder %v519, %v2008
      %v2025 = vsel %vm2009, 1, 0
      %v2026 = vsel %vm2010, 1, 0
      %v2027 = vsel %vm2011, 1, 0
      %v2028 = vsel %vm2012, 1, 0
      %v2029 = vsel %vm2013, 1, 0
      %v2030 = vsel %vm2014, 1, 0
      %v2031 = vsel %vm2015, 1, 0
      %v2032 = vsel %vm2016, 1, 0
      %v2033 = vsel %vm2017, 1, 0
      %v2034 = vsel %vm2018, 1, 0
      %v2035 = vsel %vm2019, 1, 0
      %v2036 = vsel %vm2020, 1, 0
      %v2037 = vsel %vm2021, 1, 0
      %v2038 = vsel %vm2022, 1, 0
      %v2039 = vsel %vm2023, 1, 0
      %v2040 = vsel %vm2024, 1, 0
      %v2041 = vsel %vm483, %v2025, 0
      %v2042 = vsel %vm483, %v2026, 0
      %v2043 = vsel %vm483, %v2027, 0
      %v2044 = vsel %vm483, %v2028, 0
      %v2045 = vsel %vm483, %v2029, 0
      %v2046 = vadd.s32 %v2041, %v2045
      %v2047 = vsel %vm483, %v2030, 0
      %v2048 = vadd.s32 %v2042, %v2047
      %v2049 = vsel %vm483, %v2031, 0
      %v2050 = vadd.s32 %v2043, %v2049
      %v2051 = vsel %vm483, %v2032, 0
      %v2052 = vadd.s32 %v2044, %v2051
      %v2053 = vsel %vm483, %v2033, 0
      %v2054 = vadd.s32 %v2046, %v2053
      %v2055 = vsel %vm483, %v2034, 0
      %v2056 = vadd.s32 %v2048, %v2055
      %v2057 = vsel %vm483, %v2035, 0
      %v2058 = vadd.s32 %v2050, %v2057
      %v2059 = vsel %vm483, %v2036, 0
      %v2060 = vadd.s32 %v2052, %v2059
      %v2061 = vsel %vm483, %v2037, 0
      %v2062 = vadd.s32 %v2054, %v2061
      %v2063 = vsel %vm483, %v2038, 0
      %v2064 = vadd.s32 %v2056, %v2063
      %v2065 = vsel %vm483, %v2039, 0
      %v2066 = vadd.s32 %v2058, %v2065
      %v2067 = vsel %vm483, %v2040, 0
      %v2068 = vadd.s32 %v2060, %v2067
      %v2069 = vadd.s32 %v2062, %v2064
      %v2070 = vadd.s32 %v2066, %v2068
      %v2071 = vadd.s32 %v2069, %v2070
      %v2072 = vand.u32 %v2071, 65535
      %v2073 = vshrl.u32 %v2071, 16
      %v2074 = vcvt.s32.f32 %v2072
      %v2075 = vcvt.s32.f32 %v2073
      %2076 = vadd.xlane.f32.xlu0 %v2074
      %v2077 = vpop.xlane.xlu0 %2076
      %2078 = vadd.xlane.f32.xlu0 %v2075
      %v2079 = vpop.xlane.xlu0 %2078
      %v2080 = vcvt.f32.s32 %v2077
      %v2081 = vcvt.f32.s32 %v2079
      %v2082 = vshll.u32 %v2081, 16
      %v2083 = vadd.s32 %v2082, %v2080
      %v2084 = vrot.slane %v2083, 4
      %v2085 = vadd.s32 %v2083, %v2084
      %v2086 = vrot.slane %v2085, 2
      %v2087 = vadd.s32 %v2085, %v2086
      %v2088 = vrot.slane %v2087, 1
      %v2089 = vadd.s32 %v2087, %v2088
      %s2090 = vtos %v2089
      %p2091 = scmp.ge.s32.totalorder %s1924, 5
      %s2092 = scalar_select %p2091, 1, 0
      %p2093 = scmp.ge.s32.totalorder %s2007, 5
      %s2094 = scalar_select %p2093, 1, 0
      %s2095 = sadd.s32 %s2092, %s2094
      %p2096 = scmp.ge.s32.totalorder %s2090, 5
      %s2097 = scalar_select %p2096, 1, 0
      %s2098 = sadd.s32 %s2095, %s2097
      %s2099 = sshll.u32 %s2098, 19
      %s2100 = sor.u32 %s1838, %s2099
      %s2101 = sor.u32 %s2100, 131072
      %s2102 = sor.u32 %s2100, 262144
      %s2103 = sor.u32 %s2100, 393216
      %v2104 = vstv %s2101
      %vm2105 = vcmp.ge.s32.totalorder %v504, %v2104
      %vm2106 = vcmp.ge.s32.totalorder %v505, %v2104
      %vm2107 = vcmp.ge.s32.totalorder %v506, %v2104
      %vm2108 = vcmp.ge.s32.totalorder %v507, %v2104
      %vm2109 = vcmp.ge.s32.totalorder %v508, %v2104
      %vm2110 = vcmp.ge.s32.totalorder %v509, %v2104
      %vm2111 = vcmp.ge.s32.totalorder %v510, %v2104
      %vm2112 = vcmp.ge.s32.totalorder %v511, %v2104
      %vm2113 = vcmp.ge.s32.totalorder %v512, %v2104
      %vm2114 = vcmp.ge.s32.totalorder %v513, %v2104
      %vm2115 = vcmp.ge.s32.totalorder %v514, %v2104
      %vm2116 = vcmp.ge.s32.totalorder %v515, %v2104
      %vm2117 = vcmp.ge.s32.totalorder %v516, %v2104
      %vm2118 = vcmp.ge.s32.totalorder %v517, %v2104
      %vm2119 = vcmp.ge.s32.totalorder %v518, %v2104
      %vm2120 = vcmp.ge.s32.totalorder %v519, %v2104
      %v2121 = vsel %vm2105, 1, 0
      %v2122 = vsel %vm2106, 1, 0
      %v2123 = vsel %vm2107, 1, 0
      %v2124 = vsel %vm2108, 1, 0
      %v2125 = vsel %vm2109, 1, 0
      %v2126 = vsel %vm2110, 1, 0
      %v2127 = vsel %vm2111, 1, 0
      %v2128 = vsel %vm2112, 1, 0
      %v2129 = vsel %vm2113, 1, 0
      %v2130 = vsel %vm2114, 1, 0
      %v2131 = vsel %vm2115, 1, 0
      %v2132 = vsel %vm2116, 1, 0
      %v2133 = vsel %vm2117, 1, 0
      %v2134 = vsel %vm2118, 1, 0
      %v2135 = vsel %vm2119, 1, 0
      %v2136 = vsel %vm2120, 1, 0
      %v2137 = vsel %vm483, %v2121, 0
      %v2138 = vsel %vm483, %v2122, 0
      %v2139 = vsel %vm483, %v2123, 0
      %v2140 = vsel %vm483, %v2124, 0
      %v2141 = vsel %vm483, %v2125, 0
      %v2142 = vadd.s32 %v2137, %v2141
      %v2143 = vsel %vm483, %v2126, 0
      %v2144 = vadd.s32 %v2138, %v2143
      %v2145 = vsel %vm483, %v2127, 0
      %v2146 = vadd.s32 %v2139, %v2145
      %v2147 = vsel %vm483, %v2128, 0
      %v2148 = vadd.s32 %v2140, %v2147
      %v2149 = vsel %vm483, %v2129, 0
      %v2150 = vadd.s32 %v2142, %v2149
      %v2151 = vsel %vm483, %v2130, 0
      %v2152 = vadd.s32 %v2144, %v2151
      %v2153 = vsel %vm483, %v2131, 0
      %v2154 = vadd.s32 %v2146, %v2153
      %v2155 = vsel %vm483, %v2132, 0
      %v2156 = vadd.s32 %v2148, %v2155
      %v2157 = vsel %vm483, %v2133, 0
      %v2158 = vadd.s32 %v2150, %v2157
      %v2159 = vsel %vm483, %v2134, 0
      %v2160 = vadd.s32 %v2152, %v2159
      %v2161 = vsel %vm483, %v2135, 0
      %v2162 = vadd.s32 %v2154, %v2161
      %v2163 = vsel %vm483, %v2136, 0
      %v2164 = vadd.s32 %v2156, %v2163
      %v2165 = vadd.s32 %v2158, %v2160
      %v2166 = vadd.s32 %v2162, %v2164
      %v2167 = vadd.s32 %v2165, %v2166
      %v2168 = vand.u32 %v2167, 65535
      %v2169 = vshrl.u32 %v2167, 16
      %v2170 = vcvt.s32.f32 %v2168
      %v2171 = vcvt.s32.f32 %v2169
      %2172 = vadd.xlane.f32.xlu0 %v2170
      %v2173 = vpop.xlane.xlu0 %2172
      %2174 = vadd.xlane.f32.xlu0 %v2171
      %v2175 = vpop.xlane.xlu0 %2174
      %v2176 = vcvt.f32.s32 %v2173
      %v2177 = vcvt.f32.s32 %v2175
      %v2178 = vshll.u32 %v2177, 16
      %v2179 = vadd.s32 %v2178, %v2176
      %v2180 = vrot.slane %v2179, 4
      %v2181 = vadd.s32 %v2179, %v2180
      %v2182 = vrot.slane %v2181, 2
      %v2183 = vadd.s32 %v2181, %v2182
      %v2184 = vrot.slane %v2183, 1
      %v2185 = vadd.s32 %v2183, %v2184
      %s2186 = vtos %v2185
      %v2187 = vstv %s2102
      %vm2188 = vcmp.ge.s32.totalorder %v504, %v2187
      %vm2189 = vcmp.ge.s32.totalorder %v505, %v2187
      %vm2190 = vcmp.ge.s32.totalorder %v506, %v2187
      %vm2191 = vcmp.ge.s32.totalorder %v507, %v2187
      %vm2192 = vcmp.ge.s32.totalorder %v508, %v2187
      %vm2193 = vcmp.ge.s32.totalorder %v509, %v2187
      %vm2194 = vcmp.ge.s32.totalorder %v510, %v2187
      %vm2195 = vcmp.ge.s32.totalorder %v511, %v2187
      %vm2196 = vcmp.ge.s32.totalorder %v512, %v2187
      %vm2197 = vcmp.ge.s32.totalorder %v513, %v2187
      %vm2198 = vcmp.ge.s32.totalorder %v514, %v2187
      %vm2199 = vcmp.ge.s32.totalorder %v515, %v2187
      %vm2200 = vcmp.ge.s32.totalorder %v516, %v2187
      %vm2201 = vcmp.ge.s32.totalorder %v517, %v2187
      %vm2202 = vcmp.ge.s32.totalorder %v518, %v2187
      %vm2203 = vcmp.ge.s32.totalorder %v519, %v2187
      %v2204 = vsel %vm2188, 1, 0
      %v2205 = vsel %vm2189, 1, 0
      %v2206 = vsel %vm2190, 1, 0
      %v2207 = vsel %vm2191, 1, 0
      %v2208 = vsel %vm2192, 1, 0
      %v2209 = vsel %vm2193, 1, 0
      %v2210 = vsel %vm2194, 1, 0
      %v2211 = vsel %vm2195, 1, 0
      %v2212 = vsel %vm2196, 1, 0
      %v2213 = vsel %vm2197, 1, 0
      %v2214 = vsel %vm2198, 1, 0
      %v2215 = vsel %vm2199, 1, 0
      %v2216 = vsel %vm2200, 1, 0
      %v2217 = vsel %vm2201, 1, 0
      %v2218 = vsel %vm2202, 1, 0
      %v2219 = vsel %vm2203, 1, 0
      %v2220 = vsel %vm483, %v2204, 0
      %v2221 = vsel %vm483, %v2205, 0
      %v2222 = vsel %vm483, %v2206, 0
      %v2223 = vsel %vm483, %v2207, 0
      %v2224 = vsel %vm483, %v2208, 0
      %v2225 = vadd.s32 %v2220, %v2224
      %v2226 = vsel %vm483, %v2209, 0
      %v2227 = vadd.s32 %v2221, %v2226
      %v2228 = vsel %vm483, %v2210, 0
      %v2229 = vadd.s32 %v2222, %v2228
      %v2230 = vsel %vm483, %v2211, 0
      %v2231 = vadd.s32 %v2223, %v2230
      %v2232 = vsel %vm483, %v2212, 0
      %v2233 = vadd.s32 %v2225, %v2232
      %v2234 = vsel %vm483, %v2213, 0
      %v2235 = vadd.s32 %v2227, %v2234
      %v2236 = vsel %vm483, %v2214, 0
      %v2237 = vadd.s32 %v2229, %v2236
      %v2238 = vsel %vm483, %v2215, 0
      %v2239 = vadd.s32 %v2231, %v2238
      %v2240 = vsel %vm483, %v2216, 0
      %v2241 = vadd.s32 %v2233, %v2240
      %v2242 = vsel %vm483, %v2217, 0
      %v2243 = vadd.s32 %v2235, %v2242
      %v2244 = vsel %vm483, %v2218, 0
      %v2245 = vadd.s32 %v2237, %v2244
      %v2246 = vsel %vm483, %v2219, 0
      %v2247 = vadd.s32 %v2239, %v2246
      %v2248 = vadd.s32 %v2241, %v2243
      %v2249 = vadd.s32 %v2245, %v2247
      %v2250 = vadd.s32 %v2248, %v2249
      %v2251 = vand.u32 %v2250, 65535
      %v2252 = vshrl.u32 %v2250, 16
      %v2253 = vcvt.s32.f32 %v2251
      %v2254 = vcvt.s32.f32 %v2252
      %2255 = vadd.xlane.f32.xlu0 %v2253
      %v2256 = vpop.xlane.xlu0 %2255
      %2257 = vadd.xlane.f32.xlu0 %v2254
      %v2258 = vpop.xlane.xlu0 %2257
      %v2259 = vcvt.f32.s32 %v2256
      %v2260 = vcvt.f32.s32 %v2258
      %v2261 = vshll.u32 %v2260, 16
      %v2262 = vadd.s32 %v2261, %v2259
      %v2263 = vrot.slane %v2262, 4
      %v2264 = vadd.s32 %v2262, %v2263
      %v2265 = vrot.slane %v2264, 2
      %v2266 = vadd.s32 %v2264, %v2265
      %v2267 = vrot.slane %v2266, 1
      %v2268 = vadd.s32 %v2266, %v2267
      %s2269 = vtos %v2268
      %v2270 = vstv %s2103
      %vm2271 = vcmp.ge.s32.totalorder %v504, %v2270
      %vm2272 = vcmp.ge.s32.totalorder %v505, %v2270
      %vm2273 = vcmp.ge.s32.totalorder %v506, %v2270
      %vm2274 = vcmp.ge.s32.totalorder %v507, %v2270
      %vm2275 = vcmp.ge.s32.totalorder %v508, %v2270
      %vm2276 = vcmp.ge.s32.totalorder %v509, %v2270
      %vm2277 = vcmp.ge.s32.totalorder %v510, %v2270
      %vm2278 = vcmp.ge.s32.totalorder %v511, %v2270
      %vm2279 = vcmp.ge.s32.totalorder %v512, %v2270
      %vm2280 = vcmp.ge.s32.totalorder %v513, %v2270
      %vm2281 = vcmp.ge.s32.totalorder %v514, %v2270
      %vm2282 = vcmp.ge.s32.totalorder %v515, %v2270
      %vm2283 = vcmp.ge.s32.totalorder %v516, %v2270
      %vm2284 = vcmp.ge.s32.totalorder %v517, %v2270
      %vm2285 = vcmp.ge.s32.totalorder %v518, %v2270
      %vm2286 = vcmp.ge.s32.totalorder %v519, %v2270
      %v2287 = vsel %vm2271, 1, 0
      %v2288 = vsel %vm2272, 1, 0
      %v2289 = vsel %vm2273, 1, 0
      %v2290 = vsel %vm2274, 1, 0
      %v2291 = vsel %vm2275, 1, 0
      %v2292 = vsel %vm2276, 1, 0
      %v2293 = vsel %vm2277, 1, 0
      %v2294 = vsel %vm2278, 1, 0
      %v2295 = vsel %vm2279, 1, 0
      %v2296 = vsel %vm2280, 1, 0
      %v2297 = vsel %vm2281, 1, 0
      %v2298 = vsel %vm2282, 1, 0
      %v2299 = vsel %vm2283, 1, 0
      %v2300 = vsel %vm2284, 1, 0
      %v2301 = vsel %vm2285, 1, 0
      %v2302 = vsel %vm2286, 1, 0
      %v2303 = vsel %vm483, %v2287, 0
      %v2304 = vsel %vm483, %v2288, 0
      %v2305 = vsel %vm483, %v2289, 0
      %v2306 = vsel %vm483, %v2290, 0
      %v2307 = vsel %vm483, %v2291, 0
      %v2308 = vadd.s32 %v2303, %v2307
      %v2309 = vsel %vm483, %v2292, 0
      %v2310 = vadd.s32 %v2304, %v2309
      %v2311 = vsel %vm483, %v2293, 0
      %v2312 = vadd.s32 %v2305, %v2311
      %v2313 = vsel %vm483, %v2294, 0
      %v2314 = vadd.s32 %v2306, %v2313
      %v2315 = vsel %vm483, %v2295, 0
      %v2316 = vadd.s32 %v2308, %v2315
      %v2317 = vsel %vm483, %v2296, 0
      %v2318 = vadd.s32 %v2310, %v2317
      %v2319 = vsel %vm483, %v2297, 0
      %v2320 = vadd.s32 %v2312, %v2319
      %v2321 = vsel %vm483, %v2298, 0
      %v2322 = vadd.s32 %v2314, %v2321
      %v2323 = vsel %vm483, %v2299, 0
      %v2324 = vadd.s32 %v2316, %v2323
      %v2325 = vsel %vm483, %v2300, 0
      %v2326 = vadd.s32 %v2318, %v2325
      %v2327 = vsel %vm483, %v2301, 0
      %v2328 = vadd.s32 %v2320, %v2327
      %v2329 = vsel %vm483, %v2302, 0
      %v2330 = vadd.s32 %v2322, %v2329
      %v2331 = vadd.s32 %v2324, %v2326
      %v2332 = vadd.s32 %v2328, %v2330
      %v2333 = vadd.s32 %v2331, %v2332
      %v2334 = vand.u32 %v2333, 65535
      %v2335 = vshrl.u32 %v2333, 16
      %v2336 = vcvt.s32.f32 %v2334
      %v2337 = vcvt.s32.f32 %v2335
      %2338 = vadd.xlane.f32.xlu0 %v2336
      %v2339 = vpop.xlane.xlu0 %2338
      %2340 = vadd.xlane.f32.xlu0 %v2337
      %v2341 = vpop.xlane.xlu0 %2340
      %v2342 = vcvt.f32.s32 %v2339
      %v2343 = vcvt.f32.s32 %v2341
      %v2344 = vshll.u32 %v2343, 16
      %v2345 = vadd.s32 %v2344, %v2342
      %v2346 = vrot.slane %v2345, 4
      %v2347 = vadd.s32 %v2345, %v2346
      %v2348 = vrot.slane %v2347, 2
      %v2349 = vadd.s32 %v2347, %v2348
      %v2350 = vrot.slane %v2349, 1
      %v2351 = vadd.s32 %v2349, %v2350
      %s2352 = vtos %v2351
      %p2353 = scmp.ge.s32.totalorder %s2186, 5
      %s2354 = scalar_select %p2353, 1, 0
      %p2355 = scmp.ge.s32.totalorder %s2269, 5
      %s2356 = scalar_select %p2355, 1, 0
      %s2357 = sadd.s32 %s2354, %s2356
      %p2358 = scmp.ge.s32.totalorder %s2352, 5
      %s2359 = scalar_select %p2358, 1, 0
      %s2360 = sadd.s32 %s2357, %s2359
      %s2361 = sshll.u32 %s2360, 17
      %s2362 = sor.u32 %s2100, %s2361
      %s2363 = sor.u32 %s2362, 32768
      %s2364 = sor.u32 %s2362, 65536
      %s2365 = sor.u32 %s2362, 98304
      %v2366 = vstv %s2363
      %vm2367 = vcmp.ge.s32.totalorder %v504, %v2366
      %vm2368 = vcmp.ge.s32.totalorder %v505, %v2366
      %vm2369 = vcmp.ge.s32.totalorder %v506, %v2366
      %vm2370 = vcmp.ge.s32.totalorder %v507, %v2366
      %vm2371 = vcmp.ge.s32.totalorder %v508, %v2366
      %vm2372 = vcmp.ge.s32.totalorder %v509, %v2366
      %vm2373 = vcmp.ge.s32.totalorder %v510, %v2366
      %vm2374 = vcmp.ge.s32.totalorder %v511, %v2366
      %vm2375 = vcmp.ge.s32.totalorder %v512, %v2366
      %vm2376 = vcmp.ge.s32.totalorder %v513, %v2366
      %vm2377 = vcmp.ge.s32.totalorder %v514, %v2366
      %vm2378 = vcmp.ge.s32.totalorder %v515, %v2366
      %vm2379 = vcmp.ge.s32.totalorder %v516, %v2366
      %vm2380 = vcmp.ge.s32.totalorder %v517, %v2366
      %vm2381 = vcmp.ge.s32.totalorder %v518, %v2366
      %vm2382 = vcmp.ge.s32.totalorder %v519, %v2366
      %v2383 = vsel %vm2367, 1, 0
      %v2384 = vsel %vm2368, 1, 0
      %v2385 = vsel %vm2369, 1, 0
      %v2386 = vsel %vm2370, 1, 0
      %v2387 = vsel %vm2371, 1, 0
      %v2388 = vsel %vm2372, 1, 0
      %v2389 = vsel %vm2373, 1, 0
      %v2390 = vsel %vm2374, 1, 0
      %v2391 = vsel %vm2375, 1, 0
      %v2392 = vsel %vm2376, 1, 0
      %v2393 = vsel %vm2377, 1, 0
      %v2394 = vsel %vm2378, 1, 0
      %v2395 = vsel %vm2379, 1, 0
      %v2396 = vsel %vm2380, 1, 0
      %v2397 = vsel %vm2381, 1, 0
      %v2398 = vsel %vm2382, 1, 0
      %v2399 = vsel %vm483, %v2383, 0
      %v2400 = vsel %vm483, %v2384, 0
      %v2401 = vsel %vm483, %v2385, 0
      %v2402 = vsel %vm483, %v2386, 0
      %v2403 = vsel %vm483, %v2387, 0
      %v2404 = vadd.s32 %v2399, %v2403
      %v2405 = vsel %vm483, %v2388, 0
      %v2406 = vadd.s32 %v2400, %v2405
      %v2407 = vsel %vm483, %v2389, 0
      %v2408 = vadd.s32 %v2401, %v2407
      %v2409 = vsel %vm483, %v2390, 0
      %v2410 = vadd.s32 %v2402, %v2409
      %v2411 = vsel %vm483, %v2391, 0
      %v2412 = vadd.s32 %v2404, %v2411
      %v2413 = vsel %vm483, %v2392, 0
      %v2414 = vadd.s32 %v2406, %v2413
      %v2415 = vsel %vm483, %v2393, 0
      %v2416 = vadd.s32 %v2408, %v2415
      %v2417 = vsel %vm483, %v2394, 0
      %v2418 = vadd.s32 %v2410, %v2417
      %v2419 = vsel %vm483, %v2395, 0
      %v2420 = vadd.s32 %v2412, %v2419
      %v2421 = vsel %vm483, %v2396, 0
      %v2422 = vadd.s32 %v2414, %v2421
      %v2423 = vsel %vm483, %v2397, 0
      %v2424 = vadd.s32 %v2416, %v2423
      %v2425 = vsel %vm483, %v2398, 0
      %v2426 = vadd.s32 %v2418, %v2425
      %v2427 = vadd.s32 %v2420, %v2422
      %v2428 = vadd.s32 %v2424, %v2426
      %v2429 = vadd.s32 %v2427, %v2428
      %v2430 = vand.u32 %v2429, 65535
      %v2431 = vshrl.u32 %v2429, 16
      %v2432 = vcvt.s32.f32 %v2430
      %v2433 = vcvt.s32.f32 %v2431
      %2434 = vadd.xlane.f32.xlu0 %v2432
      %v2435 = vpop.xlane.xlu0 %2434
      %2436 = vadd.xlane.f32.xlu0 %v2433
      %v2437 = vpop.xlane.xlu0 %2436
      %v2438 = vcvt.f32.s32 %v2435
      %v2439 = vcvt.f32.s32 %v2437
      %v2440 = vshll.u32 %v2439, 16
      %v2441 = vadd.s32 %v2440, %v2438
      %v2442 = vrot.slane %v2441, 4
      %v2443 = vadd.s32 %v2441, %v2442
      %v2444 = vrot.slane %v2443, 2
      %v2445 = vadd.s32 %v2443, %v2444
      %v2446 = vrot.slane %v2445, 1
      %v2447 = vadd.s32 %v2445, %v2446
      %s2448 = vtos %v2447
      %v2449 = vstv %s2364
      %vm2450 = vcmp.ge.s32.totalorder %v504, %v2449
      %vm2451 = vcmp.ge.s32.totalorder %v505, %v2449
      %vm2452 = vcmp.ge.s32.totalorder %v506, %v2449
      %vm2453 = vcmp.ge.s32.totalorder %v507, %v2449
      %vm2454 = vcmp.ge.s32.totalorder %v508, %v2449
      %vm2455 = vcmp.ge.s32.totalorder %v509, %v2449
      %vm2456 = vcmp.ge.s32.totalorder %v510, %v2449
      %vm2457 = vcmp.ge.s32.totalorder %v511, %v2449
      %vm2458 = vcmp.ge.s32.totalorder %v512, %v2449
      %vm2459 = vcmp.ge.s32.totalorder %v513, %v2449
      %vm2460 = vcmp.ge.s32.totalorder %v514, %v2449
      %vm2461 = vcmp.ge.s32.totalorder %v515, %v2449
      %vm2462 = vcmp.ge.s32.totalorder %v516, %v2449
      %vm2463 = vcmp.ge.s32.totalorder %v517, %v2449
      %vm2464 = vcmp.ge.s32.totalorder %v518, %v2449
      %vm2465 = vcmp.ge.s32.totalorder %v519, %v2449
      %v2466 = vsel %vm2450, 1, 0
      %v2467 = vsel %vm2451, 1, 0
      %v2468 = vsel %vm2452, 1, 0
      %v2469 = vsel %vm2453, 1, 0
      %v2470 = vsel %vm2454, 1, 0
      %v2471 = vsel %vm2455, 1, 0
      %v2472 = vsel %vm2456, 1, 0
      %v2473 = vsel %vm2457, 1, 0
      %v2474 = vsel %vm2458, 1, 0
      %v2475 = vsel %vm2459, 1, 0
      %v2476 = vsel %vm2460, 1, 0
      %v2477 = vsel %vm2461, 1, 0
      %v2478 = vsel %vm2462, 1, 0
      %v2479 = vsel %vm2463, 1, 0
      %v2480 = vsel %vm2464, 1, 0
      %v2481 = vsel %vm2465, 1, 0
      %v2482 = vsel %vm483, %v2466, 0
      %v2483 = vsel %vm483, %v2467, 0
      %v2484 = vsel %vm483, %v2468, 0
      %v2485 = vsel %vm483, %v2469, 0
      %v2486 = vsel %vm483, %v2470, 0
      %v2487 = vadd.s32 %v2482, %v2486
      %v2488 = vsel %vm483, %v2471, 0
      %v2489 = vadd.s32 %v2483, %v2488
      %v2490 = vsel %vm483, %v2472, 0
      %v2491 = vadd.s32 %v2484, %v2490
      %v2492 = vsel %vm483, %v2473, 0
      %v2493 = vadd.s32 %v2485, %v2492
      %v2494 = vsel %vm483, %v2474, 0
      %v2495 = vadd.s32 %v2487, %v2494
      %v2496 = vsel %vm483, %v2475, 0
      %v2497 = vadd.s32 %v2489, %v2496
      %v2498 = vsel %vm483, %v2476, 0
      %v2499 = vadd.s32 %v2491, %v2498
      %v2500 = vsel %vm483, %v2477, 0
      %v2501 = vadd.s32 %v2493, %v2500
      %v2502 = vsel %vm483, %v2478, 0
      %v2503 = vadd.s32 %v2495, %v2502
      %v2504 = vsel %vm483, %v2479, 0
      %v2505 = vadd.s32 %v2497, %v2504
      %v2506 = vsel %vm483, %v2480, 0
      %v2507 = vadd.s32 %v2499, %v2506
      %v2508 = vsel %vm483, %v2481, 0
      %v2509 = vadd.s32 %v2501, %v2508
      %v2510 = vadd.s32 %v2503, %v2505
      %v2511 = vadd.s32 %v2507, %v2509
      %v2512 = vadd.s32 %v2510, %v2511
      %v2513 = vand.u32 %v2512, 65535
      %v2514 = vshrl.u32 %v2512, 16
      %v2515 = vcvt.s32.f32 %v2513
      %v2516 = vcvt.s32.f32 %v2514
      %2517 = vadd.xlane.f32.xlu0 %v2515
      %v2518 = vpop.xlane.xlu0 %2517
      %2519 = vadd.xlane.f32.xlu0 %v2516
      %v2520 = vpop.xlane.xlu0 %2519
      %v2521 = vcvt.f32.s32 %v2518
      %v2522 = vcvt.f32.s32 %v2520
      %v2523 = vshll.u32 %v2522, 16
      %v2524 = vadd.s32 %v2523, %v2521
      %v2525 = vrot.slane %v2524, 4
      %v2526 = vadd.s32 %v2524, %v2525
      %v2527 = vrot.slane %v2526, 2
      %v2528 = vadd.s32 %v2526, %v2527
      %v2529 = vrot.slane %v2528, 1
      %v2530 = vadd.s32 %v2528, %v2529
      %s2531 = vtos %v2530
      %v2532 = vstv %s2365
      %vm2533 = vcmp.ge.s32.totalorder %v504, %v2532
      %vm2534 = vcmp.ge.s32.totalorder %v505, %v2532
      %vm2535 = vcmp.ge.s32.totalorder %v506, %v2532
      %vm2536 = vcmp.ge.s32.totalorder %v507, %v2532
      %vm2537 = vcmp.ge.s32.totalorder %v508, %v2532
      %vm2538 = vcmp.ge.s32.totalorder %v509, %v2532
      %vm2539 = vcmp.ge.s32.totalorder %v510, %v2532
      %vm2540 = vcmp.ge.s32.totalorder %v511, %v2532
      %vm2541 = vcmp.ge.s32.totalorder %v512, %v2532
      %vm2542 = vcmp.ge.s32.totalorder %v513, %v2532
      %vm2543 = vcmp.ge.s32.totalorder %v514, %v2532
      %vm2544 = vcmp.ge.s32.totalorder %v515, %v2532
      %vm2545 = vcmp.ge.s32.totalorder %v516, %v2532
      %vm2546 = vcmp.ge.s32.totalorder %v517, %v2532
      %vm2547 = vcmp.ge.s32.totalorder %v518, %v2532
      %vm2548 = vcmp.ge.s32.totalorder %v519, %v2532
      %v2549 = vsel %vm2533, 1, 0
      %v2550 = vsel %vm2534, 1, 0
      %v2551 = vsel %vm2535, 1, 0
      %v2552 = vsel %vm2536, 1, 0
      %v2553 = vsel %vm2537, 1, 0
      %v2554 = vsel %vm2538, 1, 0
      %v2555 = vsel %vm2539, 1, 0
      %v2556 = vsel %vm2540, 1, 0
      %v2557 = vsel %vm2541, 1, 0
      %v2558 = vsel %vm2542, 1, 0
      %v2559 = vsel %vm2543, 1, 0
      %v2560 = vsel %vm2544, 1, 0
      %v2561 = vsel %vm2545, 1, 0
      %v2562 = vsel %vm2546, 1, 0
      %v2563 = vsel %vm2547, 1, 0
      %v2564 = vsel %vm2548, 1, 0
      %v2565 = vsel %vm483, %v2549, 0
      %v2566 = vsel %vm483, %v2550, 0
      %v2567 = vsel %vm483, %v2551, 0
      %v2568 = vsel %vm483, %v2552, 0
      %v2569 = vsel %vm483, %v2553, 0
      %v2570 = vadd.s32 %v2565, %v2569
      %v2571 = vsel %vm483, %v2554, 0
      %v2572 = vadd.s32 %v2566, %v2571
      %v2573 = vsel %vm483, %v2555, 0
      %v2574 = vadd.s32 %v2567, %v2573
      %v2575 = vsel %vm483, %v2556, 0
      %v2576 = vadd.s32 %v2568, %v2575
      %v2577 = vsel %vm483, %v2557, 0
      %v2578 = vadd.s32 %v2570, %v2577
      %v2579 = vsel %vm483, %v2558, 0
      %v2580 = vadd.s32 %v2572, %v2579
      %v2581 = vsel %vm483, %v2559, 0
      %v2582 = vadd.s32 %v2574, %v2581
      %v2583 = vsel %vm483, %v2560, 0
      %v2584 = vadd.s32 %v2576, %v2583
      %v2585 = vsel %vm483, %v2561, 0
      %v2586 = vadd.s32 %v2578, %v2585
      %v2587 = vsel %vm483, %v2562, 0
      %v2588 = vadd.s32 %v2580, %v2587
      %v2589 = vsel %vm483, %v2563, 0
      %v2590 = vadd.s32 %v2582, %v2589
      %v2591 = vsel %vm483, %v2564, 0
      %v2592 = vadd.s32 %v2584, %v2591
      %v2593 = vadd.s32 %v2586, %v2588
      %v2594 = vadd.s32 %v2590, %v2592
      %v2595 = vadd.s32 %v2593, %v2594
      %v2596 = vand.u32 %v2595, 65535
      %v2597 = vshrl.u32 %v2595, 16
      %v2598 = vcvt.s32.f32 %v2596
      %v2599 = vcvt.s32.f32 %v2597
      %2600 = vadd.xlane.f32.xlu0 %v2598
      %v2601 = vpop.xlane.xlu0 %2600
      %2602 = vadd.xlane.f32.xlu0 %v2599
      %v2603 = vpop.xlane.xlu0 %2602
      %v2604 = vcvt.f32.s32 %v2601
      %v2605 = vcvt.f32.s32 %v2603
      %v2606 = vshll.u32 %v2605, 16
      %v2607 = vadd.s32 %v2606, %v2604
      %v2608 = vrot.slane %v2607, 4
      %v2609 = vadd.s32 %v2607, %v2608
      %v2610 = vrot.slane %v2609, 2
      %v2611 = vadd.s32 %v2609, %v2610
      %v2612 = vrot.slane %v2611, 1
      %v2613 = vadd.s32 %v2611, %v2612
      %s2614 = vtos %v2613
      %p2615 = scmp.ge.s32.totalorder %s2448, 5
      %s2616 = scalar_select %p2615, 1, 0
      %p2617 = scmp.ge.s32.totalorder %s2531, 5
      %s2618 = scalar_select %p2617, 1, 0
      %s2619 = sadd.s32 %s2616, %s2618
      %p2620 = scmp.ge.s32.totalorder %s2614, 5
      %s2621 = scalar_select %p2620, 1, 0
      %s2622 = sadd.s32 %s2619, %s2621
      %s2623 = sshll.u32 %s2622, 15
      %s2624 = sor.u32 %s2362, %s2623
      %s2625 = sor.u32 %s2624, 8192
      %s2626 = sor.u32 %s2624, 16384
      %s2627 = sor.u32 %s2624, 24576
      %v2628 = vstv %s2625
      %vm2629 = vcmp.ge.s32.totalorder %v504, %v2628
      %vm2630 = vcmp.ge.s32.totalorder %v505, %v2628
      %vm2631 = vcmp.ge.s32.totalorder %v506, %v2628
      %vm2632 = vcmp.ge.s32.totalorder %v507, %v2628
      %vm2633 = vcmp.ge.s32.totalorder %v508, %v2628
      %vm2634 = vcmp.ge.s32.totalorder %v509, %v2628
      %vm2635 = vcmp.ge.s32.totalorder %v510, %v2628
      %vm2636 = vcmp.ge.s32.totalorder %v511, %v2628
      %vm2637 = vcmp.ge.s32.totalorder %v512, %v2628
      %vm2638 = vcmp.ge.s32.totalorder %v513, %v2628
      %vm2639 = vcmp.ge.s32.totalorder %v514, %v2628
      %vm2640 = vcmp.ge.s32.totalorder %v515, %v2628
      %vm2641 = vcmp.ge.s32.totalorder %v516, %v2628
      %vm2642 = vcmp.ge.s32.totalorder %v517, %v2628
      %vm2643 = vcmp.ge.s32.totalorder %v518, %v2628
      %vm2644 = vcmp.ge.s32.totalorder %v519, %v2628
      %v2645 = vsel %vm2629, 1, 0
      %v2646 = vsel %vm2630, 1, 0
      %v2647 = vsel %vm2631, 1, 0
      %v2648 = vsel %vm2632, 1, 0
      %v2649 = vsel %vm2633, 1, 0
      %v2650 = vsel %vm2634, 1, 0
      %v2651 = vsel %vm2635, 1, 0
      %v2652 = vsel %vm2636, 1, 0
      %v2653 = vsel %vm2637, 1, 0
      %v2654 = vsel %vm2638, 1, 0
      %v2655 = vsel %vm2639, 1, 0
      %v2656 = vsel %vm2640, 1, 0
      %v2657 = vsel %vm2641, 1, 0
      %v2658 = vsel %vm2642, 1, 0
      %v2659 = vsel %vm2643, 1, 0
      %v2660 = vsel %vm2644, 1, 0
      %v2661 = vsel %vm483, %v2645, 0
      %v2662 = vsel %vm483, %v2646, 0
      %v2663 = vsel %vm483, %v2647, 0
      %v2664 = vsel %vm483, %v2648, 0
      %v2665 = vsel %vm483, %v2649, 0
      %v2666 = vadd.s32 %v2661, %v2665
      %v2667 = vsel %vm483, %v2650, 0
      %v2668 = vadd.s32 %v2662, %v2667
      %v2669 = vsel %vm483, %v2651, 0
      %v2670 = vadd.s32 %v2663, %v2669
      %v2671 = vsel %vm483, %v2652, 0
      %v2672 = vadd.s32 %v2664, %v2671
      %v2673 = vsel %vm483, %v2653, 0
      %v2674 = vadd.s32 %v2666, %v2673
      %v2675 = vsel %vm483, %v2654, 0
      %v2676 = vadd.s32 %v2668, %v2675
      %v2677 = vsel %vm483, %v2655, 0
      %v2678 = vadd.s32 %v2670, %v2677
      %v2679 = vsel %vm483, %v2656, 0
      %v2680 = vadd.s32 %v2672, %v2679
      %v2681 = vsel %vm483, %v2657, 0
      %v2682 = vadd.s32 %v2674, %v2681
      %v2683 = vsel %vm483, %v2658, 0
      %v2684 = vadd.s32 %v2676, %v2683
      %v2685 = vsel %vm483, %v2659, 0
      %v2686 = vadd.s32 %v2678, %v2685
      %v2687 = vsel %vm483, %v2660, 0
      %v2688 = vadd.s32 %v2680, %v2687
      %v2689 = vadd.s32 %v2682, %v2684
      %v2690 = vadd.s32 %v2686, %v2688
      %v2691 = vadd.s32 %v2689, %v2690
      %v2692 = vand.u32 %v2691, 65535
      %v2693 = vshrl.u32 %v2691, 16
      %v2694 = vcvt.s32.f32 %v2692
      %v2695 = vcvt.s32.f32 %v2693
      %2696 = vadd.xlane.f32.xlu0 %v2694
      %v2697 = vpop.xlane.xlu0 %2696
      %2698 = vadd.xlane.f32.xlu0 %v2695
      %v2699 = vpop.xlane.xlu0 %2698
      %v2700 = vcvt.f32.s32 %v2697
      %v2701 = vcvt.f32.s32 %v2699
      %v2702 = vshll.u32 %v2701, 16
      %v2703 = vadd.s32 %v2702, %v2700
      %v2704 = vrot.slane %v2703, 4
      %v2705 = vadd.s32 %v2703, %v2704
      %v2706 = vrot.slane %v2705, 2
      %v2707 = vadd.s32 %v2705, %v2706
      %v2708 = vrot.slane %v2707, 1
      %v2709 = vadd.s32 %v2707, %v2708
      %s2710 = vtos %v2709
      %v2711 = vstv %s2626
      %vm2712 = vcmp.ge.s32.totalorder %v504, %v2711
      %vm2713 = vcmp.ge.s32.totalorder %v505, %v2711
      %vm2714 = vcmp.ge.s32.totalorder %v506, %v2711
      %vm2715 = vcmp.ge.s32.totalorder %v507, %v2711
      %vm2716 = vcmp.ge.s32.totalorder %v508, %v2711
      %vm2717 = vcmp.ge.s32.totalorder %v509, %v2711
      %vm2718 = vcmp.ge.s32.totalorder %v510, %v2711
      %vm2719 = vcmp.ge.s32.totalorder %v511, %v2711
      %vm2720 = vcmp.ge.s32.totalorder %v512, %v2711
      %vm2721 = vcmp.ge.s32.totalorder %v513, %v2711
      %vm2722 = vcmp.ge.s32.totalorder %v514, %v2711
      %vm2723 = vcmp.ge.s32.totalorder %v515, %v2711
      %vm2724 = vcmp.ge.s32.totalorder %v516, %v2711
      %vm2725 = vcmp.ge.s32.totalorder %v517, %v2711
      %vm2726 = vcmp.ge.s32.totalorder %v518, %v2711
      %vm2727 = vcmp.ge.s32.totalorder %v519, %v2711
      %v2728 = vsel %vm2712, 1, 0
      %v2729 = vsel %vm2713, 1, 0
      %v2730 = vsel %vm2714, 1, 0
      %v2731 = vsel %vm2715, 1, 0
      %v2732 = vsel %vm2716, 1, 0
      %v2733 = vsel %vm2717, 1, 0
      %v2734 = vsel %vm2718, 1, 0
      %v2735 = vsel %vm2719, 1, 0
      %v2736 = vsel %vm2720, 1, 0
      %v2737 = vsel %vm2721, 1, 0
      %v2738 = vsel %vm2722, 1, 0
      %v2739 = vsel %vm2723, 1, 0
      %v2740 = vsel %vm2724, 1, 0
      %v2741 = vsel %vm2725, 1, 0
      %v2742 = vsel %vm2726, 1, 0
      %v2743 = vsel %vm2727, 1, 0
      %v2744 = vsel %vm483, %v2728, 0
      %v2745 = vsel %vm483, %v2729, 0
      %v2746 = vsel %vm483, %v2730, 0
      %v2747 = vsel %vm483, %v2731, 0
      %v2748 = vsel %vm483, %v2732, 0
      %v2749 = vadd.s32 %v2744, %v2748
      %v2750 = vsel %vm483, %v2733, 0
      %v2751 = vadd.s32 %v2745, %v2750
      %v2752 = vsel %vm483, %v2734, 0
      %v2753 = vadd.s32 %v2746, %v2752
      %v2754 = vsel %vm483, %v2735, 0
      %v2755 = vadd.s32 %v2747, %v2754
      %v2756 = vsel %vm483, %v2736, 0
      %v2757 = vadd.s32 %v2749, %v2756
      %v2758 = vsel %vm483, %v2737, 0
      %v2759 = vadd.s32 %v2751, %v2758
      %v2760 = vsel %vm483, %v2738, 0
      %v2761 = vadd.s32 %v2753, %v2760
      %v2762 = vsel %vm483, %v2739, 0
      %v2763 = vadd.s32 %v2755, %v2762
      %v2764 = vsel %vm483, %v2740, 0
      %v2765 = vadd.s32 %v2757, %v2764
      %v2766 = vsel %vm483, %v2741, 0
      %v2767 = vadd.s32 %v2759, %v2766
      %v2768 = vsel %vm483, %v2742, 0
      %v2769 = vadd.s32 %v2761, %v2768
      %v2770 = vsel %vm483, %v2743, 0
      %v2771 = vadd.s32 %v2763, %v2770
      %v2772 = vadd.s32 %v2765, %v2767
      %v2773 = vadd.s32 %v2769, %v2771
      %v2774 = vadd.s32 %v2772, %v2773
      %v2775 = vand.u32 %v2774, 65535
      %v2776 = vshrl.u32 %v2774, 16
      %v2777 = vcvt.s32.f32 %v2775
      %v2778 = vcvt.s32.f32 %v2776
      %2779 = vadd.xlane.f32.xlu0 %v2777
      %v2780 = vpop.xlane.xlu0 %2779
      %2781 = vadd.xlane.f32.xlu0 %v2778
      %v2782 = vpop.xlane.xlu0 %2781
      %v2783 = vcvt.f32.s32 %v2780
      %v2784 = vcvt.f32.s32 %v2782
      %v2785 = vshll.u32 %v2784, 16
      %v2786 = vadd.s32 %v2785, %v2783
      %v2787 = vrot.slane %v2786, 4
      %v2788 = vadd.s32 %v2786, %v2787
      %v2789 = vrot.slane %v2788, 2
      %v2790 = vadd.s32 %v2788, %v2789
      %v2791 = vrot.slane %v2790, 1
      %v2792 = vadd.s32 %v2790, %v2791
      %s2793 = vtos %v2792
      %v2794 = vstv %s2627
      %vm2795 = vcmp.ge.s32.totalorder %v504, %v2794
      %vm2796 = vcmp.ge.s32.totalorder %v505, %v2794
      %vm2797 = vcmp.ge.s32.totalorder %v506, %v2794
      %vm2798 = vcmp.ge.s32.totalorder %v507, %v2794
      %vm2799 = vcmp.ge.s32.totalorder %v508, %v2794
      %vm2800 = vcmp.ge.s32.totalorder %v509, %v2794
      %vm2801 = vcmp.ge.s32.totalorder %v510, %v2794
      %vm2802 = vcmp.ge.s32.totalorder %v511, %v2794
      %vm2803 = vcmp.ge.s32.totalorder %v512, %v2794
      %vm2804 = vcmp.ge.s32.totalorder %v513, %v2794
      %vm2805 = vcmp.ge.s32.totalorder %v514, %v2794
      %vm2806 = vcmp.ge.s32.totalorder %v515, %v2794
      %vm2807 = vcmp.ge.s32.totalorder %v516, %v2794
      %vm2808 = vcmp.ge.s32.totalorder %v517, %v2794
      %vm2809 = vcmp.ge.s32.totalorder %v518, %v2794
      %vm2810 = vcmp.ge.s32.totalorder %v519, %v2794
      %v2811 = vsel %vm2795, 1, 0
      %v2812 = vsel %vm2796, 1, 0
      %v2813 = vsel %vm2797, 1, 0
      %v2814 = vsel %vm2798, 1, 0
      %v2815 = vsel %vm2799, 1, 0
      %v2816 = vsel %vm2800, 1, 0
      %v2817 = vsel %vm2801, 1, 0
      %v2818 = vsel %vm2802, 1, 0
      %v2819 = vsel %vm2803, 1, 0
      %v2820 = vsel %vm2804, 1, 0
      %v2821 = vsel %vm2805, 1, 0
      %v2822 = vsel %vm2806, 1, 0
      %v2823 = vsel %vm2807, 1, 0
      %v2824 = vsel %vm2808, 1, 0
      %v2825 = vsel %vm2809, 1, 0
      %v2826 = vsel %vm2810, 1, 0
      %v2827 = vsel %vm483, %v2811, 0
      %v2828 = vsel %vm483, %v2812, 0
      %v2829 = vsel %vm483, %v2813, 0
      %v2830 = vsel %vm483, %v2814, 0
      %v2831 = vsel %vm483, %v2815, 0
      %v2832 = vadd.s32 %v2827, %v2831
      %v2833 = vsel %vm483, %v2816, 0
      %v2834 = vadd.s32 %v2828, %v2833
      %v2835 = vsel %vm483, %v2817, 0
      %v2836 = vadd.s32 %v2829, %v2835
      %v2837 = vsel %vm483, %v2818, 0
      %v2838 = vadd.s32 %v2830, %v2837
      %v2839 = vsel %vm483, %v2819, 0
      %v2840 = vadd.s32 %v2832, %v2839
      %v2841 = vsel %vm483, %v2820, 0
      %v2842 = vadd.s32 %v2834, %v2841
      %v2843 = vsel %vm483, %v2821, 0
      %v2844 = vadd.s32 %v2836, %v2843
      %v2845 = vsel %vm483, %v2822, 0
      %v2846 = vadd.s32 %v2838, %v2845
      %v2847 = vsel %vm483, %v2823, 0
      %v2848 = vadd.s32 %v2840, %v2847
      %v2849 = vsel %vm483, %v2824, 0
      %v2850 = vadd.s32 %v2842, %v2849
      %v2851 = vsel %vm483, %v2825, 0
      %v2852 = vadd.s32 %v2844, %v2851
      %v2853 = vsel %vm483, %v2826, 0
      %v2854 = vadd.s32 %v2846, %v2853
      %v2855 = vadd.s32 %v2848, %v2850
      %v2856 = vadd.s32 %v2852, %v2854
      %v2857 = vadd.s32 %v2855, %v2856
      %v2858 = vand.u32 %v2857, 65535
      %v2859 = vshrl.u32 %v2857, 16
      %v2860 = vcvt.s32.f32 %v2858
      %v2861 = vcvt.s32.f32 %v2859
      %2862 = vadd.xlane.f32.xlu0 %v2860
      %v2863 = vpop.xlane.xlu0 %2862
      %2864 = vadd.xlane.f32.xlu0 %v2861
      %v2865 = vpop.xlane.xlu0 %2864
      %v2866 = vcvt.f32.s32 %v2863
      %v2867 = vcvt.f32.s32 %v2865
      %v2868 = vshll.u32 %v2867, 16
      %v2869 = vadd.s32 %v2868, %v2866
      %v2870 = vrot.slane %v2869, 4
      %v2871 = vadd.s32 %v2869, %v2870
      %v2872 = vrot.slane %v2871, 2
      %v2873 = vadd.s32 %v2871, %v2872
      %v2874 = vrot.slane %v2873, 1
      %v2875 = vadd.s32 %v2873, %v2874
      %s2876 = vtos %v2875
      %p2877 = scmp.ge.s32.totalorder %s2710, 5
      %s2878 = scalar_select %p2877, 1, 0
      %p2879 = scmp.ge.s32.totalorder %s2793, 5
      %s2880 = scalar_select %p2879, 1, 0
      %s2881 = sadd.s32 %s2878, %s2880
      %p2882 = scmp.ge.s32.totalorder %s2876, 5
      %s2883 = scalar_select %p2882, 1, 0
      %s2884 = sadd.s32 %s2881, %s2883
      %s2885 = sshll.u32 %s2884, 13
      %s2886 = sor.u32 %s2624, %s2885
      %s2887 = sor.u32 %s2886, 2048
      %s2888 = sor.u32 %s2886, 4096
      %s2889 = sor.u32 %s2886, 6144
      %v2890 = vstv %s2887
      %vm2891 = vcmp.ge.s32.totalorder %v504, %v2890
      %vm2892 = vcmp.ge.s32.totalorder %v505, %v2890
      %vm2893 = vcmp.ge.s32.totalorder %v506, %v2890
      %vm2894 = vcmp.ge.s32.totalorder %v507, %v2890
      %vm2895 = vcmp.ge.s32.totalorder %v508, %v2890
      %vm2896 = vcmp.ge.s32.totalorder %v509, %v2890
      %vm2897 = vcmp.ge.s32.totalorder %v510, %v2890
      %vm2898 = vcmp.ge.s32.totalorder %v511, %v2890
      %vm2899 = vcmp.ge.s32.totalorder %v512, %v2890
      %vm2900 = vcmp.ge.s32.totalorder %v513, %v2890
      %vm2901 = vcmp.ge.s32.totalorder %v514, %v2890
      %vm2902 = vcmp.ge.s32.totalorder %v515, %v2890
      %vm2903 = vcmp.ge.s32.totalorder %v516, %v2890
      %vm2904 = vcmp.ge.s32.totalorder %v517, %v2890
      %vm2905 = vcmp.ge.s32.totalorder %v518, %v2890
      %vm2906 = vcmp.ge.s32.totalorder %v519, %v2890
      %v2907 = vsel %vm2891, 1, 0
      %v2908 = vsel %vm2892, 1, 0
      %v2909 = vsel %vm2893, 1, 0
      %v2910 = vsel %vm2894, 1, 0
      %v2911 = vsel %vm2895, 1, 0
      %v2912 = vsel %vm2896, 1, 0
      %v2913 = vsel %vm2897, 1, 0
      %v2914 = vsel %vm2898, 1, 0
      %v2915 = vsel %vm2899, 1, 0
      %v2916 = vsel %vm2900, 1, 0
      %v2917 = vsel %vm2901, 1, 0
      %v2918 = vsel %vm2902, 1, 0
      %v2919 = vsel %vm2903, 1, 0
      %v2920 = vsel %vm2904, 1, 0
      %v2921 = vsel %vm2905, 1, 0
      %v2922 = vsel %vm2906, 1, 0
      %v2923 = vsel %vm483, %v2907, 0
      %v2924 = vsel %vm483, %v2908, 0
      %v2925 = vsel %vm483, %v2909, 0
      %v2926 = vsel %vm483, %v2910, 0
      %v2927 = vsel %vm483, %v2911, 0
      %v2928 = vadd.s32 %v2923, %v2927
      %v2929 = vsel %vm483, %v2912, 0
      %v2930 = vadd.s32 %v2924, %v2929
      %v2931 = vsel %vm483, %v2913, 0
      %v2932 = vadd.s32 %v2925, %v2931
      %v2933 = vsel %vm483, %v2914, 0
      %v2934 = vadd.s32 %v2926, %v2933
      %v2935 = vsel %vm483, %v2915, 0
      %v2936 = vadd.s32 %v2928, %v2935
      %v2937 = vsel %vm483, %v2916, 0
      %v2938 = vadd.s32 %v2930, %v2937
      %v2939 = vsel %vm483, %v2917, 0
      %v2940 = vadd.s32 %v2932, %v2939
      %v2941 = vsel %vm483, %v2918, 0
      %v2942 = vadd.s32 %v2934, %v2941
      %v2943 = vsel %vm483, %v2919, 0
      %v2944 = vadd.s32 %v2936, %v2943
      %v2945 = vsel %vm483, %v2920, 0
      %v2946 = vadd.s32 %v2938, %v2945
      %v2947 = vsel %vm483, %v2921, 0
      %v2948 = vadd.s32 %v2940, %v2947
      %v2949 = vsel %vm483, %v2922, 0
      %v2950 = vadd.s32 %v2942, %v2949
      %v2951 = vadd.s32 %v2944, %v2946
      %v2952 = vadd.s32 %v2948, %v2950
      %v2953 = vadd.s32 %v2951, %v2952
      %v2954 = vand.u32 %v2953, 65535
      %v2955 = vshrl.u32 %v2953, 16
      %v2956 = vcvt.s32.f32 %v2954
      %v2957 = vcvt.s32.f32 %v2955
      %2958 = vadd.xlane.f32.xlu0 %v2956
      %v2959 = vpop.xlane.xlu0 %2958
      %2960 = vadd.xlane.f32.xlu0 %v2957
      %v2961 = vpop.xlane.xlu0 %2960
      %v2962 = vcvt.f32.s32 %v2959
      %v2963 = vcvt.f32.s32 %v2961
      %v2964 = vshll.u32 %v2963, 16
      %v2965 = vadd.s32 %v2964, %v2962
      %v2966 = vrot.slane %v2965, 4
      %v2967 = vadd.s32 %v2965, %v2966
      %v2968 = vrot.slane %v2967, 2
      %v2969 = vadd.s32 %v2967, %v2968
      %v2970 = vrot.slane %v2969, 1
      %v2971 = vadd.s32 %v2969, %v2970
      %s2972 = vtos %v2971
      %v2973 = vstv %s2888
      %vm2974 = vcmp.ge.s32.totalorder %v504, %v2973
      %vm2975 = vcmp.ge.s32.totalorder %v505, %v2973
      %vm2976 = vcmp.ge.s32.totalorder %v506, %v2973
      %vm2977 = vcmp.ge.s32.totalorder %v507, %v2973
      %vm2978 = vcmp.ge.s32.totalorder %v508, %v2973
      %vm2979 = vcmp.ge.s32.totalorder %v509, %v2973
      %vm2980 = vcmp.ge.s32.totalorder %v510, %v2973
      %vm2981 = vcmp.ge.s32.totalorder %v511, %v2973
      %vm2982 = vcmp.ge.s32.totalorder %v512, %v2973
      %vm2983 = vcmp.ge.s32.totalorder %v513, %v2973
      %vm2984 = vcmp.ge.s32.totalorder %v514, %v2973
      %vm2985 = vcmp.ge.s32.totalorder %v515, %v2973
      %vm2986 = vcmp.ge.s32.totalorder %v516, %v2973
      %vm2987 = vcmp.ge.s32.totalorder %v517, %v2973
      %vm2988 = vcmp.ge.s32.totalorder %v518, %v2973
      %vm2989 = vcmp.ge.s32.totalorder %v519, %v2973
      %v2990 = vsel %vm2974, 1, 0
      %v2991 = vsel %vm2975, 1, 0
      %v2992 = vsel %vm2976, 1, 0
      %v2993 = vsel %vm2977, 1, 0
      %v2994 = vsel %vm2978, 1, 0
      %v2995 = vsel %vm2979, 1, 0
      %v2996 = vsel %vm2980, 1, 0
      %v2997 = vsel %vm2981, 1, 0
      %v2998 = vsel %vm2982, 1, 0
      %v2999 = vsel %vm2983, 1, 0
      %v3000 = vsel %vm2984, 1, 0
      %v3001 = vsel %vm2985, 1, 0
      %v3002 = vsel %vm2986, 1, 0
      %v3003 = vsel %vm2987, 1, 0
      %v3004 = vsel %vm2988, 1, 0
      %v3005 = vsel %vm2989, 1, 0
      %v3006 = vsel %vm483, %v2990, 0
      %v3007 = vsel %vm483, %v2991, 0
      %v3008 = vsel %vm483, %v2992, 0
      %v3009 = vsel %vm483, %v2993, 0
      %v3010 = vsel %vm483, %v2994, 0
      %v3011 = vadd.s32 %v3006, %v3010
      %v3012 = vsel %vm483, %v2995, 0
      %v3013 = vadd.s32 %v3007, %v3012
      %v3014 = vsel %vm483, %v2996, 0
      %v3015 = vadd.s32 %v3008, %v3014
      %v3016 = vsel %vm483, %v2997, 0
      %v3017 = vadd.s32 %v3009, %v3016
      %v3018 = vsel %vm483, %v2998, 0
      %v3019 = vadd.s32 %v3011, %v3018
      %v3020 = vsel %vm483, %v2999, 0
      %v3021 = vadd.s32 %v3013, %v3020
      %v3022 = vsel %vm483, %v3000, 0
      %v3023 = vadd.s32 %v3015, %v3022
      %v3024 = vsel %vm483, %v3001, 0
      %v3025 = vadd.s32 %v3017, %v3024
      %v3026 = vsel %vm483, %v3002, 0
      %v3027 = vadd.s32 %v3019, %v3026
      %v3028 = vsel %vm483, %v3003, 0
      %v3029 = vadd.s32 %v3021, %v3028
      %v3030 = vsel %vm483, %v3004, 0
      %v3031 = vadd.s32 %v3023, %v3030
      %v3032 = vsel %vm483, %v3005, 0
      %v3033 = vadd.s32 %v3025, %v3032
      %v3034 = vadd.s32 %v3027, %v3029
      %v3035 = vadd.s32 %v3031, %v3033
      %v3036 = vadd.s32 %v3034, %v3035
      %v3037 = vand.u32 %v3036, 65535
      %v3038 = vshrl.u32 %v3036, 16
      %v3039 = vcvt.s32.f32 %v3037
      %v3040 = vcvt.s32.f32 %v3038
      %3041 = vadd.xlane.f32.xlu0 %v3039
      %v3042 = vpop.xlane.xlu0 %3041
      %3043 = vadd.xlane.f32.xlu0 %v3040
      %v3044 = vpop.xlane.xlu0 %3043
      %v3045 = vcvt.f32.s32 %v3042
      %v3046 = vcvt.f32.s32 %v3044
      %v3047 = vshll.u32 %v3046, 16
      %v3048 = vadd.s32 %v3047, %v3045
      %v3049 = vrot.slane %v3048, 4
      %v3050 = vadd.s32 %v3048, %v3049
      %v3051 = vrot.slane %v3050, 2
      %v3052 = vadd.s32 %v3050, %v3051
      %v3053 = vrot.slane %v3052, 1
      %v3054 = vadd.s32 %v3052, %v3053
      %s3055 = vtos %v3054
      %v3056 = vstv %s2889
      %vm3057 = vcmp.ge.s32.totalorder %v504, %v3056
      %vm3058 = vcmp.ge.s32.totalorder %v505, %v3056
      %vm3059 = vcmp.ge.s32.totalorder %v506, %v3056
      %vm3060 = vcmp.ge.s32.totalorder %v507, %v3056
      %vm3061 = vcmp.ge.s32.totalorder %v508, %v3056
      %vm3062 = vcmp.ge.s32.totalorder %v509, %v3056
      %vm3063 = vcmp.ge.s32.totalorder %v510, %v3056
      %vm3064 = vcmp.ge.s32.totalorder %v511, %v3056
      %vm3065 = vcmp.ge.s32.totalorder %v512, %v3056
      %vm3066 = vcmp.ge.s32.totalorder %v513, %v3056
      %vm3067 = vcmp.ge.s32.totalorder %v514, %v3056
      %vm3068 = vcmp.ge.s32.totalorder %v515, %v3056
      %vm3069 = vcmp.ge.s32.totalorder %v516, %v3056
      %vm3070 = vcmp.ge.s32.totalorder %v517, %v3056
      %vm3071 = vcmp.ge.s32.totalorder %v518, %v3056
      %vm3072 = vcmp.ge.s32.totalorder %v519, %v3056
      %v3073 = vsel %vm3057, 1, 0
      %v3074 = vsel %vm3058, 1, 0
      %v3075 = vsel %vm3059, 1, 0
      %v3076 = vsel %vm3060, 1, 0
      %v3077 = vsel %vm3061, 1, 0
      %v3078 = vsel %vm3062, 1, 0
      %v3079 = vsel %vm3063, 1, 0
      %v3080 = vsel %vm3064, 1, 0
      %v3081 = vsel %vm3065, 1, 0
      %v3082 = vsel %vm3066, 1, 0
      %v3083 = vsel %vm3067, 1, 0
      %v3084 = vsel %vm3068, 1, 0
      %v3085 = vsel %vm3069, 1, 0
      %v3086 = vsel %vm3070, 1, 0
      %v3087 = vsel %vm3071, 1, 0
      %v3088 = vsel %vm3072, 1, 0
      %v3089 = vsel %vm483, %v3073, 0
      %v3090 = vsel %vm483, %v3074, 0
      %v3091 = vsel %vm483, %v3075, 0
      %v3092 = vsel %vm483, %v3076, 0
      %v3093 = vsel %vm483, %v3077, 0
      %v3094 = vadd.s32 %v3089, %v3093
      %v3095 = vsel %vm483, %v3078, 0
      %v3096 = vadd.s32 %v3090, %v3095
      %v3097 = vsel %vm483, %v3079, 0
      %v3098 = vadd.s32 %v3091, %v3097
      %v3099 = vsel %vm483, %v3080, 0
      %v3100 = vadd.s32 %v3092, %v3099
      %v3101 = vsel %vm483, %v3081, 0
      %v3102 = vadd.s32 %v3094, %v3101
      %v3103 = vsel %vm483, %v3082, 0
      %v3104 = vadd.s32 %v3096, %v3103
      %v3105 = vsel %vm483, %v3083, 0
      %v3106 = vadd.s32 %v3098, %v3105
      %v3107 = vsel %vm483, %v3084, 0
      %v3108 = vadd.s32 %v3100, %v3107
      %v3109 = vsel %vm483, %v3085, 0
      %v3110 = vadd.s32 %v3102, %v3109
      %v3111 = vsel %vm483, %v3086, 0
      %v3112 = vadd.s32 %v3104, %v3111
      %v3113 = vsel %vm483, %v3087, 0
      %v3114 = vadd.s32 %v3106, %v3113
      %v3115 = vsel %vm483, %v3088, 0
      %v3116 = vadd.s32 %v3108, %v3115
      %v3117 = vadd.s32 %v3110, %v3112
      %v3118 = vadd.s32 %v3114, %v3116
      %v3119 = vadd.s32 %v3117, %v3118
      %v3120 = vand.u32 %v3119, 65535
      %v3121 = vshrl.u32 %v3119, 16
      %v3122 = vcvt.s32.f32 %v3120
      %v3123 = vcvt.s32.f32 %v3121
      %3124 = vadd.xlane.f32.xlu0 %v3122
      %v3125 = vpop.xlane.xlu0 %3124
      %3126 = vadd.xlane.f32.xlu0 %v3123
      %v3127 = vpop.xlane.xlu0 %3126
      %v3128 = vcvt.f32.s32 %v3125
      %v3129 = vcvt.f32.s32 %v3127
      %v3130 = vshll.u32 %v3129, 16
      %v3131 = vadd.s32 %v3130, %v3128
      %v3132 = vrot.slane %v3131, 4
      %v3133 = vadd.s32 %v3131, %v3132
      %v3134 = vrot.slane %v3133, 2
      %v3135 = vadd.s32 %v3133, %v3134
      %v3136 = vrot.slane %v3135, 1
      %v3137 = vadd.s32 %v3135, %v3136
      %s3138 = vtos %v3137
      %p3139 = scmp.ge.s32.totalorder %s2972, 5
      %s3140 = scalar_select %p3139, 1, 0
      %p3141 = scmp.ge.s32.totalorder %s3055, 5
      %s3142 = scalar_select %p3141, 1, 0
      %s3143 = sadd.s32 %s3140, %s3142
      %p3144 = scmp.ge.s32.totalorder %s3138, 5
      %s3145 = scalar_select %p3144, 1, 0
      %s3146 = sadd.s32 %s3143, %s3145
      %s3147 = sshll.u32 %s3146, 11
      %s3148 = sor.u32 %s2886, %s3147
      %s3149 = sor.u32 %s3148, 512
      %s3150 = sor.u32 %s3148, 1024
      %s3151 = sor.u32 %s3148, 1536
      %v3152 = vstv %s3149
      %vm3153 = vcmp.ge.s32.totalorder %v504, %v3152
      %vm3154 = vcmp.ge.s32.totalorder %v505, %v3152
      %vm3155 = vcmp.ge.s32.totalorder %v506, %v3152
      %vm3156 = vcmp.ge.s32.totalorder %v507, %v3152
      %vm3157 = vcmp.ge.s32.totalorder %v508, %v3152
      %vm3158 = vcmp.ge.s32.totalorder %v509, %v3152
      %vm3159 = vcmp.ge.s32.totalorder %v510, %v3152
      %vm3160 = vcmp.ge.s32.totalorder %v511, %v3152
      %vm3161 = vcmp.ge.s32.totalorder %v512, %v3152
      %vm3162 = vcmp.ge.s32.totalorder %v513, %v3152
      %vm3163 = vcmp.ge.s32.totalorder %v514, %v3152
      %vm3164 = vcmp.ge.s32.totalorder %v515, %v3152
      %vm3165 = vcmp.ge.s32.totalorder %v516, %v3152
      %vm3166 = vcmp.ge.s32.totalorder %v517, %v3152
      %vm3167 = vcmp.ge.s32.totalorder %v518, %v3152
      %vm3168 = vcmp.ge.s32.totalorder %v519, %v3152
      %v3169 = vsel %vm3153, 1, 0
      %v3170 = vsel %vm3154, 1, 0
      %v3171 = vsel %vm3155, 1, 0
      %v3172 = vsel %vm3156, 1, 0
      %v3173 = vsel %vm3157, 1, 0
      %v3174 = vsel %vm3158, 1, 0
      %v3175 = vsel %vm3159, 1, 0
      %v3176 = vsel %vm3160, 1, 0
      %v3177 = vsel %vm3161, 1, 0
      %v3178 = vsel %vm3162, 1, 0
      %v3179 = vsel %vm3163, 1, 0
      %v3180 = vsel %vm3164, 1, 0
      %v3181 = vsel %vm3165, 1, 0
      %v3182 = vsel %vm3166, 1, 0
      %v3183 = vsel %vm3167, 1, 0
      %v3184 = vsel %vm3168, 1, 0
      %v3185 = vsel %vm483, %v3169, 0
      %v3186 = vsel %vm483, %v3170, 0
      %v3187 = vsel %vm483, %v3171, 0
      %v3188 = vsel %vm483, %v3172, 0
      %v3189 = vsel %vm483, %v3173, 0
      %v3190 = vadd.s32 %v3185, %v3189
      %v3191 = vsel %vm483, %v3174, 0
      %v3192 = vadd.s32 %v3186, %v3191
      %v3193 = vsel %vm483, %v3175, 0
      %v3194 = vadd.s32 %v3187, %v3193
      %v3195 = vsel %vm483, %v3176, 0
      %v3196 = vadd.s32 %v3188, %v3195
      %v3197 = vsel %vm483, %v3177, 0
      %v3198 = vadd.s32 %v3190, %v3197
      %v3199 = vsel %vm483, %v3178, 0
      %v3200 = vadd.s32 %v3192, %v3199
      %v3201 = vsel %vm483, %v3179, 0
      %v3202 = vadd.s32 %v3194, %v3201
      %v3203 = vsel %vm483, %v3180, 0
      %v3204 = vadd.s32 %v3196, %v3203
      %v3205 = vsel %vm483, %v3181, 0
      %v3206 = vadd.s32 %v3198, %v3205
      %v3207 = vsel %vm483, %v3182, 0
      %v3208 = vadd.s32 %v3200, %v3207
      %v3209 = vsel %vm483, %v3183, 0
      %v3210 = vadd.s32 %v3202, %v3209
      %v3211 = vsel %vm483, %v3184, 0
      %v3212 = vadd.s32 %v3204, %v3211
      %v3213 = vadd.s32 %v3206, %v3208
      %v3214 = vadd.s32 %v3210, %v3212
      %v3215 = vadd.s32 %v3213, %v3214
      %v3216 = vand.u32 %v3215, 65535
      %v3217 = vshrl.u32 %v3215, 16
      %v3218 = vcvt.s32.f32 %v3216
      %v3219 = vcvt.s32.f32 %v3217
      %3220 = vadd.xlane.f32.xlu0 %v3218
      %v3221 = vpop.xlane.xlu0 %3220
      %3222 = vadd.xlane.f32.xlu0 %v3219
      %v3223 = vpop.xlane.xlu0 %3222
      %v3224 = vcvt.f32.s32 %v3221
      %v3225 = vcvt.f32.s32 %v3223
      %v3226 = vshll.u32 %v3225, 16
      %v3227 = vadd.s32 %v3226, %v3224
      %v3228 = vrot.slane %v3227, 4
      %v3229 = vadd.s32 %v3227, %v3228
      %v3230 = vrot.slane %v3229, 2
      %v3231 = vadd.s32 %v3229, %v3230
      %v3232 = vrot.slane %v3231, 1
      %v3233 = vadd.s32 %v3231, %v3232
      %s3234 = vtos %v3233
      %v3235 = vstv %s3150
      %vm3236 = vcmp.ge.s32.totalorder %v504, %v3235
      %vm3237 = vcmp.ge.s32.totalorder %v505, %v3235
      %vm3238 = vcmp.ge.s32.totalorder %v506, %v3235
      %vm3239 = vcmp.ge.s32.totalorder %v507, %v3235
      %vm3240 = vcmp.ge.s32.totalorder %v508, %v3235
      %vm3241 = vcmp.ge.s32.totalorder %v509, %v3235
      %vm3242 = vcmp.ge.s32.totalorder %v510, %v3235
      %vm3243 = vcmp.ge.s32.totalorder %v511, %v3235
      %vm3244 = vcmp.ge.s32.totalorder %v512, %v3235
      %vm3245 = vcmp.ge.s32.totalorder %v513, %v3235
      %vm3246 = vcmp.ge.s32.totalorder %v514, %v3235
      %vm3247 = vcmp.ge.s32.totalorder %v515, %v3235
      %vm3248 = vcmp.ge.s32.totalorder %v516, %v3235
      %vm3249 = vcmp.ge.s32.totalorder %v517, %v3235
      %vm3250 = vcmp.ge.s32.totalorder %v518, %v3235
      %vm3251 = vcmp.ge.s32.totalorder %v519, %v3235
      %v3252 = vsel %vm3236, 1, 0
      %v3253 = vsel %vm3237, 1, 0
      %v3254 = vsel %vm3238, 1, 0
      %v3255 = vsel %vm3239, 1, 0
      %v3256 = vsel %vm3240, 1, 0
      %v3257 = vsel %vm3241, 1, 0
      %v3258 = vsel %vm3242, 1, 0
      %v3259 = vsel %vm3243, 1, 0
      %v3260 = vsel %vm3244, 1, 0
      %v3261 = vsel %vm3245, 1, 0
      %v3262 = vsel %vm3246, 1, 0
      %v3263 = vsel %vm3247, 1, 0
      %v3264 = vsel %vm3248, 1, 0
      %v3265 = vsel %vm3249, 1, 0
      %v3266 = vsel %vm3250, 1, 0
      %v3267 = vsel %vm3251, 1, 0
      %v3268 = vsel %vm483, %v3252, 0
      %v3269 = vsel %vm483, %v3253, 0
      %v3270 = vsel %vm483, %v3254, 0
      %v3271 = vsel %vm483, %v3255, 0
      %v3272 = vsel %vm483, %v3256, 0
      %v3273 = vadd.s32 %v3268, %v3272
      %v3274 = vsel %vm483, %v3257, 0
      %v3275 = vadd.s32 %v3269, %v3274
      %v3276 = vsel %vm483, %v3258, 0
      %v3277 = vadd.s32 %v3270, %v3276
      %v3278 = vsel %vm483, %v3259, 0
      %v3279 = vadd.s32 %v3271, %v3278
      %v3280 = vsel %vm483, %v3260, 0
      %v3281 = vadd.s32 %v3273, %v3280
      %v3282 = vsel %vm483, %v3261, 0
      %v3283 = vadd.s32 %v3275, %v3282
      %v3284 = vsel %vm483, %v3262, 0
      %v3285 = vadd.s32 %v3277, %v3284
      %v3286 = vsel %vm483, %v3263, 0
      %v3287 = vadd.s32 %v3279, %v3286
      %v3288 = vsel %vm483, %v3264, 0
      %v3289 = vadd.s32 %v3281, %v3288
      %v3290 = vsel %vm483, %v3265, 0
      %v3291 = vadd.s32 %v3283, %v3290
      %v3292 = vsel %vm483, %v3266, 0
      %v3293 = vadd.s32 %v3285, %v3292
      %v3294 = vsel %vm483, %v3267, 0
      %v3295 = vadd.s32 %v3287, %v3294
      %v3296 = vadd.s32 %v3289, %v3291
      %v3297 = vadd.s32 %v3293, %v3295
      %v3298 = vadd.s32 %v3296, %v3297
      %v3299 = vand.u32 %v3298, 65535
      %v3300 = vshrl.u32 %v3298, 16
      %v3301 = vcvt.s32.f32 %v3299
      %v3302 = vcvt.s32.f32 %v3300
      %3303 = vadd.xlane.f32.xlu0 %v3301
      %v3304 = vpop.xlane.xlu0 %3303
      %3305 = vadd.xlane.f32.xlu0 %v3302
      %v3306 = vpop.xlane.xlu0 %3305
      %v3307 = vcvt.f32.s32 %v3304
      %v3308 = vcvt.f32.s32 %v3306
      %v3309 = vshll.u32 %v3308, 16
      %v3310 = vadd.s32 %v3309, %v3307
      %v3311 = vrot.slane %v3310, 4
      %v3312 = vadd.s32 %v3310, %v3311
      %v3313 = vrot.slane %v3312, 2
      %v3314 = vadd.s32 %v3312, %v3313
      %v3315 = vrot.slane %v3314, 1
      %v3316 = vadd.s32 %v3314, %v3315
      %s3317 = vtos %v3316
      %v3318 = vstv %s3151
      %vm3319 = vcmp.ge.s32.totalorder %v504, %v3318
      %vm3320 = vcmp.ge.s32.totalorder %v505, %v3318
      %vm3321 = vcmp.ge.s32.totalorder %v506, %v3318
      %vm3322 = vcmp.ge.s32.totalorder %v507, %v3318
      %vm3323 = vcmp.ge.s32.totalorder %v508, %v3318
      %vm3324 = vcmp.ge.s32.totalorder %v509, %v3318
      %vm3325 = vcmp.ge.s32.totalorder %v510, %v3318
      %vm3326 = vcmp.ge.s32.totalorder %v511, %v3318
      %vm3327 = vcmp.ge.s32.totalorder %v512, %v3318
      %vm3328 = vcmp.ge.s32.totalorder %v513, %v3318
      %vm3329 = vcmp.ge.s32.totalorder %v514, %v3318
      %vm3330 = vcmp.ge.s32.totalorder %v515, %v3318
      %vm3331 = vcmp.ge.s32.totalorder %v516, %v3318
      %vm3332 = vcmp.ge.s32.totalorder %v517, %v3318
      %vm3333 = vcmp.ge.s32.totalorder %v518, %v3318
      %vm3334 = vcmp.ge.s32.totalorder %v519, %v3318
      %v3335 = vsel %vm3319, 1, 0
      %v3336 = vsel %vm3320, 1, 0
      %v3337 = vsel %vm3321, 1, 0
      %v3338 = vsel %vm3322, 1, 0
      %v3339 = vsel %vm3323, 1, 0
      %v3340 = vsel %vm3324, 1, 0
      %v3341 = vsel %vm3325, 1, 0
      %v3342 = vsel %vm3326, 1, 0
      %v3343 = vsel %vm3327, 1, 0
      %v3344 = vsel %vm3328, 1, 0
      %v3345 = vsel %vm3329, 1, 0
      %v3346 = vsel %vm3330, 1, 0
      %v3347 = vsel %vm3331, 1, 0
      %v3348 = vsel %vm3332, 1, 0
      %v3349 = vsel %vm3333, 1, 0
      %v3350 = vsel %vm3334, 1, 0
      %v3351 = vsel %vm483, %v3335, 0
      %v3352 = vsel %vm483, %v3336, 0
      %v3353 = vsel %vm483, %v3337, 0
      %v3354 = vsel %vm483, %v3338, 0
      %v3355 = vsel %vm483, %v3339, 0
      %v3356 = vadd.s32 %v3351, %v3355
      %v3357 = vsel %vm483, %v3340, 0
      %v3358 = vadd.s32 %v3352, %v3357
      %v3359 = vsel %vm483, %v3341, 0
      %v3360 = vadd.s32 %v3353, %v3359
      %v3361 = vsel %vm483, %v3342, 0
      %v3362 = vadd.s32 %v3354, %v3361
      %v3363 = vsel %vm483, %v3343, 0
      %v3364 = vadd.s32 %v3356, %v3363
      %v3365 = vsel %vm483, %v3344, 0
      %v3366 = vadd.s32 %v3358, %v3365
      %v3367 = vsel %vm483, %v3345, 0
      %v3368 = vadd.s32 %v3360, %v3367
      %v3369 = vsel %vm483, %v3346, 0
      %v3370 = vadd.s32 %v3362, %v3369
      %v3371 = vsel %vm483, %v3347, 0
      %v3372 = vadd.s32 %v3364, %v3371
      %v3373 = vsel %vm483, %v3348, 0
      %v3374 = vadd.s32 %v3366, %v3373
      %v3375 = vsel %vm483, %v3349, 0
      %v3376 = vadd.s32 %v3368, %v3375
      %v3377 = vsel %vm483, %v3350, 0
      %v3378 = vadd.s32 %v3370, %v3377
      %v3379 = vadd.s32 %v3372, %v3374
      %v3380 = vadd.s32 %v3376, %v3378
      %v3381 = vadd.s32 %v3379, %v3380
      %v3382 = vand.u32 %v3381, 65535
      %v3383 = vshrl.u32 %v3381, 16
      %v3384 = vcvt.s32.f32 %v3382
      %v3385 = vcvt.s32.f32 %v3383
      %3386 = vadd.xlane.f32.xlu0 %v3384
      %v3387 = vpop.xlane.xlu0 %3386
      %3388 = vadd.xlane.f32.xlu0 %v3385
      %v3389 = vpop.xlane.xlu0 %3388
      %v3390 = vcvt.f32.s32 %v3387
      %v3391 = vcvt.f32.s32 %v3389
      %v3392 = vshll.u32 %v3391, 16
      %v3393 = vadd.s32 %v3392, %v3390
      %v3394 = vrot.slane %v3393, 4
      %v3395 = vadd.s32 %v3393, %v3394
      %v3396 = vrot.slane %v3395, 2
      %v3397 = vadd.s32 %v3395, %v3396
      %v3398 = vrot.slane %v3397, 1
      %v3399 = vadd.s32 %v3397, %v3398
      %s3400 = vtos %v3399
      %p3401 = scmp.ge.s32.totalorder %s3234, 5
      %s3402 = scalar_select %p3401, 1, 0
      %p3403 = scmp.ge.s32.totalorder %s3317, 5
      %s3404 = scalar_select %p3403, 1, 0
      %s3405 = sadd.s32 %s3402, %s3404
      %p3406 = scmp.ge.s32.totalorder %s3400, 5
      %s3407 = scalar_select %p3406, 1, 0
      %s3408 = sadd.s32 %s3405, %s3407
      %s3409 = sshll.u32 %s3408, 9
      %s3410 = sor.u32 %s3148, %s3409
      %s3411 = sor.u32 %s3410, 128
      %s3412 = sor.u32 %s3410, 256
      %s3413 = sor.u32 %s3410, 384
      %v3414 = vstv %s3411
      %vm3415 = vcmp.ge.s32.totalorder %v504, %v3414
      %vm3416 = vcmp.ge.s32.totalorder %v505, %v3414
      %vm3417 = vcmp.ge.s32.totalorder %v506, %v3414
      %vm3418 = vcmp.ge.s32.totalorder %v507, %v3414
      %vm3419 = vcmp.ge.s32.totalorder %v508, %v3414
      %vm3420 = vcmp.ge.s32.totalorder %v509, %v3414
      %vm3421 = vcmp.ge.s32.totalorder %v510, %v3414
      %vm3422 = vcmp.ge.s32.totalorder %v511, %v3414
      %vm3423 = vcmp.ge.s32.totalorder %v512, %v3414
      %vm3424 = vcmp.ge.s32.totalorder %v513, %v3414
      %vm3425 = vcmp.ge.s32.totalorder %v514, %v3414
      %vm3426 = vcmp.ge.s32.totalorder %v515, %v3414
      %vm3427 = vcmp.ge.s32.totalorder %v516, %v3414
      %vm3428 = vcmp.ge.s32.totalorder %v517, %v3414
      %vm3429 = vcmp.ge.s32.totalorder %v518, %v3414
      %vm3430 = vcmp.ge.s32.totalorder %v519, %v3414
      %v3431 = vsel %vm3415, 1, 0
      %v3432 = vsel %vm3416, 1, 0
      %v3433 = vsel %vm3417, 1, 0
      %v3434 = vsel %vm3418, 1, 0
      %v3435 = vsel %vm3419, 1, 0
      %v3436 = vsel %vm3420, 1, 0
      %v3437 = vsel %vm3421, 1, 0
      %v3438 = vsel %vm3422, 1, 0
      %v3439 = vsel %vm3423, 1, 0
      %v3440 = vsel %vm3424, 1, 0
      %v3441 = vsel %vm3425, 1, 0
      %v3442 = vsel %vm3426, 1, 0
      %v3443 = vsel %vm3427, 1, 0
      %v3444 = vsel %vm3428, 1, 0
      %v3445 = vsel %vm3429, 1, 0
      %v3446 = vsel %vm3430, 1, 0
      %v3447 = vsel %vm483, %v3431, 0
      %v3448 = vsel %vm483, %v3432, 0
      %v3449 = vsel %vm483, %v3433, 0
      %v3450 = vsel %vm483, %v3434, 0
      %v3451 = vsel %vm483, %v3435, 0
      %v3452 = vadd.s32 %v3447, %v3451
      %v3453 = vsel %vm483, %v3436, 0
      %v3454 = vadd.s32 %v3448, %v3453
      %v3455 = vsel %vm483, %v3437, 0
      %v3456 = vadd.s32 %v3449, %v3455
      %v3457 = vsel %vm483, %v3438, 0
      %v3458 = vadd.s32 %v3450, %v3457
      %v3459 = vsel %vm483, %v3439, 0
      %v3460 = vadd.s32 %v3452, %v3459
      %v3461 = vsel %vm483, %v3440, 0
      %v3462 = vadd.s32 %v3454, %v3461
      %v3463 = vsel %vm483, %v3441, 0
      %v3464 = vadd.s32 %v3456, %v3463
      %v3465 = vsel %vm483, %v3442, 0
      %v3466 = vadd.s32 %v3458, %v3465
      %v3467 = vsel %vm483, %v3443, 0
      %v3468 = vadd.s32 %v3460, %v3467
      %v3469 = vsel %vm483, %v3444, 0
      %v3470 = vadd.s32 %v3462, %v3469
      %v3471 = vsel %vm483, %v3445, 0
      %v3472 = vadd.s32 %v3464, %v3471
      %v3473 = vsel %vm483, %v3446, 0
      %v3474 = vadd.s32 %v3466, %v3473
      %v3475 = vadd.s32 %v3468, %v3470
      %v3476 = vadd.s32 %v3472, %v3474
      %v3477 = vadd.s32 %v3475, %v3476
      %v3478 = vand.u32 %v3477, 65535
      %v3479 = vshrl.u32 %v3477, 16
      %v3480 = vcvt.s32.f32 %v3478
      %v3481 = vcvt.s32.f32 %v3479
      %3482 = vadd.xlane.f32.xlu0 %v3480
      %v3483 = vpop.xlane.xlu0 %3482
      %3484 = vadd.xlane.f32.xlu0 %v3481
      %v3485 = vpop.xlane.xlu0 %3484
      %v3486 = vcvt.f32.s32 %v3483
      %v3487 = vcvt.f32.s32 %v3485
      %v3488 = vshll.u32 %v3487, 16
      %v3489 = vadd.s32 %v3488, %v3486
      %v3490 = vrot.slane %v3489, 4
      %v3491 = vadd.s32 %v3489, %v3490
      %v3492 = vrot.slane %v3491, 2
      %v3493 = vadd.s32 %v3491, %v3492
      %v3494 = vrot.slane %v3493, 1
      %v3495 = vadd.s32 %v3493, %v3494
      %s3496 = vtos %v3495
      %v3497 = vstv %s3412
      %vm3498 = vcmp.ge.s32.totalorder %v504, %v3497
      %vm3499 = vcmp.ge.s32.totalorder %v505, %v3497
      %vm3500 = vcmp.ge.s32.totalorder %v506, %v3497
      %vm3501 = vcmp.ge.s32.totalorder %v507, %v3497
      %vm3502 = vcmp.ge.s32.totalorder %v508, %v3497
      %vm3503 = vcmp.ge.s32.totalorder %v509, %v3497
      %vm3504 = vcmp.ge.s32.totalorder %v510, %v3497
      %vm3505 = vcmp.ge.s32.totalorder %v511, %v3497
      %vm3506 = vcmp.ge.s32.totalorder %v512, %v3497
      %vm3507 = vcmp.ge.s32.totalorder %v513, %v3497
      %vm3508 = vcmp.ge.s32.totalorder %v514, %v3497
      %vm3509 = vcmp.ge.s32.totalorder %v515, %v3497
      %vm3510 = vcmp.ge.s32.totalorder %v516, %v3497
      %vm3511 = vcmp.ge.s32.totalorder %v517, %v3497
      %vm3512 = vcmp.ge.s32.totalorder %v518, %v3497
      %vm3513 = vcmp.ge.s32.totalorder %v519, %v3497
      %v3514 = vsel %vm3498, 1, 0
      %v3515 = vsel %vm3499, 1, 0
      %v3516 = vsel %vm3500, 1, 0
      %v3517 = vsel %vm3501, 1, 0
      %v3518 = vsel %vm3502, 1, 0
      %v3519 = vsel %vm3503, 1, 0
      %v3520 = vsel %vm3504, 1, 0
      %v3521 = vsel %vm3505, 1, 0
      %v3522 = vsel %vm3506, 1, 0
      %v3523 = vsel %vm3507, 1, 0
      %v3524 = vsel %vm3508, 1, 0
      %v3525 = vsel %vm3509, 1, 0
      %v3526 = vsel %vm3510, 1, 0
      %v3527 = vsel %vm3511, 1, 0
      %v3528 = vsel %vm3512, 1, 0
      %v3529 = vsel %vm3513, 1, 0
      %v3530 = vsel %vm483, %v3514, 0
      %v3531 = vsel %vm483, %v3515, 0
      %v3532 = vsel %vm483, %v3516, 0
      %v3533 = vsel %vm483, %v3517, 0
      %v3534 = vsel %vm483, %v3518, 0
      %v3535 = vadd.s32 %v3530, %v3534
      %v3536 = vsel %vm483, %v3519, 0
      %v3537 = vadd.s32 %v3531, %v3536
      %v3538 = vsel %vm483, %v3520, 0
      %v3539 = vadd.s32 %v3532, %v3538
      %v3540 = vsel %vm483, %v3521, 0
      %v3541 = vadd.s32 %v3533, %v3540
      %v3542 = vsel %vm483, %v3522, 0
      %v3543 = vadd.s32 %v3535, %v3542
      %v3544 = vsel %vm483, %v3523, 0
      %v3545 = vadd.s32 %v3537, %v3544
      %v3546 = vsel %vm483, %v3524, 0
      %v3547 = vadd.s32 %v3539, %v3546
      %v3548 = vsel %vm483, %v3525, 0
      %v3549 = vadd.s32 %v3541, %v3548
      %v3550 = vsel %vm483, %v3526, 0
      %v3551 = vadd.s32 %v3543, %v3550
      %v3552 = vsel %vm483, %v3527, 0
      %v3553 = vadd.s32 %v3545, %v3552
      %v3554 = vsel %vm483, %v3528, 0
      %v3555 = vadd.s32 %v3547, %v3554
      %v3556 = vsel %vm483, %v3529, 0
      %v3557 = vadd.s32 %v3549, %v3556
      %v3558 = vadd.s32 %v3551, %v3553
      %v3559 = vadd.s32 %v3555, %v3557
      %v3560 = vadd.s32 %v3558, %v3559
      %v3561 = vand.u32 %v3560, 65535
      %v3562 = vshrl.u32 %v3560, 16
      %v3563 = vcvt.s32.f32 %v3561
      %v3564 = vcvt.s32.f32 %v3562
      %3565 = vadd.xlane.f32.xlu0 %v3563
      %v3566 = vpop.xlane.xlu0 %3565
      %3567 = vadd.xlane.f32.xlu0 %v3564
      %v3568 = vpop.xlane.xlu0 %3567
      %v3569 = vcvt.f32.s32 %v3566
      %v3570 = vcvt.f32.s32 %v3568
      %v3571 = vshll.u32 %v3570, 16
      %v3572 = vadd.s32 %v3571, %v3569
      %v3573 = vrot.slane %v3572, 4
      %v3574 = vadd.s32 %v3572, %v3573
      %v3575 = vrot.slane %v3574, 2
      %v3576 = vadd.s32 %v3574, %v3575
      %v3577 = vrot.slane %v3576, 1
      %v3578 = vadd.s32 %v3576, %v3577
      %s3579 = vtos %v3578
      %v3580 = vstv %s3413
      %vm3581 = vcmp.ge.s32.totalorder %v504, %v3580
      %vm3582 = vcmp.ge.s32.totalorder %v505, %v3580
      %vm3583 = vcmp.ge.s32.totalorder %v506, %v3580
      %vm3584 = vcmp.ge.s32.totalorder %v507, %v3580
      %vm3585 = vcmp.ge.s32.totalorder %v508, %v3580
      %vm3586 = vcmp.ge.s32.totalorder %v509, %v3580
      %vm3587 = vcmp.ge.s32.totalorder %v510, %v3580
      %vm3588 = vcmp.ge.s32.totalorder %v511, %v3580
      %vm3589 = vcmp.ge.s32.totalorder %v512, %v3580
      %vm3590 = vcmp.ge.s32.totalorder %v513, %v3580
      %vm3591 = vcmp.ge.s32.totalorder %v514, %v3580
      %vm3592 = vcmp.ge.s32.totalorder %v515, %v3580
      %vm3593 = vcmp.ge.s32.totalorder %v516, %v3580
      %vm3594 = vcmp.ge.s32.totalorder %v517, %v3580
      %vm3595 = vcmp.ge.s32.totalorder %v518, %v3580
      %vm3596 = vcmp.ge.s32.totalorder %v519, %v3580
      %v3597 = vsel %vm3581, 1, 0
      %v3598 = vsel %vm3582, 1, 0
      %v3599 = vsel %vm3583, 1, 0
      %v3600 = vsel %vm3584, 1, 0
      %v3601 = vsel %vm3585, 1, 0
      %v3602 = vsel %vm3586, 1, 0
      %v3603 = vsel %vm3587, 1, 0
      %v3604 = vsel %vm3588, 1, 0
      %v3605 = vsel %vm3589, 1, 0
      %v3606 = vsel %vm3590, 1, 0
      %v3607 = vsel %vm3591, 1, 0
      %v3608 = vsel %vm3592, 1, 0
      %v3609 = vsel %vm3593, 1, 0
      %v3610 = vsel %vm3594, 1, 0
      %v3611 = vsel %vm3595, 1, 0
      %v3612 = vsel %vm3596, 1, 0
      %v3613 = vsel %vm483, %v3597, 0
      %v3614 = vsel %vm483, %v3598, 0
      %v3615 = vsel %vm483, %v3599, 0
      %v3616 = vsel %vm483, %v3600, 0
      %v3617 = vsel %vm483, %v3601, 0
      %v3618 = vadd.s32 %v3613, %v3617
      %v3619 = vsel %vm483, %v3602, 0
      %v3620 = vadd.s32 %v3614, %v3619
      %v3621 = vsel %vm483, %v3603, 0
      %v3622 = vadd.s32 %v3615, %v3621
      %v3623 = vsel %vm483, %v3604, 0
      %v3624 = vadd.s32 %v3616, %v3623
      %v3625 = vsel %vm483, %v3605, 0
      %v3626 = vadd.s32 %v3618, %v3625
      %v3627 = vsel %vm483, %v3606, 0
      %v3628 = vadd.s32 %v3620, %v3627
      %v3629 = vsel %vm483, %v3607, 0
      %v3630 = vadd.s32 %v3622, %v3629
      %v3631 = vsel %vm483, %v3608, 0
      %v3632 = vadd.s32 %v3624, %v3631
      %v3633 = vsel %vm483, %v3609, 0
      %v3634 = vadd.s32 %v3626, %v3633
      %v3635 = vsel %vm483, %v3610, 0
      %v3636 = vadd.s32 %v3628, %v3635
      %v3637 = vsel %vm483, %v3611, 0
      %v3638 = vadd.s32 %v3630, %v3637
      %v3639 = vsel %vm483, %v3612, 0
      %v3640 = vadd.s32 %v3632, %v3639
      %v3641 = vadd.s32 %v3634, %v3636
      %v3642 = vadd.s32 %v3638, %v3640
      %v3643 = vadd.s32 %v3641, %v3642
      %v3644 = vand.u32 %v3643, 65535
      %v3645 = vshrl.u32 %v3643, 16
      %v3646 = vcvt.s32.f32 %v3644
      %v3647 = vcvt.s32.f32 %v3645
      %3648 = vadd.xlane.f32.xlu0 %v3646
      %v3649 = vpop.xlane.xlu0 %3648
      %3650 = vadd.xlane.f32.xlu0 %v3647
      %v3651 = vpop.xlane.xlu0 %3650
      %v3652 = vcvt.f32.s32 %v3649
      %v3653 = vcvt.f32.s32 %v3651
      %v3654 = vshll.u32 %v3653, 16
      %v3655 = vadd.s32 %v3654, %v3652
      %v3656 = vrot.slane %v3655, 4
      %v3657 = vadd.s32 %v3655, %v3656
      %v3658 = vrot.slane %v3657, 2
      %v3659 = vadd.s32 %v3657, %v3658
      %v3660 = vrot.slane %v3659, 1
      %v3661 = vadd.s32 %v3659, %v3660
      %s3662 = vtos %v3661
      %p3663 = scmp.ge.s32.totalorder %s3496, 5
      %s3664 = scalar_select %p3663, 1, 0
      %p3665 = scmp.ge.s32.totalorder %s3579, 5
      %s3666 = scalar_select %p3665, 1, 0
      %s3667 = sadd.s32 %s3664, %s3666
      %p3668 = scmp.ge.s32.totalorder %s3662, 5
      %s3669 = scalar_select %p3668, 1, 0
      %s3670 = sadd.s32 %s3667, %s3669
      %s3671 = sshll.u32 %s3670, 7
      %s3672 = sor.u32 %s3410, %s3671
      %s3673 = sor.u32 %s3672, 32
      %s3674 = sor.u32 %s3672, 64
      %s3675 = sor.u32 %s3672, 96
      %v3676 = vstv %s3673
      %vm3677 = vcmp.ge.s32.totalorder %v504, %v3676
      %vm3678 = vcmp.ge.s32.totalorder %v505, %v3676
      %vm3679 = vcmp.ge.s32.totalorder %v506, %v3676
      %vm3680 = vcmp.ge.s32.totalorder %v507, %v3676
      %vm3681 = vcmp.ge.s32.totalorder %v508, %v3676
      %vm3682 = vcmp.ge.s32.totalorder %v509, %v3676
      %vm3683 = vcmp.ge.s32.totalorder %v510, %v3676
      %vm3684 = vcmp.ge.s32.totalorder %v511, %v3676
      %vm3685 = vcmp.ge.s32.totalorder %v512, %v3676
      %vm3686 = vcmp.ge.s32.totalorder %v513, %v3676
      %vm3687 = vcmp.ge.s32.totalorder %v514, %v3676
      %vm3688 = vcmp.ge.s32.totalorder %v515, %v3676
      %vm3689 = vcmp.ge.s32.totalorder %v516, %v3676
      %vm3690 = vcmp.ge.s32.totalorder %v517, %v3676
      %vm3691 = vcmp.ge.s32.totalorder %v518, %v3676
      %vm3692 = vcmp.ge.s32.totalorder %v519, %v3676
      %v3693 = vsel %vm3677, 1, 0
      %v3694 = vsel %vm3678, 1, 0
      %v3695 = vsel %vm3679, 1, 0
      %v3696 = vsel %vm3680, 1, 0
      %v3697 = vsel %vm3681, 1, 0
      %v3698 = vsel %vm3682, 1, 0
      %v3699 = vsel %vm3683, 1, 0
      %v3700 = vsel %vm3684, 1, 0
      %v3701 = vsel %vm3685, 1, 0
      %v3702 = vsel %vm3686, 1, 0
      %v3703 = vsel %vm3687, 1, 0
      %v3704 = vsel %vm3688, 1, 0
      %v3705 = vsel %vm3689, 1, 0
      %v3706 = vsel %vm3690, 1, 0
      %v3707 = vsel %vm3691, 1, 0
      %v3708 = vsel %vm3692, 1, 0
      %v3709 = vsel %vm483, %v3693, 0
      %v3710 = vsel %vm483, %v3694, 0
      %v3711 = vsel %vm483, %v3695, 0
      %v3712 = vsel %vm483, %v3696, 0
      %v3713 = vsel %vm483, %v3697, 0
      %v3714 = vadd.s32 %v3709, %v3713
      %v3715 = vsel %vm483, %v3698, 0
      %v3716 = vadd.s32 %v3710, %v3715
      %v3717 = vsel %vm483, %v3699, 0
      %v3718 = vadd.s32 %v3711, %v3717
      %v3719 = vsel %vm483, %v3700, 0
      %v3720 = vadd.s32 %v3712, %v3719
      %v3721 = vsel %vm483, %v3701, 0
      %v3722 = vadd.s32 %v3714, %v3721
      %v3723 = vsel %vm483, %v3702, 0
      %v3724 = vadd.s32 %v3716, %v3723
      %v3725 = vsel %vm483, %v3703, 0
      %v3726 = vadd.s32 %v3718, %v3725
      %v3727 = vsel %vm483, %v3704, 0
      %v3728 = vadd.s32 %v3720, %v3727
      %v3729 = vsel %vm483, %v3705, 0
      %v3730 = vadd.s32 %v3722, %v3729
      %v3731 = vsel %vm483, %v3706, 0
      %v3732 = vadd.s32 %v3724, %v3731
      %v3733 = vsel %vm483, %v3707, 0
      %v3734 = vadd.s32 %v3726, %v3733
      %v3735 = vsel %vm483, %v3708, 0
      %v3736 = vadd.s32 %v3728, %v3735
      %v3737 = vadd.s32 %v3730, %v3732
      %v3738 = vadd.s32 %v3734, %v3736
      %v3739 = vadd.s32 %v3737, %v3738
      %v3740 = vand.u32 %v3739, 65535
      %v3741 = vshrl.u32 %v3739, 16
      %v3742 = vcvt.s32.f32 %v3740
      %v3743 = vcvt.s32.f32 %v3741
      %3744 = vadd.xlane.f32.xlu0 %v3742
      %v3745 = vpop.xlane.xlu0 %3744
      %3746 = vadd.xlane.f32.xlu0 %v3743
      %v3747 = vpop.xlane.xlu0 %3746
      %v3748 = vcvt.f32.s32 %v3745
      %v3749 = vcvt.f32.s32 %v3747
      %v3750 = vshll.u32 %v3749, 16
      %v3751 = vadd.s32 %v3750, %v3748
      %v3752 = vrot.slane %v3751, 4
      %v3753 = vadd.s32 %v3751, %v3752
      %v3754 = vrot.slane %v3753, 2
      %v3755 = vadd.s32 %v3753, %v3754
      %v3756 = vrot.slane %v3755, 1
      %v3757 = vadd.s32 %v3755, %v3756
      %s3758 = vtos %v3757
      %v3759 = vstv %s3674
      %vm3760 = vcmp.ge.s32.totalorder %v504, %v3759
      %vm3761 = vcmp.ge.s32.totalorder %v505, %v3759
      %vm3762 = vcmp.ge.s32.totalorder %v506, %v3759
      %vm3763 = vcmp.ge.s32.totalorder %v507, %v3759
      %vm3764 = vcmp.ge.s32.totalorder %v508, %v3759
      %vm3765 = vcmp.ge.s32.totalorder %v509, %v3759
      %vm3766 = vcmp.ge.s32.totalorder %v510, %v3759
      %vm3767 = vcmp.ge.s32.totalorder %v511, %v3759
      %vm3768 = vcmp.ge.s32.totalorder %v512, %v3759
      %vm3769 = vcmp.ge.s32.totalorder %v513, %v3759
      %vm3770 = vcmp.ge.s32.totalorder %v514, %v3759
      %vm3771 = vcmp.ge.s32.totalorder %v515, %v3759
      %vm3772 = vcmp.ge.s32.totalorder %v516, %v3759
      %vm3773 = vcmp.ge.s32.totalorder %v517, %v3759
      %vm3774 = vcmp.ge.s32.totalorder %v518, %v3759
      %vm3775 = vcmp.ge.s32.totalorder %v519, %v3759
      %v3776 = vsel %vm3760, 1, 0
      %v3777 = vsel %vm3761, 1, 0
      %v3778 = vsel %vm3762, 1, 0
      %v3779 = vsel %vm3763, 1, 0
      %v3780 = vsel %vm3764, 1, 0
      %v3781 = vsel %vm3765, 1, 0
      %v3782 = vsel %vm3766, 1, 0
      %v3783 = vsel %vm3767, 1, 0
      %v3784 = vsel %vm3768, 1, 0
      %v3785 = vsel %vm3769, 1, 0
      %v3786 = vsel %vm3770, 1, 0
      %v3787 = vsel %vm3771, 1, 0
      %v3788 = vsel %vm3772, 1, 0
      %v3789 = vsel %vm3773, 1, 0
      %v3790 = vsel %vm3774, 1, 0
      %v3791 = vsel %vm3775, 1, 0
      %v3792 = vsel %vm483, %v3776, 0
      %v3793 = vsel %vm483, %v3777, 0
      %v3794 = vsel %vm483, %v3778, 0
      %v3795 = vsel %vm483, %v3779, 0
      %v3796 = vsel %vm483, %v3780, 0
      %v3797 = vadd.s32 %v3792, %v3796
      %v3798 = vsel %vm483, %v3781, 0
      %v3799 = vadd.s32 %v3793, %v3798
      %v3800 = vsel %vm483, %v3782, 0
      %v3801 = vadd.s32 %v3794, %v3800
      %v3802 = vsel %vm483, %v3783, 0
      %v3803 = vadd.s32 %v3795, %v3802
      %v3804 = vsel %vm483, %v3784, 0
      %v3805 = vadd.s32 %v3797, %v3804
      %v3806 = vsel %vm483, %v3785, 0
      %v3807 = vadd.s32 %v3799, %v3806
      %v3808 = vsel %vm483, %v3786, 0
      %v3809 = vadd.s32 %v3801, %v3808
      %v3810 = vsel %vm483, %v3787, 0
      %v3811 = vadd.s32 %v3803, %v3810
      %v3812 = vsel %vm483, %v3788, 0
      %v3813 = vadd.s32 %v3805, %v3812
      %v3814 = vsel %vm483, %v3789, 0
      %v3815 = vadd.s32 %v3807, %v3814
      %v3816 = vsel %vm483, %v3790, 0
      %v3817 = vadd.s32 %v3809, %v3816
      %v3818 = vsel %vm483, %v3791, 0
      %v3819 = vadd.s32 %v3811, %v3818
      %v3820 = vadd.s32 %v3813, %v3815
      %v3821 = vadd.s32 %v3817, %v3819
      %v3822 = vadd.s32 %v3820, %v3821
      %v3823 = vand.u32 %v3822, 65535
      %v3824 = vshrl.u32 %v3822, 16
      %v3825 = vcvt.s32.f32 %v3823
      %v3826 = vcvt.s32.f32 %v3824
      %3827 = vadd.xlane.f32.xlu0 %v3825
      %v3828 = vpop.xlane.xlu0 %3827
      %3829 = vadd.xlane.f32.xlu0 %v3826
      %v3830 = vpop.xlane.xlu0 %3829
      %v3831 = vcvt.f32.s32 %v3828
      %v3832 = vcvt.f32.s32 %v3830
      %v3833 = vshll.u32 %v3832, 16
      %v3834 = vadd.s32 %v3833, %v3831
      %v3835 = vrot.slane %v3834, 4
      %v3836 = vadd.s32 %v3834, %v3835
      %v3837 = vrot.slane %v3836, 2
      %v3838 = vadd.s32 %v3836, %v3837
      %v3839 = vrot.slane %v3838, 1
      %v3840 = vadd.s32 %v3838, %v3839
      %s3841 = vtos %v3840
      %v3842 = vstv %s3675
      %vm3843 = vcmp.ge.s32.totalorder %v504, %v3842
      %vm3844 = vcmp.ge.s32.totalorder %v505, %v3842
      %vm3845 = vcmp.ge.s32.totalorder %v506, %v3842
      %vm3846 = vcmp.ge.s32.totalorder %v507, %v3842
      %vm3847 = vcmp.ge.s32.totalorder %v508, %v3842
      %vm3848 = vcmp.ge.s32.totalorder %v509, %v3842
      %vm3849 = vcmp.ge.s32.totalorder %v510, %v3842
      %vm3850 = vcmp.ge.s32.totalorder %v511, %v3842
      %vm3851 = vcmp.ge.s32.totalorder %v512, %v3842
      %vm3852 = vcmp.ge.s32.totalorder %v513, %v3842
      %vm3853 = vcmp.ge.s32.totalorder %v514, %v3842
      %vm3854 = vcmp.ge.s32.totalorder %v515, %v3842
      %vm3855 = vcmp.ge.s32.totalorder %v516, %v3842
      %vm3856 = vcmp.ge.s32.totalorder %v517, %v3842
      %vm3857 = vcmp.ge.s32.totalorder %v518, %v3842
      %vm3858 = vcmp.ge.s32.totalorder %v519, %v3842
      %v3859 = vsel %vm3843, 1, 0
      %v3860 = vsel %vm3844, 1, 0
      %v3861 = vsel %vm3845, 1, 0
      %v3862 = vsel %vm3846, 1, 0
      %v3863 = vsel %vm3847, 1, 0
      %v3864 = vsel %vm3848, 1, 0
      %v3865 = vsel %vm3849, 1, 0
      %v3866 = vsel %vm3850, 1, 0
      %v3867 = vsel %vm3851, 1, 0
      %v3868 = vsel %vm3852, 1, 0
      %v3869 = vsel %vm3853, 1, 0
      %v3870 = vsel %vm3854, 1, 0
      %v3871 = vsel %vm3855, 1, 0
      %v3872 = vsel %vm3856, 1, 0
      %v3873 = vsel %vm3857, 1, 0
      %v3874 = vsel %vm3858, 1, 0
      %v3875 = vsel %vm483, %v3859, 0
      %v3876 = vsel %vm483, %v3860, 0
      %v3877 = vsel %vm483, %v3861, 0
      %v3878 = vsel %vm483, %v3862, 0
      %v3879 = vsel %vm483, %v3863, 0
      %v3880 = vadd.s32 %v3875, %v3879
      %v3881 = vsel %vm483, %v3864, 0
      %v3882 = vadd.s32 %v3876, %v3881
      %v3883 = vsel %vm483, %v3865, 0
      %v3884 = vadd.s32 %v3877, %v3883
      %v3885 = vsel %vm483, %v3866, 0
      %v3886 = vadd.s32 %v3878, %v3885
      %v3887 = vsel %vm483, %v3867, 0
      %v3888 = vadd.s32 %v3880, %v3887
      %v3889 = vsel %vm483, %v3868, 0
      %v3890 = vadd.s32 %v3882, %v3889
      %v3891 = vsel %vm483, %v3869, 0
      %v3892 = vadd.s32 %v3884, %v3891
      %v3893 = vsel %vm483, %v3870, 0
      %v3894 = vadd.s32 %v3886, %v3893
      %v3895 = vsel %vm483, %v3871, 0
      %v3896 = vadd.s32 %v3888, %v3895
      %v3897 = vsel %vm483, %v3872, 0
      %v3898 = vadd.s32 %v3890, %v3897
      %v3899 = vsel %vm483, %v3873, 0
      %v3900 = vadd.s32 %v3892, %v3899
      %v3901 = vsel %vm483, %v3874, 0
      %v3902 = vadd.s32 %v3894, %v3901
      %v3903 = vadd.s32 %v3896, %v3898
      %v3904 = vadd.s32 %v3900, %v3902
      %v3905 = vadd.s32 %v3903, %v3904
      %v3906 = vand.u32 %v3905, 65535
      %v3907 = vshrl.u32 %v3905, 16
      %v3908 = vcvt.s32.f32 %v3906
      %v3909 = vcvt.s32.f32 %v3907
      %3910 = vadd.xlane.f32.xlu0 %v3908
      %v3911 = vpop.xlane.xlu0 %3910
      %3912 = vadd.xlane.f32.xlu0 %v3909
      %v3913 = vpop.xlane.xlu0 %3912
      %v3914 = vcvt.f32.s32 %v3911
      %v3915 = vcvt.f32.s32 %v3913
      %v3916 = vshll.u32 %v3915, 16
      %v3917 = vadd.s32 %v3916, %v3914
      %v3918 = vrot.slane %v3917, 4
      %v3919 = vadd.s32 %v3917, %v3918
      %v3920 = vrot.slane %v3919, 2
      %v3921 = vadd.s32 %v3919, %v3920
      %v3922 = vrot.slane %v3921, 1
      %v3923 = vadd.s32 %v3921, %v3922
      %s3924 = vtos %v3923
      %p3925 = scmp.ge.s32.totalorder %s3758, 5
      %s3926 = scalar_select %p3925, 1, 0
      %p3927 = scmp.ge.s32.totalorder %s3841, 5
      %s3928 = scalar_select %p3927, 1, 0
      %s3929 = sadd.s32 %s3926, %s3928
      %p3930 = scmp.ge.s32.totalorder %s3924, 5
      %s3931 = scalar_select %p3930, 1, 0
      %s3932 = sadd.s32 %s3929, %s3931
      %s3933 = sshll.u32 %s3932, 5
      %s3934 = sor.u32 %s3672, %s3933
      %s3935 = sor.u32 %s3934, 8
      %s3936 = sor.u32 %s3934, 16
      %s3937 = sor.u32 %s3934, 24
      %v3938 = vstv %s3935
      %vm3939 = vcmp.ge.s32.totalorder %v504, %v3938
      %vm3940 = vcmp.ge.s32.totalorder %v505, %v3938
      %vm3941 = vcmp.ge.s32.totalorder %v506, %v3938
      %vm3942 = vcmp.ge.s32.totalorder %v507, %v3938
      %vm3943 = vcmp.ge.s32.totalorder %v508, %v3938
      %vm3944 = vcmp.ge.s32.totalorder %v509, %v3938
      %vm3945 = vcmp.ge.s32.totalorder %v510, %v3938
      %vm3946 = vcmp.ge.s32.totalorder %v511, %v3938
      %vm3947 = vcmp.ge.s32.totalorder %v512, %v3938
      %vm3948 = vcmp.ge.s32.totalorder %v513, %v3938
      %vm3949 = vcmp.ge.s32.totalorder %v514, %v3938
      %vm3950 = vcmp.ge.s32.totalorder %v515, %v3938
      %vm3951 = vcmp.ge.s32.totalorder %v516, %v3938
      %vm3952 = vcmp.ge.s32.totalorder %v517, %v3938
      %vm3953 = vcmp.ge.s32.totalorder %v518, %v3938
      %vm3954 = vcmp.ge.s32.totalorder %v519, %v3938
      %v3955 = vsel %vm3939, 1, 0
      %v3956 = vsel %vm3940, 1, 0
      %v3957 = vsel %vm3941, 1, 0
      %v3958 = vsel %vm3942, 1, 0
      %v3959 = vsel %vm3943, 1, 0
      %v3960 = vsel %vm3944, 1, 0
      %v3961 = vsel %vm3945, 1, 0
      %v3962 = vsel %vm3946, 1, 0
      %v3963 = vsel %vm3947, 1, 0
      %v3964 = vsel %vm3948, 1, 0
      %v3965 = vsel %vm3949, 1, 0
      %v3966 = vsel %vm3950, 1, 0
      %v3967 = vsel %vm3951, 1, 0
      %v3968 = vsel %vm3952, 1, 0
      %v3969 = vsel %vm3953, 1, 0
      %v3970 = vsel %vm3954, 1, 0
      %v3971 = vsel %vm483, %v3955, 0
      %v3972 = vsel %vm483, %v3956, 0
      %v3973 = vsel %vm483, %v3957, 0
      %v3974 = vsel %vm483, %v3958, 0
      %v3975 = vsel %vm483, %v3959, 0
      %v3976 = vadd.s32 %v3971, %v3975
      %v3977 = vsel %vm483, %v3960, 0
      %v3978 = vadd.s32 %v3972, %v3977
      %v3979 = vsel %vm483, %v3961, 0
      %v3980 = vadd.s32 %v3973, %v3979
      %v3981 = vsel %vm483, %v3962, 0
      %v3982 = vadd.s32 %v3974, %v3981
      %v3983 = vsel %vm483, %v3963, 0
      %v3984 = vadd.s32 %v3976, %v3983
      %v3985 = vsel %vm483, %v3964, 0
      %v3986 = vadd.s32 %v3978, %v3985
      %v3987 = vsel %vm483, %v3965, 0
      %v3988 = vadd.s32 %v3980, %v3987
      %v3989 = vsel %vm483, %v3966, 0
      %v3990 = vadd.s32 %v3982, %v3989
      %v3991 = vsel %vm483, %v3967, 0
      %v3992 = vadd.s32 %v3984, %v3991
      %v3993 = vsel %vm483, %v3968, 0
      %v3994 = vadd.s32 %v3986, %v3993
      %v3995 = vsel %vm483, %v3969, 0
      %v3996 = vadd.s32 %v3988, %v3995
      %v3997 = vsel %vm483, %v3970, 0
      %v3998 = vadd.s32 %v3990, %v3997
      %v3999 = vadd.s32 %v3992, %v3994
      %v4000 = vadd.s32 %v3996, %v3998
      %v4001 = vadd.s32 %v3999, %v4000
      %v4002 = vand.u32 %v4001, 65535
      %v4003 = vshrl.u32 %v4001, 16
      %v4004 = vcvt.s32.f32 %v4002
      %v4005 = vcvt.s32.f32 %v4003
      %4006 = vadd.xlane.f32.xlu0 %v4004
      %v4007 = vpop.xlane.xlu0 %4006
      %4008 = vadd.xlane.f32.xlu0 %v4005
      %v4009 = vpop.xlane.xlu0 %4008
      %v4010 = vcvt.f32.s32 %v4007
      %v4011 = vcvt.f32.s32 %v4009
      %v4012 = vshll.u32 %v4011, 16
      %v4013 = vadd.s32 %v4012, %v4010
      %v4014 = vrot.slane %v4013, 4
      %v4015 = vadd.s32 %v4013, %v4014
      %v4016 = vrot.slane %v4015, 2
      %v4017 = vadd.s32 %v4015, %v4016
      %v4018 = vrot.slane %v4017, 1
      %v4019 = vadd.s32 %v4017, %v4018
      %s4020 = vtos %v4019
      %v4021 = vstv %s3936
      %vm4022 = vcmp.ge.s32.totalorder %v504, %v4021
      %vm4023 = vcmp.ge.s32.totalorder %v505, %v4021
      %vm4024 = vcmp.ge.s32.totalorder %v506, %v4021
      %vm4025 = vcmp.ge.s32.totalorder %v507, %v4021
      %vm4026 = vcmp.ge.s32.totalorder %v508, %v4021
      %vm4027 = vcmp.ge.s32.totalorder %v509, %v4021
      %vm4028 = vcmp.ge.s32.totalorder %v510, %v4021
      %vm4029 = vcmp.ge.s32.totalorder %v511, %v4021
      %vm4030 = vcmp.ge.s32.totalorder %v512, %v4021
      %vm4031 = vcmp.ge.s32.totalorder %v513, %v4021
      %vm4032 = vcmp.ge.s32.totalorder %v514, %v4021
      %vm4033 = vcmp.ge.s32.totalorder %v515, %v4021
      %vm4034 = vcmp.ge.s32.totalorder %v516, %v4021
      %vm4035 = vcmp.ge.s32.totalorder %v517, %v4021
      %vm4036 = vcmp.ge.s32.totalorder %v518, %v4021
      %vm4037 = vcmp.ge.s32.totalorder %v519, %v4021
      %v4038 = vsel %vm4022, 1, 0
      %v4039 = vsel %vm4023, 1, 0
      %v4040 = vsel %vm4024, 1, 0
      %v4041 = vsel %vm4025, 1, 0
      %v4042 = vsel %vm4026, 1, 0
      %v4043 = vsel %vm4027, 1, 0
      %v4044 = vsel %vm4028, 1, 0
      %v4045 = vsel %vm4029, 1, 0
      %v4046 = vsel %vm4030, 1, 0
      %v4047 = vsel %vm4031, 1, 0
      %v4048 = vsel %vm4032, 1, 0
      %v4049 = vsel %vm4033, 1, 0
      %v4050 = vsel %vm4034, 1, 0
      %v4051 = vsel %vm4035, 1, 0
      %v4052 = vsel %vm4036, 1, 0
      %v4053 = vsel %vm4037, 1, 0
      %v4054 = vsel %vm483, %v4038, 0
      %v4055 = vsel %vm483, %v4039, 0
      %v4056 = vsel %vm483, %v4040, 0
      %v4057 = vsel %vm483, %v4041, 0
      %v4058 = vsel %vm483, %v4042, 0
      %v4059 = vadd.s32 %v4054, %v4058
      %v4060 = vsel %vm483, %v4043, 0
      %v4061 = vadd.s32 %v4055, %v4060
      %v4062 = vsel %vm483, %v4044, 0
      %v4063 = vadd.s32 %v4056, %v4062
      %v4064 = vsel %vm483, %v4045, 0
      %v4065 = vadd.s32 %v4057, %v4064
      %v4066 = vsel %vm483, %v4046, 0
      %v4067 = vadd.s32 %v4059, %v4066
      %v4068 = vsel %vm483, %v4047, 0
      %v4069 = vadd.s32 %v4061, %v4068
      %v4070 = vsel %vm483, %v4048, 0
      %v4071 = vadd.s32 %v4063, %v4070
      %v4072 = vsel %vm483, %v4049, 0
      %v4073 = vadd.s32 %v4065, %v4072
      %v4074 = vsel %vm483, %v4050, 0
      %v4075 = vadd.s32 %v4067, %v4074
      %v4076 = vsel %vm483, %v4051, 0
      %v4077 = vadd.s32 %v4069, %v4076
      %v4078 = vsel %vm483, %v4052, 0
      %v4079 = vadd.s32 %v4071, %v4078
      %v4080 = vsel %vm483, %v4053, 0
      %v4081 = vadd.s32 %v4073, %v4080
      %v4082 = vadd.s32 %v4075, %v4077
      %v4083 = vadd.s32 %v4079, %v4081
      %v4084 = vadd.s32 %v4082, %v4083
      %v4085 = vand.u32 %v4084, 65535
      %v4086 = vshrl.u32 %v4084, 16
      %v4087 = vcvt.s32.f32 %v4085
      %v4088 = vcvt.s32.f32 %v4086
      %4089 = vadd.xlane.f32.xlu0 %v4087
      %v4090 = vpop.xlane.xlu0 %4089
      %4091 = vadd.xlane.f32.xlu0 %v4088
      %v4092 = vpop.xlane.xlu0 %4091
      %v4093 = vcvt.f32.s32 %v4090
      %v4094 = vcvt.f32.s32 %v4092
      %v4095 = vshll.u32 %v4094, 16
      %v4096 = vadd.s32 %v4095, %v4093
      %v4097 = vrot.slane %v4096, 4
      %v4098 = vadd.s32 %v4096, %v4097
      %v4099 = vrot.slane %v4098, 2
      %v4100 = vadd.s32 %v4098, %v4099
      %v4101 = vrot.slane %v4100, 1
      %v4102 = vadd.s32 %v4100, %v4101
      %s4103 = vtos %v4102
      %v4104 = vstv %s3937
      %vm4105 = vcmp.ge.s32.totalorder %v504, %v4104
      %vm4106 = vcmp.ge.s32.totalorder %v505, %v4104
      %vm4107 = vcmp.ge.s32.totalorder %v506, %v4104
      %vm4108 = vcmp.ge.s32.totalorder %v507, %v4104
      %vm4109 = vcmp.ge.s32.totalorder %v508, %v4104
      %vm4110 = vcmp.ge.s32.totalorder %v509, %v4104
      %vm4111 = vcmp.ge.s32.totalorder %v510, %v4104
      %vm4112 = vcmp.ge.s32.totalorder %v511, %v4104
      %vm4113 = vcmp.ge.s32.totalorder %v512, %v4104
      %vm4114 = vcmp.ge.s32.totalorder %v513, %v4104
      %vm4115 = vcmp.ge.s32.totalorder %v514, %v4104
      %vm4116 = vcmp.ge.s32.totalorder %v515, %v4104
      %vm4117 = vcmp.ge.s32.totalorder %v516, %v4104
      %vm4118 = vcmp.ge.s32.totalorder %v517, %v4104
      %vm4119 = vcmp.ge.s32.totalorder %v518, %v4104
      %vm4120 = vcmp.ge.s32.totalorder %v519, %v4104
      %v4121 = vsel %vm4105, 1, 0
      %v4122 = vsel %vm4106, 1, 0
      %v4123 = vsel %vm4107, 1, 0
      %v4124 = vsel %vm4108, 1, 0
      %v4125 = vsel %vm4109, 1, 0
      %v4126 = vsel %vm4110, 1, 0
      %v4127 = vsel %vm4111, 1, 0
      %v4128 = vsel %vm4112, 1, 0
      %v4129 = vsel %vm4113, 1, 0
      %v4130 = vsel %vm4114, 1, 0
      %v4131 = vsel %vm4115, 1, 0
      %v4132 = vsel %vm4116, 1, 0
      %v4133 = vsel %vm4117, 1, 0
      %v4134 = vsel %vm4118, 1, 0
      %v4135 = vsel %vm4119, 1, 0
      %v4136 = vsel %vm4120, 1, 0
      %v4137 = vsel %vm483, %v4121, 0
      %v4138 = vsel %vm483, %v4122, 0
      %v4139 = vsel %vm483, %v4123, 0
      %v4140 = vsel %vm483, %v4124, 0
      %v4141 = vsel %vm483, %v4125, 0
      %v4142 = vadd.s32 %v4137, %v4141
      %v4143 = vsel %vm483, %v4126, 0
      %v4144 = vadd.s32 %v4138, %v4143
      %v4145 = vsel %vm483, %v4127, 0
      %v4146 = vadd.s32 %v4139, %v4145
      %v4147 = vsel %vm483, %v4128, 0
      %v4148 = vadd.s32 %v4140, %v4147
      %v4149 = vsel %vm483, %v4129, 0
      %v4150 = vadd.s32 %v4142, %v4149
      %v4151 = vsel %vm483, %v4130, 0
      %v4152 = vadd.s32 %v4144, %v4151
      %v4153 = vsel %vm483, %v4131, 0
      %v4154 = vadd.s32 %v4146, %v4153
      %v4155 = vsel %vm483, %v4132, 0
      %v4156 = vadd.s32 %v4148, %v4155
      %v4157 = vsel %vm483, %v4133, 0
      %v4158 = vadd.s32 %v4150, %v4157
      %v4159 = vsel %vm483, %v4134, 0
      %v4160 = vadd.s32 %v4152, %v4159
      %v4161 = vsel %vm483, %v4135, 0
      %v4162 = vadd.s32 %v4154, %v4161
      %v4163 = vsel %vm483, %v4136, 0
      %v4164 = vadd.s32 %v4156, %v4163
      %v4165 = vadd.s32 %v4158, %v4160
      %v4166 = vadd.s32 %v4162, %v4164
      %v4167 = vadd.s32 %v4165, %v4166
      %v4168 = vand.u32 %v4167, 65535
      %v4169 = vshrl.u32 %v4167, 16
      %v4170 = vcvt.s32.f32 %v4168
      %v4171 = vcvt.s32.f32 %v4169
      %4172 = vadd.xlane.f32.xlu0 %v4170
      %v4173 = vpop.xlane.xlu0 %4172
      %4174 = vadd.xlane.f32.xlu0 %v4171
      %v4175 = vpop.xlane.xlu0 %4174
      %v4176 = vcvt.f32.s32 %v4173
      %v4177 = vcvt.f32.s32 %v4175
      %v4178 = vshll.u32 %v4177, 16
      %v4179 = vadd.s32 %v4178, %v4176
      %v4180 = vrot.slane %v4179, 4
      %v4181 = vadd.s32 %v4179, %v4180
      %v4182 = vrot.slane %v4181, 2
      %v4183 = vadd.s32 %v4181, %v4182
      %v4184 = vrot.slane %v4183, 1
      %v4185 = vadd.s32 %v4183, %v4184
      %s4186 = vtos %v4185
      %p4187 = scmp.ge.s32.totalorder %s4020, 5
      %s4188 = scalar_select %p4187, 1, 0
      %p4189 = scmp.ge.s32.totalorder %s4103, 5
      %s4190 = scalar_select %p4189, 1, 0
      %s4191 = sadd.s32 %s4188, %s4190
      %p4192 = scmp.ge.s32.totalorder %s4186, 5
      %s4193 = scalar_select %p4192, 1, 0
      %s4194 = sadd.s32 %s4191, %s4193
      %s4195 = sshll.u32 %s4194, 3
      %s4196 = sor.u32 %s3934, %s4195
      %s4197 = sor.u32 %s4196, 2
      %s4198 = sor.u32 %s4196, 4
      %s4199 = sor.u32 %s4196, 6
      %v4200 = vstv %s4197
      %vm4201 = vcmp.ge.s32.totalorder %v504, %v4200
      %vm4202 = vcmp.ge.s32.totalorder %v505, %v4200
      %vm4203 = vcmp.ge.s32.totalorder %v506, %v4200
      %vm4204 = vcmp.ge.s32.totalorder %v507, %v4200
      %vm4205 = vcmp.ge.s32.totalorder %v508, %v4200
      %vm4206 = vcmp.ge.s32.totalorder %v509, %v4200
      %vm4207 = vcmp.ge.s32.totalorder %v510, %v4200
      %vm4208 = vcmp.ge.s32.totalorder %v511, %v4200
      %vm4209 = vcmp.ge.s32.totalorder %v512, %v4200
      %vm4210 = vcmp.ge.s32.totalorder %v513, %v4200
      %vm4211 = vcmp.ge.s32.totalorder %v514, %v4200
      %vm4212 = vcmp.ge.s32.totalorder %v515, %v4200
      %vm4213 = vcmp.ge.s32.totalorder %v516, %v4200
      %vm4214 = vcmp.ge.s32.totalorder %v517, %v4200
      %vm4215 = vcmp.ge.s32.totalorder %v518, %v4200
      %vm4216 = vcmp.ge.s32.totalorder %v519, %v4200
      %v4217 = vsel %vm4201, 1, 0
      %v4218 = vsel %vm4202, 1, 0
      %v4219 = vsel %vm4203, 1, 0
      %v4220 = vsel %vm4204, 1, 0
      %v4221 = vsel %vm4205, 1, 0
      %v4222 = vsel %vm4206, 1, 0
      %v4223 = vsel %vm4207, 1, 0
      %v4224 = vsel %vm4208, 1, 0
      %v4225 = vsel %vm4209, 1, 0
      %v4226 = vsel %vm4210, 1, 0
      %v4227 = vsel %vm4211, 1, 0
      %v4228 = vsel %vm4212, 1, 0
      %v4229 = vsel %vm4213, 1, 0
      %v4230 = vsel %vm4214, 1, 0
      %v4231 = vsel %vm4215, 1, 0
      %v4232 = vsel %vm4216, 1, 0
      %v4233 = vsel %vm483, %v4217, 0
      %v4234 = vsel %vm483, %v4218, 0
      %v4235 = vsel %vm483, %v4219, 0
      %v4236 = vsel %vm483, %v4220, 0
      %v4237 = vsel %vm483, %v4221, 0
      %v4238 = vadd.s32 %v4233, %v4237
      %v4239 = vsel %vm483, %v4222, 0
      %v4240 = vadd.s32 %v4234, %v4239
      %v4241 = vsel %vm483, %v4223, 0
      %v4242 = vadd.s32 %v4235, %v4241
      %v4243 = vsel %vm483, %v4224, 0
      %v4244 = vadd.s32 %v4236, %v4243
      %v4245 = vsel %vm483, %v4225, 0
      %v4246 = vadd.s32 %v4238, %v4245
      %v4247 = vsel %vm483, %v4226, 0
      %v4248 = vadd.s32 %v4240, %v4247
      %v4249 = vsel %vm483, %v4227, 0
      %v4250 = vadd.s32 %v4242, %v4249
      %v4251 = vsel %vm483, %v4228, 0
      %v4252 = vadd.s32 %v4244, %v4251
      %v4253 = vsel %vm483, %v4229, 0
      %v4254 = vadd.s32 %v4246, %v4253
      %v4255 = vsel %vm483, %v4230, 0
      %v4256 = vadd.s32 %v4248, %v4255
      %v4257 = vsel %vm483, %v4231, 0
      %v4258 = vadd.s32 %v4250, %v4257
      %v4259 = vsel %vm483, %v4232, 0
      %v4260 = vadd.s32 %v4252, %v4259
      %v4261 = vadd.s32 %v4254, %v4256
      %v4262 = vadd.s32 %v4258, %v4260
      %v4263 = vadd.s32 %v4261, %v4262
      %v4264 = vand.u32 %v4263, 65535
      %v4265 = vshrl.u32 %v4263, 16
      %v4266 = vcvt.s32.f32 %v4264
      %v4267 = vcvt.s32.f32 %v4265
      %4268 = vadd.xlane.f32.xlu0 %v4266
      %v4269 = vpop.xlane.xlu0 %4268
      %4270 = vadd.xlane.f32.xlu0 %v4267
      %v4271 = vpop.xlane.xlu0 %4270
      %v4272 = vcvt.f32.s32 %v4269
      %v4273 = vcvt.f32.s32 %v4271
      %v4274 = vshll.u32 %v4273, 16
      %v4275 = vadd.s32 %v4274, %v4272
      %v4276 = vrot.slane %v4275, 4
      %v4277 = vadd.s32 %v4275, %v4276
      %v4278 = vrot.slane %v4277, 2
      %v4279 = vadd.s32 %v4277, %v4278
      %v4280 = vrot.slane %v4279, 1
      %v4281 = vadd.s32 %v4279, %v4280
      %s4282 = vtos %v4281
      %v4283 = vstv %s4198
      %vm4284 = vcmp.ge.s32.totalorder %v504, %v4283
      %vm4285 = vcmp.ge.s32.totalorder %v505, %v4283
      %vm4286 = vcmp.ge.s32.totalorder %v506, %v4283
      %vm4287 = vcmp.ge.s32.totalorder %v507, %v4283
      %vm4288 = vcmp.ge.s32.totalorder %v508, %v4283
      %vm4289 = vcmp.ge.s32.totalorder %v509, %v4283
      %vm4290 = vcmp.ge.s32.totalorder %v510, %v4283
      %vm4291 = vcmp.ge.s32.totalorder %v511, %v4283
      %vm4292 = vcmp.ge.s32.totalorder %v512, %v4283
      %vm4293 = vcmp.ge.s32.totalorder %v513, %v4283
      %vm4294 = vcmp.ge.s32.totalorder %v514, %v4283
      %vm4295 = vcmp.ge.s32.totalorder %v515, %v4283
      %vm4296 = vcmp.ge.s32.totalorder %v516, %v4283
      %vm4297 = vcmp.ge.s32.totalorder %v517, %v4283
      %vm4298 = vcmp.ge.s32.totalorder %v518, %v4283
      %vm4299 = vcmp.ge.s32.totalorder %v519, %v4283
      %v4300 = vsel %vm4284, 1, 0
      %v4301 = vsel %vm4285, 1, 0
      %v4302 = vsel %vm4286, 1, 0
      %v4303 = vsel %vm4287, 1, 0
      %v4304 = vsel %vm4288, 1, 0
      %v4305 = vsel %vm4289, 1, 0
      %v4306 = vsel %vm4290, 1, 0
      %v4307 = vsel %vm4291, 1, 0
      %v4308 = vsel %vm4292, 1, 0
      %v4309 = vsel %vm4293, 1, 0
      %v4310 = vsel %vm4294, 1, 0
      %v4311 = vsel %vm4295, 1, 0
      %v4312 = vsel %vm4296, 1, 0
      %v4313 = vsel %vm4297, 1, 0
      %v4314 = vsel %vm4298, 1, 0
      %v4315 = vsel %vm4299, 1, 0
      %v4316 = vsel %vm483, %v4300, 0
      %v4317 = vsel %vm483, %v4301, 0
      %v4318 = vsel %vm483, %v4302, 0
      %v4319 = vsel %vm483, %v4303, 0
      %v4320 = vsel %vm483, %v4304, 0
      %v4321 = vadd.s32 %v4316, %v4320
      %v4322 = vsel %vm483, %v4305, 0
      %v4323 = vadd.s32 %v4317, %v4322
      %v4324 = vsel %vm483, %v4306, 0
      %v4325 = vadd.s32 %v4318, %v4324
      %v4326 = vsel %vm483, %v4307, 0
      %v4327 = vadd.s32 %v4319, %v4326
      %v4328 = vsel %vm483, %v4308, 0
      %v4329 = vadd.s32 %v4321, %v4328
      %v4330 = vsel %vm483, %v4309, 0
      %v4331 = vadd.s32 %v4323, %v4330
      %v4332 = vsel %vm483, %v4310, 0
      %v4333 = vadd.s32 %v4325, %v4332
      %v4334 = vsel %vm483, %v4311, 0
      %v4335 = vadd.s32 %v4327, %v4334
      %v4336 = vsel %vm483, %v4312, 0
      %v4337 = vadd.s32 %v4329, %v4336
      %v4338 = vsel %vm483, %v4313, 0
      %v4339 = vadd.s32 %v4331, %v4338
      %v4340 = vsel %vm483, %v4314, 0
      %v4341 = vadd.s32 %v4333, %v4340
      %v4342 = vsel %vm483, %v4315, 0
      %v4343 = vadd.s32 %v4335, %v4342
      %v4344 = vadd.s32 %v4337, %v4339
      %v4345 = vadd.s32 %v4341, %v4343
      %v4346 = vadd.s32 %v4344, %v4345
      %v4347 = vand.u32 %v4346, 65535
      %v4348 = vshrl.u32 %v4346, 16
      %v4349 = vcvt.s32.f32 %v4347
      %v4350 = vcvt.s32.f32 %v4348
      %4351 = vadd.xlane.f32.xlu0 %v4349
      %v4352 = vpop.xlane.xlu0 %4351
      %4353 = vadd.xlane.f32.xlu0 %v4350
      %v4354 = vpop.xlane.xlu0 %4353
      %v4355 = vcvt.f32.s32 %v4352
      %v4356 = vcvt.f32.s32 %v4354
      %v4357 = vshll.u32 %v4356, 16
      %v4358 = vadd.s32 %v4357, %v4355
      %v4359 = vrot.slane %v4358, 4
      %v4360 = vadd.s32 %v4358, %v4359
      %v4361 = vrot.slane %v4360, 2
      %v4362 = vadd.s32 %v4360, %v4361
      %v4363 = vrot.slane %v4362, 1
      %v4364 = vadd.s32 %v4362, %v4363
      %s4365 = vtos %v4364
      %v4366 = vstv %s4199
      %vm4367 = vcmp.ge.s32.totalorder %v504, %v4366
      %vm4368 = vcmp.ge.s32.totalorder %v505, %v4366
      %vm4369 = vcmp.ge.s32.totalorder %v506, %v4366
      %vm4370 = vcmp.ge.s32.totalorder %v507, %v4366
      %vm4371 = vcmp.ge.s32.totalorder %v508, %v4366
      %vm4372 = vcmp.ge.s32.totalorder %v509, %v4366
      %vm4373 = vcmp.ge.s32.totalorder %v510, %v4366
      %vm4374 = vcmp.ge.s32.totalorder %v511, %v4366
      %vm4375 = vcmp.ge.s32.totalorder %v512, %v4366
      %vm4376 = vcmp.ge.s32.totalorder %v513, %v4366
      %vm4377 = vcmp.ge.s32.totalorder %v514, %v4366
      %vm4378 = vcmp.ge.s32.totalorder %v515, %v4366
      %vm4379 = vcmp.ge.s32.totalorder %v516, %v4366
      %vm4380 = vcmp.ge.s32.totalorder %v517, %v4366
      %vm4381 = vcmp.ge.s32.totalorder %v518, %v4366
      %vm4382 = vcmp.ge.s32.totalorder %v519, %v4366
      %v4383 = vsel %vm4367, 1, 0
      %v4384 = vsel %vm4368, 1, 0
      %v4385 = vsel %vm4369, 1, 0
      %v4386 = vsel %vm4370, 1, 0
      %v4387 = vsel %vm4371, 1, 0
      %v4388 = vsel %vm4372, 1, 0
      %v4389 = vsel %vm4373, 1, 0
      %v4390 = vsel %vm4374, 1, 0
      %v4391 = vsel %vm4375, 1, 0
      %v4392 = vsel %vm4376, 1, 0
      %v4393 = vsel %vm4377, 1, 0
      %v4394 = vsel %vm4378, 1, 0
      %v4395 = vsel %vm4379, 1, 0
      %v4396 = vsel %vm4380, 1, 0
      %v4397 = vsel %vm4381, 1, 0
      %v4398 = vsel %vm4382, 1, 0
      %v4399 = vsel %vm483, %v4383, 0
      %v4400 = vsel %vm483, %v4384, 0
      %v4401 = vsel %vm483, %v4385, 0
      %v4402 = vsel %vm483, %v4386, 0
      %v4403 = vsel %vm483, %v4387, 0
      %v4404 = vadd.s32 %v4399, %v4403
      %v4405 = vsel %vm483, %v4388, 0
      %v4406 = vadd.s32 %v4400, %v4405
      %v4407 = vsel %vm483, %v4389, 0
      %v4408 = vadd.s32 %v4401, %v4407
      %v4409 = vsel %vm483, %v4390, 0
      %v4410 = vadd.s32 %v4402, %v4409
      %v4411 = vsel %vm483, %v4391, 0
      %v4412 = vadd.s32 %v4404, %v4411
      %v4413 = vsel %vm483, %v4392, 0
      %v4414 = vadd.s32 %v4406, %v4413
      %v4415 = vsel %vm483, %v4393, 0
      %v4416 = vadd.s32 %v4408, %v4415
      %v4417 = vsel %vm483, %v4394, 0
      %v4418 = vadd.s32 %v4410, %v4417
      %v4419 = vsel %vm483, %v4395, 0
      %v4420 = vadd.s32 %v4412, %v4419
      %v4421 = vsel %vm483, %v4396, 0
      %v4422 = vadd.s32 %v4414, %v4421
      %v4423 = vsel %vm483, %v4397, 0
      %v4424 = vadd.s32 %v4416, %v4423
      %v4425 = vsel %vm483, %v4398, 0
      %v4426 = vadd.s32 %v4418, %v4425
      %v4427 = vadd.s32 %v4420, %v4422
      %v4428 = vadd.s32 %v4424, %v4426
      %v4429 = vadd.s32 %v4427, %v4428
      %v4430 = vand.u32 %v4429, 65535
      %v4431 = vshrl.u32 %v4429, 16
      %v4432 = vcvt.s32.f32 %v4430
      %v4433 = vcvt.s32.f32 %v4431
      %4434 = vadd.xlane.f32.xlu0 %v4432
      %v4435 = vpop.xlane.xlu0 %4434
      %4436 = vadd.xlane.f32.xlu0 %v4433
      %v4437 = vpop.xlane.xlu0 %4436
      %v4438 = vcvt.f32.s32 %v4435
      %v4439 = vcvt.f32.s32 %v4437
      %v4440 = vshll.u32 %v4439, 16
      %v4441 = vadd.s32 %v4440, %v4438
      %v4442 = vrot.slane %v4441, 4
      %v4443 = vadd.s32 %v4441, %v4442
      %v4444 = vrot.slane %v4443, 2
      %v4445 = vadd.s32 %v4443, %v4444
      %v4446 = vrot.slane %v4445, 1
      %v4447 = vadd.s32 %v4445, %v4446
      %s4448 = vtos %v4447
      %p4449 = scmp.ge.s32.totalorder %s4282, 5
      %s4450 = scalar_select %p4449, 1, 0
      %p4451 = scmp.ge.s32.totalorder %s4365, 5
      %s4452 = scalar_select %p4451, 1, 0
      %s4453 = sadd.s32 %s4450, %s4452
      %p4454 = scmp.ge.s32.totalorder %s4448, 5
      %s4455 = scalar_select %p4454, 1, 0
      %s4456 = sadd.s32 %s4453, %s4455
      %s4457 = sshll.u32 %s4456, 1
      %s4458 = sor.u32 %s4196, %s4457
      %s4459 = sor.u32 %s4458, 1
      %v4460 = vstv %s4459
      %vm4461 = vcmp.ge.s32.totalorder %v504, %v4460
      %vm4462 = vcmp.ge.s32.totalorder %v505, %v4460
      %vm4463 = vcmp.ge.s32.totalorder %v506, %v4460
      %vm4464 = vcmp.ge.s32.totalorder %v507, %v4460
      %vm4465 = vcmp.ge.s32.totalorder %v508, %v4460
      %vm4466 = vcmp.ge.s32.totalorder %v509, %v4460
      %vm4467 = vcmp.ge.s32.totalorder %v510, %v4460
      %vm4468 = vcmp.ge.s32.totalorder %v511, %v4460
      %vm4469 = vcmp.ge.s32.totalorder %v512, %v4460
      %vm4470 = vcmp.ge.s32.totalorder %v513, %v4460
      %vm4471 = vcmp.ge.s32.totalorder %v514, %v4460
      %vm4472 = vcmp.ge.s32.totalorder %v515, %v4460
      %vm4473 = vcmp.ge.s32.totalorder %v516, %v4460
      %vm4474 = vcmp.ge.s32.totalorder %v517, %v4460
      %vm4475 = vcmp.ge.s32.totalorder %v518, %v4460
      %vm4476 = vcmp.ge.s32.totalorder %v519, %v4460
      %v4477 = vsel %vm4461, 1, 0
      %v4478 = vsel %vm4462, 1, 0
      %v4479 = vsel %vm4463, 1, 0
      %v4480 = vsel %vm4464, 1, 0
      %v4481 = vsel %vm4465, 1, 0
      %v4482 = vsel %vm4466, 1, 0
      %v4483 = vsel %vm4467, 1, 0
      %v4484 = vsel %vm4468, 1, 0
      %v4485 = vsel %vm4469, 1, 0
      %v4486 = vsel %vm4470, 1, 0
      %v4487 = vsel %vm4471, 1, 0
      %v4488 = vsel %vm4472, 1, 0
      %v4489 = vsel %vm4473, 1, 0
      %v4490 = vsel %vm4474, 1, 0
      %v4491 = vsel %vm4475, 1, 0
      %v4492 = vsel %vm4476, 1, 0
      %v4493 = vsel %vm483, %v4477, 0
      %v4494 = vsel %vm483, %v4478, 0
      %v4495 = vsel %vm483, %v4479, 0
      %v4496 = vsel %vm483, %v4480, 0
      %v4497 = vsel %vm483, %v4481, 0
      %v4498 = vadd.s32 %v4493, %v4497
      %v4499 = vsel %vm483, %v4482, 0
      %v4500 = vadd.s32 %v4494, %v4499
      %v4501 = vsel %vm483, %v4483, 0
      %v4502 = vadd.s32 %v4495, %v4501
      %v4503 = vsel %vm483, %v4484, 0
      %v4504 = vadd.s32 %v4496, %v4503
      %v4505 = vsel %vm483, %v4485, 0
      %v4506 = vadd.s32 %v4498, %v4505
      %v4507 = vsel %vm483, %v4486, 0
      %v4508 = vadd.s32 %v4500, %v4507
      %v4509 = vsel %vm483, %v4487, 0
      %v4510 = vadd.s32 %v4502, %v4509
      %v4511 = vsel %vm483, %v4488, 0
      %v4512 = vadd.s32 %v4504, %v4511
      %v4513 = vsel %vm483, %v4489, 0
      %v4514 = vadd.s32 %v4506, %v4513
      %v4515 = vsel %vm483, %v4490, 0
      %v4516 = vadd.s32 %v4508, %v4515
      %v4517 = vsel %vm483, %v4491, 0
      %v4518 = vadd.s32 %v4510, %v4517
      %v4519 = vsel %vm483, %v4492, 0
      %v4520 = vadd.s32 %v4512, %v4519
      %v4521 = vadd.s32 %v4514, %v4516
      %v4522 = vadd.s32 %v4518, %v4520
      %v4523 = vadd.s32 %v4521, %v4522
      %v4524 = vand.u32 %v4523, 65535
      %v4525 = vshrl.u32 %v4523, 16
      %v4526 = vcvt.s32.f32 %v4524
      %v4527 = vcvt.s32.f32 %v4525
      %4528 = vadd.xlane.f32.xlu0 %v4526
      %v4529 = vpop.xlane.xlu0 %4528
      %4530 = vadd.xlane.f32.xlu0 %v4527
      %v4531 = vpop.xlane.xlu0 %4530
      %v4532 = vcvt.f32.s32 %v4529
      %v4533 = vcvt.f32.s32 %v4531
      %v4534 = vshll.u32 %v4533, 16
      %v4535 = vadd.s32 %v4534, %v4532
      %v4536 = vrot.slane %v4535, 4
      %v4537 = vadd.s32 %v4535, %v4536
      %v4538 = vrot.slane %v4537, 2
      %v4539 = vadd.s32 %v4537, %v4538
      %v4540 = vrot.slane %v4539, 1
      %v4541 = vadd.s32 %v4539, %v4540
      %s4542 = vtos %v4541
      %p4543 = scmp.ge.s32.totalorder %s4542, 5
      %s4544 = scalar_select %p4543, %s4459, %s4458
      %v4545 = vstv %s4544
      %vm4546 = vcmp.gt.s32.totalorder %v504, %v4545
      %vm4547 = vcmp.gt.s32.totalorder %v505, %v4545
      %vm4548 = vcmp.gt.s32.totalorder %v506, %v4545
      %vm4549 = vcmp.gt.s32.totalorder %v507, %v4545
      %vm4550 = vcmp.gt.s32.totalorder %v508, %v4545
      %vm4551 = vcmp.gt.s32.totalorder %v509, %v4545
      %vm4552 = vcmp.gt.s32.totalorder %v510, %v4545
      %vm4553 = vcmp.gt.s32.totalorder %v511, %v4545
      %vm4554 = vcmp.gt.s32.totalorder %v512, %v4545
      %vm4555 = vcmp.gt.s32.totalorder %v513, %v4545
      %vm4556 = vcmp.gt.s32.totalorder %v514, %v4545
      %vm4557 = vcmp.gt.s32.totalorder %v515, %v4545
      %vm4558 = vcmp.gt.s32.totalorder %v516, %v4545
      %vm4559 = vcmp.gt.s32.totalorder %v517, %v4545
      %vm4560 = vcmp.gt.s32.totalorder %v518, %v4545
      %vm4561 = vcmp.gt.s32.totalorder %v519, %v4545
      %v4562 = vsel %vm4546, 1, 0
      %v4563 = vsel %vm4547, 1, 0
      %v4564 = vsel %vm4548, 1, 0
      %v4565 = vsel %vm4549, 1, 0
      %v4566 = vsel %vm4550, 1, 0
      %v4567 = vsel %vm4551, 1, 0
      %v4568 = vsel %vm4552, 1, 0
      %v4569 = vsel %vm4553, 1, 0
      %v4570 = vsel %vm4554, 1, 0
      %v4571 = vsel %vm4555, 1, 0
      %v4572 = vsel %vm4556, 1, 0
      %v4573 = vsel %vm4557, 1, 0
      %v4574 = vsel %vm4558, 1, 0
      %v4575 = vsel %vm4559, 1, 0
      %v4576 = vsel %vm4560, 1, 0
      %v4577 = vsel %vm4561, 1, 0
      %v4578 = vsel %vm483, %v4562, 0
      %v4579 = vsel %vm483, %v4563, 0
      %v4580 = vsel %vm483, %v4564, 0
      %v4581 = vsel %vm483, %v4565, 0
      %v4582 = vsel %vm483, %v4566, 0
      %v4583 = vadd.s32 %v4578, %v4582
      %v4584 = vsel %vm483, %v4567, 0
      %v4585 = vadd.s32 %v4579, %v4584
      %v4586 = vsel %vm483, %v4568, 0
      %v4587 = vadd.s32 %v4580, %v4586
      %v4588 = vsel %vm483, %v4569, 0
      %v4589 = vadd.s32 %v4581, %v4588
      %v4590 = vsel %vm483, %v4570, 0
      %v4591 = vadd.s32 %v4583, %v4590
      %v4592 = vsel %vm483, %v4571, 0
      %v4593 = vadd.s32 %v4585, %v4592
      %v4594 = vsel %vm483, %v4572, 0
      %v4595 = vadd.s32 %v4587, %v4594
      %v4596 = vsel %vm483, %v4573, 0
      %v4597 = vadd.s32 %v4589, %v4596
      %v4598 = vsel %vm483, %v4574, 0
      %v4599 = vadd.s32 %v4591, %v4598
      %v4600 = vsel %vm483, %v4575, 0
      %v4601 = vadd.s32 %v4593, %v4600
      %v4602 = vsel %vm483, %v4576, 0
      %v4603 = vadd.s32 %v4595, %v4602
      %v4604 = vsel %vm483, %v4577, 0
      %v4605 = vadd.s32 %v4597, %v4604
      %v4606 = vadd.s32 %v4599, %v4601
      %v4607 = vadd.s32 %v4603, %v4605
      %v4608 = vadd.s32 %v4606, %v4607
      %v4609 = vand.u32 %v4608, 65535
      %v4610 = vshrl.u32 %v4608, 16
      %v4611 = vcvt.s32.f32 %v4609
      %v4612 = vcvt.s32.f32 %v4610
      %4613 = vadd.xlane.f32.xlu0 %v4611
      %v4614 = vpop.xlane.xlu0 %4613
      %4615 = vadd.xlane.f32.xlu0 %v4612
      %v4616 = vpop.xlane.xlu0 %4615
      %v4617 = vcvt.f32.s32 %v4614
      %v4618 = vcvt.f32.s32 %v4616
      %v4619 = vshll.u32 %v4618, 16
      %v4620 = vadd.s32 %v4619, %v4617
      %v4621 = vrot.slane %v4620, 4
      %v4622 = vadd.s32 %v4620, %v4621
      %v4623 = vrot.slane %v4622, 2
      %v4624 = vadd.s32 %v4622, %v4623
      %v4625 = vrot.slane %v4624, 1
      %v4626 = vadd.s32 %v4624, %v4625
      %s4627 = vtos %v4626
      %s4628 = scvt.s32.f32 %s4627
      %v4629 = vsel %vm4546, %v504, 0.0
      %v4630 = vsel %vm4547, %v505, 0.0
      %v4631 = vsel %vm4548, %v506, 0.0
      %v4632 = vsel %vm4549, %v507, 0.0
      %v4633 = vsel %vm4550, %v508, 0.0
      %v4634 = vsel %vm4551, %v509, 0.0
      %v4635 = vsel %vm4552, %v510, 0.0
      %v4636 = vsel %vm4553, %v511, 0.0
      %v4637 = vsel %vm4554, %v512, 0.0
      %v4638 = vsel %vm4555, %v513, 0.0
      %v4639 = vsel %vm4556, %v514, 0.0
      %v4640 = vsel %vm4557, %v515, 0.0
      %v4641 = vsel %vm4558, %v516, 0.0
      %v4642 = vsel %vm4559, %v517, 0.0
      %v4643 = vsel %vm4560, %v518, 0.0
      %v4644 = vsel %vm4561, %v519, 0.0
      %v4645 = vsel %vm483, %v4629, 0.0
      %v4646 = vsel %vm483, %v4630, 0.0
      %v4647 = vadd.f32 %v4645, %v4646
      %v4648 = vsel %vm483, %v4631, 0.0
      %v4649 = vadd.f32 %v4647, %v4648
      %v4650 = vsel %vm483, %v4632, 0.0
      %v4651 = vadd.f32 %v4649, %v4650
      %v4652 = vsel %vm483, %v4633, 0.0
      %v4653 = vadd.f32 %v4651, %v4652
      %v4654 = vsel %vm483, %v4634, 0.0
      %v4655 = vadd.f32 %v4653, %v4654
      %v4656 = vsel %vm483, %v4635, 0.0
      %v4657 = vadd.f32 %v4655, %v4656
      %v4658 = vsel %vm483, %v4636, 0.0
      %v4659 = vadd.f32 %v4657, %v4658
      %v4660 = vsel %vm483, %v4637, 0.0
      %v4661 = vadd.f32 %v4659, %v4660
      %v4662 = vsel %vm483, %v4638, 0.0
      %v4663 = vadd.f32 %v4661, %v4662
      %v4664 = vsel %vm483, %v4639, 0.0
      %v4665 = vadd.f32 %v4663, %v4664
      %v4666 = vsel %vm483, %v4640, 0.0
      %v4667 = vadd.f32 %v4665, %v4666
      %v4668 = vsel %vm483, %v4641, 0.0
      %v4669 = vadd.f32 %v4667, %v4668
      %v4670 = vsel %vm483, %v4642, 0.0
      %v4671 = vadd.f32 %v4669, %v4670
      %v4672 = vsel %vm483, %v4643, 0.0
      %v4673 = vadd.f32 %v4671, %v4672
      %v4674 = vsel %vm483, %v4644, 0.0
      %v4675 = vadd.f32 %v4673, %v4674
      %4676 = vadd.xlane.f32.xlu0 %v4675
      %v4677 = vpop.xlane.xlu0 %4676
      %v4678 = vrot.slane %v4677, 4
      %v4679 = vadd.f32 %v4677, %v4678
      %v4680 = vrot.slane %v4679, 2
      %v4681 = vadd.f32 %v4679, %v4680
      %v4682 = vrot.slane %v4681, 1
      %v4683 = vadd.f32 %v4681, %v4682
      %s4684 = vtos %v4683
      %vm4685 = vcmp.le.s32.totalorder %v504, %v4545
      %vm4686 = vcmp.le.s32.totalorder %v505, %v4545
      %vm4687 = vcmp.le.s32.totalorder %v506, %v4545
      %vm4688 = vcmp.le.s32.totalorder %v507, %v4545
      %vm4689 = vcmp.le.s32.totalorder %v508, %v4545
      %vm4690 = vcmp.le.s32.totalorder %v509, %v4545
      %vm4691 = vcmp.le.s32.totalorder %v510, %v4545
      %vm4692 = vcmp.le.s32.totalorder %v511, %v4545
      %vm4693 = vcmp.le.s32.totalorder %v512, %v4545
      %vm4694 = vcmp.le.s32.totalorder %v513, %v4545
      %vm4695 = vcmp.le.s32.totalorder %v514, %v4545
      %vm4696 = vcmp.le.s32.totalorder %v515, %v4545
      %vm4697 = vcmp.le.s32.totalorder %v516, %v4545
      %vm4698 = vcmp.le.s32.totalorder %v517, %v4545
      %vm4699 = vcmp.le.s32.totalorder %v518, %v4545
      %vm4700 = vcmp.le.s32.totalorder %v519, %v4545
      %v4701 = vsel %vm4685, %v504, -inf
      %v4702 = vsel %vm4686, %v505, -inf
      %v4703 = vsel %vm4687, %v506, -inf
      %v4704 = vsel %vm4688, %v507, -inf
      %v4705 = vsel %vm4689, %v508, -inf
      %v4706 = vsel %vm4690, %v509, -inf
      %v4707 = vsel %vm4691, %v510, -inf
      %v4708 = vsel %vm4692, %v511, -inf
      %v4709 = vsel %vm4693, %v512, -inf
      %v4710 = vsel %vm4694, %v513, -inf
      %v4711 = vsel %vm4695, %v514, -inf
      %v4712 = vsel %vm4696, %v515, -inf
      %v4713 = vsel %vm4697, %v516, -inf
      %v4714 = vsel %vm4698, %v517, -inf
      %v4715 = vsel %vm4699, %v518, -inf
      %v4716 = vsel %vm4700, %v519, -inf
      %v4717 = vsel %vm483, %v4701, -inf
      %v4718 = vsel %vm483, %v4702, -inf
      %v4719 = vsel %vm483, %v4703, -inf
      %v4720 = vsel %vm483, %v4704, -inf
      %v4721 = vsel %vm483, %v4705, -inf
      %v4722 = vmax.f32 %v4717, %v4721
      %v4723 = vsel %vm483, %v4706, -inf
      %v4724 = vmax.f32 %v4718, %v4723
      %v4725 = vsel %vm483, %v4707, -inf
      %v4726 = vmax.f32 %v4719, %v4725
      %v4727 = vsel %vm483, %v4708, -inf
      %v4728 = vmax.f32 %v4720, %v4727
      %v4729 = vsel %vm483, %v4709, -inf
      %v4730 = vmax.f32 %v4722, %v4729
      %v4731 = vsel %vm483, %v4710, -inf
      %v4732 = vmax.f32 %v4724, %v4731
      %v4733 = vsel %vm483, %v4711, -inf
      %v4734 = vmax.f32 %v4726, %v4733
      %v4735 = vsel %vm483, %v4712, -inf
      %v4736 = vmax.f32 %v4728, %v4735
      %v4737 = vsel %vm483, %v4713, -inf
      %v4738 = vmax.f32 %v4730, %v4737
      %v4739 = vsel %vm483, %v4714, -inf
      %v4740 = vmax.f32 %v4732, %v4739
      %v4741 = vsel %vm483, %v4715, -inf
      %v4742 = vmax.f32 %v4734, %v4741
      %v4743 = vsel %vm483, %v4716, -inf
      %v4744 = vmax.f32 %v4736, %v4743
      %v4745 = vmax.f32 %v4738, %v4740
      %v4746 = vmax.f32 %v4742, %v4744
      %v4747 = vmax.f32 %v4745, %v4746
      %4748 = vmax.xlane.f32.xlu0 %v4747
      %v4749 = vpop.xlane.xlu0 %4748
      %v4750 = vrot.slane %v4749, 4
      %v4751 = vmax.f32 %v4749, %v4750
      %v4752 = vrot.slane %v4751, 2
      %v4753 = vmax.f32 %v4751, %v4752
      %v4754 = vrot.slane %v4753, 1
      %v4755 = vmax.f32 %v4753, %v4754
      %s4756 = vtos %v4755
      %s4757 = ssub.f32 5.0, %s4628
      %s4758 = smul.f32 %s4757, %s4756
      %s4759 = sadd.f32 %s4684, %s4758
      %v4760 = vrcp.pop 5.0
      %s4761 = vtos %v4760
      %s4762 = smul.f32 %s4759, %s4761
      %v4763 = vstv %s4762
      %vm4764 = vcmask 0
      %4765 = vst.msk [vmem:[#allocation3] sm:$0x1] %vm4764, %v4763
    $region13: #{tpu_custom_call.1} parent=1 // pred_fallthru
      _
    // Predicated region
    $region14: #{tpu_custom_call.1} parent=1 // pred_check
      _
    $region15: #{tpu_custom_call.1} parent=1 // pred_check_branch
      %4767 = sbr.rel (0) target = $region17
    $region16: #{tpu_custom_call.1} parent=1 // pred_region
      %s4769 = ssub.s32 16, 16
      %4770 = vsyncadd [#allocation4], %s4769
      %s4772 = sshll.u32 [#allocation3], 4
      %s4773 = int_to_ptr.vmem [resolvable:$true] %s4772
      %4775 = dma.vmem_to_hbm [thread:$0]  %s4773, 16, %s2, [#allocation4]
    $region17: #{tpu_custom_call.1} parent=1 // pred_fallthru
      _
    // Predicated region
    $region18: #{tpu_custom_call.1} parent=1 // pred_check
      _
    $region19: #{tpu_custom_call.1} parent=1 // pred_check_branch
      %4777 = sbr.rel (0) target = $region21
    $region20: #{tpu_custom_call.1} parent=1 // pred_region
      %4778 = dma.done [#allocation4], 16
    $region21: #{tpu_custom_call.1} parent=1 // pred_fallthru
      _
    %4779 = vsyncpa [#allocation4], 1

</llo_original>
